<compile_context>
chip_gen: v5e
topology: v5e:2x2
jax: 0.10.0
libtpu: 0.0.40
codegen_flags: <defaults>
</compile_context>

<pallas_src>
import functools

import jax
import jax.numpy as jnp
from jax import lax
from jax.experimental import pallas as pl
from jax.experimental.pallas import tpu as pltpu


# ----------------------------- Pallas kernel ------------------------------ #

def _encoder_kernel(x_ref,
                    wih0_ref, whh0_ref, b0_ref,
                    wih1_ref, whh1_ref, b1_ref,
                    wih2_ref, whh2_ref, b2_ref,
                    wih3_ref, whh3_ref, b3_ref,
                    out_ref,
                    seq_ref,
                    *, seq_len, batch):
    """Fused 4-layer LSTM encoder, single invocation (no grid).

    x_ref   : (S*B, F)   time-major-flattened input (row t*B + b == x[b, t, :])
    wih*    : (D_in, 4H) input->gates weights (pre-transposed)
    whh*    : (H, 4H)    hidden->gates weights (pre-transposed)
    b*      : (1, 4H)    combined bias (b_ih + b_hh)
    out_ref : (B, E)     final-layer hidden state at the last timestep
    seq_ref : (S*B, 2E)  VMEM scratch holding the current layer's output
                         sequence (time-major-flat), consumed by the next layer
    """
    S, B = seq_len, batch
    HD = whh0_ref.shape[0]   # hidden_dim = 2 * embedding_dim
    E = whh3_ref.shape[0]    # embedding_dim

    def run_layer(in2d, H, wih_ref, whh_ref, b_ref, store_seq):
        # Hoisted input projection + bias: ONE (S*B, D_in) @ (D_in, 4H) MXU
        # matmul per layer instead of S tiny M=B matmuls on the serial path.
        gi = jnp.dot(in2d, wih_ref[...],
                     preferred_element_type=jnp.float32) + b_ref[...]
        whh = whh_ref[...]                       # load once, reuse all steps
        h = jnp.zeros((B, H), jnp.float32)
        c = jnp.zeros((B, H), jnp.float32)
        for t in range(S):                       # static full unroll
            g = gi[t * B:(t + 1) * B, :] + jnp.dot(
                h, whh, preferred_element_type=jnp.float32)
            i_g = jax.nn.sigmoid(g[:, 0 * H:1 * H])
            f_g = jax.nn.sigmoid(g[:, 1 * H:2 * H])
            g_g = jnp.tanh(g[:, 2 * H:3 * H])
            o_g = jax.nn.sigmoid(g[:, 3 * H:4 * H])
            c = f_g * c + i_g * g_g
            h = o_g * jnp.tanh(c)
            if store_seq:
                seq_ref[t * B:(t + 1) * B, :] = h
            # else: intermediate h never touches HBM / scratch (rnn2)
        return h

    # rnn1: three stacked layers, hidden size HD. Each layer reads the full
    # previous sequence from seq_ref BEFORE overwriting it with its own output.
    run_layer(x_ref[...],   HD, wih0_ref, whh0_ref, b0_ref, store_seq=True)
    run_layer(seq_ref[...], HD, wih1_ref, whh1_ref, b1_ref, store_seq=True)
    run_layer(seq_ref[...], HD, wih2_ref, whh2_ref, b2_ref, store_seq=True)
    # rnn2: single layer, hidden size E; only the last timestep's h is needed.
    h_last = run_layer(seq_ref[...], E, wih3_ref, whh3_ref, b3_ref,
                       store_seq=False)
    out_ref[...] = h_last                        # only (B, E) goes to HBM


# --------------------------- Parameter handling ---------------------------- #

def init_lstm_params(key, input_size, hidden_size):
    """PyTorch-style uniform(-1/sqrt(H), 1/sqrt(H)) init; weights pre-transposed."""
    bound = 1.0 / float(hidden_size) ** 0.5
    k0, k1, k2, k3 = jax.random.split(key, 4)
    wih = jax.random.uniform(k0, (input_size, 4 * hidden_size), jnp.float32, -bound, bound)
    whh = jax.random.uniform(k1, (hidden_size, 4 * hidden_size), jnp.float32, -bound, bound)
    bih = jax.random.uniform(k2, (4 * hidden_size,), jnp.float32, -bound, bound)
    bhh = jax.random.uniform(k3, (4 * hidden_size,), jnp.float32, -bound, bound)
    return wih, whh, (bih + bhh).reshape(1, 4 * hidden_size)


def make_encoder_params(key, n_features, embedding_dim):
    hidden_dim = 2 * embedding_dim
    keys = jax.random.split(key, 4)
    rnn1 = [
        init_lstm_params(keys[0], n_features, hidden_dim),   # rnn1 layer 0
        init_lstm_params(keys[1], hidden_dim, hidden_dim),   # rnn1 layer 1
        init_lstm_params(keys[2], hidden_dim, hidden_dim),   # rnn1 layer 2
    ]
    rnn2 = init_lstm_params(keys[3], hidden_dim, embedding_dim)
    return rnn1, rnn2


# ------------------------------- Encoder ----------------------------------- #

@functools.partial(jax.jit, static_argnums=(3,))
def encoder_forward(x, rnn1_params, rnn2_params, embedding_dim):
    """x: (B, S, n_features) batch-first, like the PyTorch module."""
    B, S, F = x.shape
    hidden_dim = 2 * embedding_dim

    # Tiny (B*S*F elements) batch-first -> time-major-flat permutation; the
    # kernel then works purely on 2D time-major-flat slabs (row = t*B + b).
    x_tm2d = jnp.transpose(x, (1, 0, 2)).reshape(S * B, F)

    flat_inputs = [x_tm2d]
    for (wih, whh, b) in rnn1_params:
        flat_inputs += [wih, whh, b]
    wih3, whh3, b3 = rnn2_params
    flat_inputs += [wih3, whh3, b3]

    kernel = functools.partial(_encoder_kernel, seq_len=S, batch=B)
    return pl.pallas_call(
        kernel,
        out_shape=jax.ShapeDtypeStruct((B, embedding_dim), jnp.float32),
        in_specs=[pl.BlockSpec(memory_space=pltpu.MemorySpace.VMEM)] * len(flat_inputs),
        out_specs=pl.BlockSpec(memory_space=pltpu.MemorySpace.VMEM),
        scratch_shapes=[pltpu.VMEM((S * B, hidden_dim), jnp.float32)],
    )(*flat_inputs)


# ----------------------------- Pure-JAX reference -------------------------- #

def _lstm_layer_ref(x_tm, wih, whh, b, hidden_size):
    S, B, _ = x_tm.shape
    h0 = jnp.zeros((B, hidden_size), jnp.float32)
    c0 = jnp.zeros((B, hidden_size), jnp.float32)

    def step(carry, xt):
        h, c = carry
        gates = xt @ wih + h @ whh + b
        H = hidden_size
        i = jax.nn.sigmoid(gates[:, 0 * H:1 * H])
        f = jax.nn.sigmoid(gates[:, 1 * H:2 * H])
        g = jnp.tanh(gates[:, 2 * H:3 * H])
        o = jax.nn.sigmoid(gates[:, 3 * H:4 * H])
        c = f * c + i * g
        h = o * jnp.tanh(c)
        return (h, c), h

    _, hs = lax.scan(step, (h0, c0), x_tm)
    return hs


def encoder_forward_ref(x, rnn1_params, rnn2_params, embedding_dim):
    hidden_dim = 2 * embedding_dim
    h = jnp.transpose(x, (1, 0, 2))
    for (wih, whh, b) in rnn1_params:
        h = _lstm_layer_ref(h, wih, whh, b, hidden_dim)
    wih, whh, b = rnn2_params
    h = _lstm_layer_ref(h, wih, whh, b, embedding_dim)
    return h[-1]


# --------------------------------- Main ------------------------------------ #

if __name__ == "__main__":
    B, S, F, E = 2, 8, 4, 32  # batch, seq_len, n_features, embedding_dim

    key = jax.random.PRNGKey(0)
    k_x, k_p = jax.random.split(key)
    x = jax.random.normal(k_x, (B, S, F), jnp.float32)

    rnn1_params, rnn2_params = make_encoder_params(k_p, F, E)

    out = encoder_forward(x, rnn1_params, rnn2_params, E)
    out = jax.block_until_ready(out)
    assert out.shape == (B, E), out.shape

    ref = encoder_forward_ref(x, rnn1_params, rnn2_params, E)
    assert jnp.allclose(out, ref, atol=1e-4, rtol=1e-4), float(jnp.max(jnp.abs(out - ref)))

    print("KERNEL_OK")
</pallas_src>

<mosaic_0001>
module attributes {stable_mosaic.version = 11 : i64} {
  func.func @_encoder_kernel(%arg0: memref<16x4xf32, #tpu.memory_space<vmem>>, %arg1: memref<4x256xf32, #tpu.memory_space<vmem>>, %arg2: memref<64x256xf32, #tpu.memory_space<vmem>>, %arg3: memref<1x256xf32, #tpu.memory_space<vmem>>, %arg4: memref<64x256xf32, #tpu.memory_space<vmem>>, %arg5: memref<64x256xf32, #tpu.memory_space<vmem>>, %arg6: memref<1x256xf32, #tpu.memory_space<vmem>>, %arg7: memref<64x256xf32, #tpu.memory_space<vmem>>, %arg8: memref<64x256xf32, #tpu.memory_space<vmem>>, %arg9: memref<1x256xf32, #tpu.memory_space<vmem>>, %arg10: memref<64x128xf32, #tpu.memory_space<vmem>>, %arg11: memref<32x128xf32, #tpu.memory_space<vmem>>, %arg12: memref<1x128xf32, #tpu.memory_space<vmem>>, %arg13: memref<2x32xf32, #tpu.memory_space<vmem>>, %arg14: memref<16x64xf32, #tpu.memory_space<vmem>>) attributes {dimension_semantics = [], scalar_prefetch = 0 : i64, scratch_operands = 1 : i64, tpu.core_type = #tpu.core_type<tc>} {
    %c0 = arith.constant 0 : index
    %c0_0 = arith.constant 0 : index
    %0 = vector.load %arg0[%c0, %c0_0] : memref<16x4xf32, #tpu.memory_space<vmem>>, vector<16x4xf32>
    %c0_1 = arith.constant 0 : index
    %c0_2 = arith.constant 0 : index
    %1 = vector.load %arg1[%c0_1, %c0_2] : memref<4x256xf32, #tpu.memory_space<vmem>>, vector<4x256xf32>
    %cst = arith.constant dense<0.000000e+00> : vector<16x256xf32>
    %2 = tpu.matmul %0, %1, %cst {dimension_numbers = #tpu.dot_dimension_numbers<[1], [0], [0], [1], [0, 0, 1, 1], [], []>} : vector<16x4xf32>, vector<4x256xf32>, vector<16x256xf32> -> vector<16x256xf32>
    %c0_3 = arith.constant 0 : index
    %c0_4 = arith.constant 0 : index
    %3 = vector.load %arg3[%c0_3, %c0_4] : memref<1x256xf32, #tpu.memory_space<vmem>>, vector<1x256xf32>
    %4 = vector.broadcast %3 : vector<1x256xf32> to vector<16x256xf32>
    %5 = arith.addf %2, %4 : vector<16x256xf32>
    %c0_5 = arith.constant 0 : index
    %c0_6 = arith.constant 0 : index
    %6 = vector.load %arg2[%c0_5, %c0_6] : memref<64x256xf32, #tpu.memory_space<vmem>>, vector<64x256xf32>
    %cst_7 = arith.constant 0.000000e+00 : f32
    %7 = vector.broadcast %cst_7 : f32 to vector<2x64xf32>
    %cst_8 = arith.constant 0.000000e+00 : f32
    %8 = vector.broadcast %cst_8 : f32 to vector<2x64xf32>
    %9 = vector.extract_strided_slice %5 {offsets = [0, 0], sizes = [2, 256], strides = [1, 1]} : vector<16x256xf32> to vector<2x256xf32>
    %cst_9 = arith.constant dense<0.000000e+00> : vector<2x256xf32>
    %10 = tpu.matmul %7, %6, %cst_9 {dimension_numbers = #tpu.dot_dimension_numbers<[1], [0], [0], [1], [0, 0, 1, 1], [], []>} : vector<2x64xf32>, vector<64x256xf32>, vector<2x256xf32> -> vector<2x256xf32>
    %11 = arith.addf %9, %10 : vector<2x256xf32>
    %12 = vector.extract_strided_slice %11 {offsets = [0, 0], sizes = [2, 64], strides = [1, 1]} : vector<2x256xf32> to vector<2x64xf32>
    %13 = arith.negf %12 : vector<2x64xf32>
    %14 = math.exp %13 : vector<2x64xf32>
    %cst_10 = arith.constant 1.000000e+00 : f32
    %15 = vector.broadcast %cst_10 : f32 to vector<2x64xf32>
    %16 = arith.addf %15, %14 : vector<2x64xf32>
    %17 = arith.divf %15, %16 : vector<2x64xf32>
    %18 = vector.extract_strided_slice %11 {offsets = [0, 64], sizes = [2, 64], strides = [1, 1]} : vector<2x256xf32> to vector<2x64xf32>
    %19 = arith.negf %18 : vector<2x64xf32>
    %20 = math.exp %19 : vector<2x64xf32>
    %cst_11 = arith.constant 1.000000e+00 : f32
    %21 = vector.broadcast %cst_11 : f32 to vector<2x64xf32>
    %22 = arith.addf %21, %20 : vector<2x64xf32>
    %23 = arith.divf %21, %22 : vector<2x64xf32>
    %24 = vector.extract_strided_slice %11 {offsets = [0, 128], sizes = [2, 64], strides = [1, 1]} : vector<2x256xf32> to vector<2x64xf32>
    %25 = math.tanh %24 : vector<2x64xf32>
    %26 = vector.extract_strided_slice %11 {offsets = [0, 192], sizes = [2, 64], strides = [1, 1]} : vector<2x256xf32> to vector<2x64xf32>
    %27 = arith.negf %26 : vector<2x64xf32>
    %28 = math.exp %27 : vector<2x64xf32>
    %cst_12 = arith.constant 1.000000e+00 : f32
    %29 = vector.broadcast %cst_12 : f32 to vector<2x64xf32>
    %30 = arith.addf %29, %28 : vector<2x64xf32>
    %31 = arith.divf %29, %30 : vector<2x64xf32>
    %32 = arith.mulf %23, %8 : vector<2x64xf32>
    %33 = arith.mulf %17, %25 : vector<2x64xf32>
    %34 = arith.addf %32, %33 : vector<2x64xf32>
    %35 = math.tanh %34 : vector<2x64xf32>
    %36 = arith.mulf %31, %35 : vector<2x64xf32>
    %c0_13 = arith.constant 0 : index
    %c0_14 = arith.constant 0 : index
    %37 = vector.load %arg14[%c0_13, %c0_14] : memref<16x64xf32, #tpu.memory_space<vmem>>, vector<2x64xf32>
    tpu.vector_store %arg14[%c0_13, %c0_14], %36 {strides = array<i32>} : memref<16x64xf32, #tpu.memory_space<vmem>>, vector<2x64xf32>,
    %38 = vector.extract_strided_slice %5 {offsets = [2, 0], sizes = [2, 256], strides = [1, 1]} : vector<16x256xf32> to vector<2x256xf32>
    %cst_15 = arith.constant dense<0.000000e+00> : vector<2x256xf32>
    %39 = tpu.matmul %36, %6, %cst_15 {dimension_numbers = #tpu.dot_dimension_numbers<[1], [0], [0], [1], [0, 0, 1, 1], [], []>} : vector<2x64xf32>, vector<64x256xf32>, vector<2x256xf32> -> vector<2x256xf32>
    %40 = arith.addf %38, %39 : vector<2x256xf32>
    %41 = vector.extract_strided_slice %40 {offsets = [0, 0], sizes = [2, 64], strides = [1, 1]} : vector<2x256xf32> to vector<2x64xf32>
    %42 = arith.negf %41 : vector<2x64xf32>
    %43 = math.exp %42 : vector<2x64xf32>
    %cst_16 = arith.constant 1.000000e+00 : f32
    %44 = vector.broadcast %cst_16 : f32 to vector<2x64xf32>
    %45 = arith.addf %44, %43 : vector<2x64xf32>
    %46 = arith.divf %44, %45 : vector<2x64xf32>
    %47 = vector.extract_strided_slice %40 {offsets = [0, 64], sizes = [2, 64], strides = [1, 1]} : vector<2x256xf32> to vector<2x64xf32>
    %48 = arith.negf %47 : vector<2x64xf32>
    %49 = math.exp %48 : vector<2x64xf32>
    %cst_17 = arith.constant 1.000000e+00 : f32
    %50 = vector.broadcast %cst_17 : f32 to vector<2x64xf32>
    %51 = arith.addf %50, %49 : vector<2x64xf32>
    %52 = arith.divf %50, %51 : vector<2x64xf32>
    %53 = vector.extract_strided_slice %40 {offsets = [0, 128], sizes = [2, 64], strides = [1, 1]} : vector<2x256xf32> to vector<2x64xf32>
    %54 = math.tanh %53 : vector<2x64xf32>
    %55 = vector.extract_strided_slice %40 {offsets = [0, 192], sizes = [2, 64], strides = [1, 1]} : vector<2x256xf32> to vector<2x64xf32>
    %56 = arith.negf %55 : vector<2x64xf32>
    %57 = math.exp %56 : vector<2x64xf32>
    %cst_18 = arith.constant 1.000000e+00 : f32
    %58 = vector.broadcast %cst_18 : f32 to vector<2x64xf32>
    %59 = arith.addf %58, %57 : vector<2x64xf32>
    %60 = arith.divf %58, %59 : vector<2x64xf32>
    %61 = arith.mulf %52, %34 : vector<2x64xf32>
    %62 = arith.mulf %46, %54 : vector<2x64xf32>
    %63 = arith.addf %61, %62 : vector<2x64xf32>
    %64 = math.tanh %63 : vector<2x64xf32>
    %65 = arith.mulf %60, %64 : vector<2x64xf32>
    %c2 = arith.constant 2 : index
    %c0_19 = arith.constant 0 : index
    %66 = vector.load %arg14[%c2, %c0_19] : memref<16x64xf32, #tpu.memory_space<vmem>>, vector<2x64xf32>
    tpu.vector_store %arg14[%c2, %c0_19], %65 {strides = array<i32>} : memref<16x64xf32, #tpu.memory_space<vmem>>, vector<2x64xf32>,
    %67 = vector.extract_strided_slice %5 {offsets = [4, 0], sizes = [2, 256], strides = [1, 1]} : vector<16x256xf32> to vector<2x256xf32>
    %cst_20 = arith.constant dense<0.000000e+00> : vector<2x256xf32>
    %68 = tpu.matmul %65, %6, %cst_20 {dimension_numbers = #tpu.dot_dimension_numbers<[1], [0], [0], [1], [0, 0, 1, 1], [], []>} : vector<2x64xf32>, vector<64x256xf32>, vector<2x256xf32> -> vector<2x256xf32>
    %69 = arith.addf %67, %68 : vector<2x256xf32>
    %70 = vector.extract_strided_slice %69 {offsets = [0, 0], sizes = [2, 64], strides = [1, 1]} : vector<2x256xf32> to vector<2x64xf32>
    %71 = arith.negf %70 : vector<2x64xf32>
    %72 = math.exp %71 : vector<2x64xf32>
    %cst_21 = arith.constant 1.000000e+00 : f32
    %73 = vector.broadcast %cst_21 : f32 to vector<2x64xf32>
    %74 = arith.addf %73, %72 : vector<2x64xf32>
    %75 = arith.divf %73, %74 : vector<2x64xf32>
    %76 = vector.extract_strided_slice %69 {offsets = [0, 64], sizes = [2, 64], strides = [1, 1]} : vector<2x256xf32> to vector<2x64xf32>
    %77 = arith.negf %76 : vector<2x64xf32>
    %78 = math.exp %77 : vector<2x64xf32>
    %cst_22 = arith.constant 1.000000e+00 : f32
    %79 = vector.broadcast %cst_22 : f32 to vector<2x64xf32>
    %80 = arith.addf %79, %78 : vector<2x64xf32>
    %81 = arith.divf %79, %80 : vector<2x64xf32>
    %82 = vector.extract_strided_slice %69 {offsets = [0, 128], sizes = [2, 64], strides = [1, 1]} : vector<2x256xf32> to vector<2x64xf32>
    %83 = math.tanh %82 : vector<2x64xf32>
    %84 = vector.extract_strided_slice %69 {offsets = [0, 192], sizes = [2, 64], strides = [1, 1]} : vector<2x256xf32> to vector<2x64xf32>
    %85 = arith.negf %84 : vector<2x64xf32>
    %86 = math.exp %85 : vector<2x64xf32>
    %cst_23 = arith.constant 1.000000e+00 : f32
    %87 = vector.broadcast %cst_23 : f32 to vector<2x64xf32>
    %88 = arith.addf %87, %86 : vector<2x64xf32>
    %89 = arith.divf %87, %88 : vector<2x64xf32>
    %90 = arith.mulf %81, %63 : vector<2x64xf32>
    %91 = arith.mulf %75, %83 : vector<2x64xf32>
    %92 = arith.addf %90, %91 : vector<2x64xf32>
    %93 = math.tanh %92 : vector<2x64xf32>
    %94 = arith.mulf %89, %93 : vector<2x64xf32>
    %c4 = arith.constant 4 : index
    %c0_24 = arith.constant 0 : index
    %95 = vector.load %arg14[%c4, %c0_24] : memref<16x64xf32, #tpu.memory_space<vmem>>, vector<2x64xf32>
    tpu.vector_store %arg14[%c4, %c0_24], %94 {strides = array<i32>} : memref<16x64xf32, #tpu.memory_space<vmem>>, vector<2x64xf32>,
    %96 = vector.extract_strided_slice %5 {offsets = [6, 0], sizes = [2, 256], strides = [1, 1]} : vector<16x256xf32> to vector<2x256xf32>
    %cst_25 = arith.constant dense<0.000000e+00> : vector<2x256xf32>
    %97 = tpu.matmul %94, %6, %cst_25 {dimension_numbers = #tpu.dot_dimension_numbers<[1], [0], [0], [1], [0, 0, 1, 1], [], []>} : vector<2x64xf32>, vector<64x256xf32>, vector<2x256xf32> -> vector<2x256xf32>
    %98 = arith.addf %96, %97 : vector<2x256xf32>
    %99 = vector.extract_strided_slice %98 {offsets = [0, 0], sizes = [2, 64], strides = [1, 1]} : vector<2x256xf32> to vector<2x64xf32>
    %100 = arith.negf %99 : vector<2x64xf32>
    %101 = math.exp %100 : vector<2x64xf32>
    %cst_26 = arith.constant 1.000000e+00 : f32
    %102 = vector.broadcast %cst_26 : f32 to vector<2x64xf32>
    %103 = arith.addf %102, %101 : vector<2x64xf32>
    %104 = arith.divf %102, %103 : vector<2x64xf32>
    %105 = vector.extract_strided_slice %98 {offsets = [0, 64], sizes = [2, 64], strides = [1, 1]} : vector<2x256xf32> to vector<2x64xf32>
    %106 = arith.negf %105 : vector<2x64xf32>
    %107 = math.exp %106 : vector<2x64xf32>
    %cst_27 = arith.constant 1.000000e+00 : f32
    %108 = vector.broadcast %cst_27 : f32 to vector<2x64xf32>
    %109 = arith.addf %108, %107 : vector<2x64xf32>
    %110 = arith.divf %108, %109 : vector<2x64xf32>
    %111 = vector.extract_strided_slice %98 {offsets = [0, 128], sizes = [2, 64], strides = [1, 1]} : vector<2x256xf32> to vector<2x64xf32>
    %112 = math.tanh %111 : vector<2x64xf32>
    %113 = vector.extract_strided_slice %98 {offsets = [0, 192], sizes = [2, 64], strides = [1, 1]} : vector<2x256xf32> to vector<2x64xf32>
    %114 = arith.negf %113 : vector<2x64xf32>
    %115 = math.exp %114 : vector<2x64xf32>
    %cst_28 = arith.constant 1.000000e+00 : f32
    %116 = vector.broadcast %cst_28 : f32 to vector<2x64xf32>
    %117 = arith.addf %116, %115 : vector<2x64xf32>
    %118 = arith.divf %116, %117 : vector<2x64xf32>
    %119 = arith.mulf %110, %92 : vector<2x64xf32>
    %120 = arith.mulf %104, %112 : vector<2x64xf32>
    %121 = arith.addf %119, %120 : vector<2x64xf32>
    %122 = math.tanh %121 : vector<2x64xf32>
    %123 = arith.mulf %118, %122 : vector<2x64xf32>
    %c6 = arith.constant 6 : index
    %c0_29 = arith.constant 0 : index
    %124 = vector.load %arg14[%c6, %c0_29] : memref<16x64xf32, #tpu.memory_space<vmem>>, vector<2x64xf32>
    tpu.vector_store %arg14[%c6, %c0_29], %123 {strides = array<i32>} : memref<16x64xf32, #tpu.memory_space<vmem>>, vector<2x64xf32>,
    %125 = vector.extract_strided_slice %5 {offsets = [8, 0], sizes = [2, 256], strides = [1, 1]} : vector<16x256xf32> to vector<2x256xf32>
    %cst_30 = arith.constant dense<0.000000e+00> : vector<2x256xf32>
    %126 = tpu.matmul %123, %6, %cst_30 {dimension_numbers = #tpu.dot_dimension_numbers<[1], [0], [0], [1], [0, 0, 1, 1], [], []>} : vector<2x64xf32>, vector<64x256xf32>, vector<2x256xf32> -> vector<2x256xf32>
    %127 = arith.addf %125, %126 : vector<2x256xf32>
    %128 = vector.extract_strided_slice %127 {offsets = [0, 0], sizes = [2, 64], strides = [1, 1]} : vector<2x256xf32> to vector<2x64xf32>
    %129 = arith.negf %128 : vector<2x64xf32>
    %130 = math.exp %129 : vector<2x64xf32>
    %cst_31 = arith.constant 1.000000e+00 : f32
    %131 = vector.broadcast %cst_31 : f32 to vector<2x64xf32>
    %132 = arith.addf %131, %130 : vector<2x64xf32>
    %133 = arith.divf %131, %132 : vector<2x64xf32>
    %134 = vector.extract_strided_slice %127 {offsets = [0, 64], sizes = [2, 64], strides = [1, 1]} : vector<2x256xf32> to vector<2x64xf32>
    %135 = arith.negf %134 : vector<2x64xf32>
    %136 = math.exp %135 : vector<2x64xf32>
    %cst_32 = arith.constant 1.000000e+00 : f32
    %137 = vector.broadcast %cst_32 : f32 to vector<2x64xf32>
    %138 = arith.addf %137, %136 : vector<2x64xf32>
    %139 = arith.divf %137, %138 : vector<2x64xf32>
    %140 = vector.extract_strided_slice %127 {offsets = [0, 128], sizes = [2, 64], strides = [1, 1]} : vector<2x256xf32> to vector<2x64xf32>
    %141 = math.tanh %140 : vector<2x64xf32>
    %142 = vector.extract_strided_slice %127 {offsets = [0, 192], sizes = [2, 64], strides = [1, 1]} : vector<2x256xf32> to vector<2x64xf32>
    %143 = arith.negf %142 : vector<2x64xf32>
    %144 = math.exp %143 : vector<2x64xf32>
    %cst_33 = arith.constant 1.000000e+00 : f32
    %145 = vector.broadcast %cst_33 : f32 to vector<2x64xf32>
    %146 = arith.addf %145, %144 : vector<2x64xf32>
    %147 = arith.divf %145, %146 : vector<2x64xf32>
    %148 = arith.mulf %139, %121 : vector<2x64xf32>
    %149 = arith.mulf %133, %141 : vector<2x64xf32>
    %150 = arith.addf %148, %149 : vector<2x64xf32>
    %151 = math.tanh %150 : vector<2x64xf32>
    %152 = arith.mulf %147, %151 : vector<2x64xf32>
    %c8 = arith.constant 8 : index
    %c0_34 = arith.constant 0 : index
    %153 = vector.load %arg14[%c8, %c0_34] : memref<16x64xf32, #tpu.memory_space<vmem>>, vector<2x64xf32>
    tpu.vector_store %arg14[%c8, %c0_34], %152 {strides = array<i32>} : memref<16x64xf32, #tpu.memory_space<vmem>>, vector<2x64xf32>,
    %154 = vector.extract_strided_slice %5 {offsets = [10, 0], sizes = [2, 256], strides = [1, 1]} : vector<16x256xf32> to vector<2x256xf32>
    %cst_35 = arith.constant dense<0.000000e+00> : vector<2x256xf32>
    %155 = tpu.matmul %152, %6, %cst_35 {dimension_numbers = #tpu.dot_dimension_numbers<[1], [0], [0], [1], [0, 0, 1, 1], [], []>} : vector<2x64xf32>, vector<64x256xf32>, vector<2x256xf32> -> vector<2x256xf32>
    %156 = arith.addf %154, %155 : vector<2x256xf32>
    %157 = vector.extract_strided_slice %156 {offsets = [0, 0], sizes = [2, 64], strides = [1, 1]} : vector<2x256xf32> to vector<2x64xf32>
    %158 = arith.negf %157 : vector<2x64xf32>
    %159 = math.exp %158 : vector<2x64xf32>
    %cst_36 = arith.constant 1.000000e+00 : f32
    %160 = vector.broadcast %cst_36 : f32 to vector<2x64xf32>
    %161 = arith.addf %160, %159 : vector<2x64xf32>
    %162 = arith.divf %160, %161 : vector<2x64xf32>
    %163 = vector.extract_strided_slice %156 {offsets = [0, 64], sizes = [2, 64], strides = [1, 1]} : vector<2x256xf32> to vector<2x64xf32>
    %164 = arith.negf %163 : vector<2x64xf32>
    %165 = math.exp %164 : vector<2x64xf32>
    %cst_37 = arith.constant 1.000000e+00 : f32
    %166 = vector.broadcast %cst_37 : f32 to vector<2x64xf32>
    %167 = arith.addf %166, %165 : vector<2x64xf32>
    %168 = arith.divf %166, %167 : vector<2x64xf32>
    %169 = vector.extract_strided_slice %156 {offsets = [0, 128], sizes = [2, 64], strides = [1, 1]} : vector<2x256xf32> to vector<2x64xf32>
    %170 = math.tanh %169 : vector<2x64xf32>
    %171 = vector.extract_strided_slice %156 {offsets = [0, 192], sizes = [2, 64], strides = [1, 1]} : vector<2x256xf32> to vector<2x64xf32>
    %172 = arith.negf %171 : vector<2x64xf32>
    %173 = math.exp %172 : vector<2x64xf32>
    %cst_38 = arith.constant 1.000000e+00 : f32
    %174 = vector.broadcast %cst_38 : f32 to vector<2x64xf32>
    %175 = arith.addf %174, %173 : vector<2x64xf32>
    %176 = arith.divf %174, %175 : vector<2x64xf32>
    %177 = arith.mulf %168, %150 : vector<2x64xf32>
    %178 = arith.mulf %162, %170 : vector<2x64xf32>
    %179 = arith.addf %177, %178 : vector<2x64xf32>
    %180 = math.tanh %179 : vector<2x64xf32>
    %181 = arith.mulf %176, %180 : vector<2x64xf32>
    %c10 = arith.constant 10 : index
    %c0_39 = arith.constant 0 : index
    %182 = vector.load %arg14[%c10, %c0_39] : memref<16x64xf32, #tpu.memory_space<vmem>>, vector<2x64xf32>
    tpu.vector_store %arg14[%c10, %c0_39], %181 {strides = array<i32>} : memref<16x64xf32, #tpu.memory_space<vmem>>, vector<2x64xf32>,
    %183 = vector.extract_strided_slice %5 {offsets = [12, 0], sizes = [2, 256], strides = [1, 1]} : vector<16x256xf32> to vector<2x256xf32>
    %cst_40 = arith.constant dense<0.000000e+00> : vector<2x256xf32>
    %184 = tpu.matmul %181, %6, %cst_40 {dimension_numbers = #tpu.dot_dimension_numbers<[1], [0], [0], [1], [0, 0, 1, 1], [], []>} : vector<2x64xf32>, vector<64x256xf32>, vector<2x256xf32> -> vector<2x256xf32>
    %185 = arith.addf %183, %184 : vector<2x256xf32>
    %186 = vector.extract_strided_slice %185 {offsets = [0, 0], sizes = [2, 64], strides = [1, 1]} : vector<2x256xf32> to vector<2x64xf32>
    %187 = arith.negf %186 : vector<2x64xf32>
    %188 = math.exp %187 : vector<2x64xf32>
    %cst_41 = arith.constant 1.000000e+00 : f32
    %189 = vector.broadcast %cst_41 : f32 to vector<2x64xf32>
    %190 = arith.addf %189, %188 : vector<2x64xf32>
    %191 = arith.divf %189, %190 : vector<2x64xf32>
    %192 = vector.extract_strided_slice %185 {offsets = [0, 64], sizes = [2, 64], strides = [1, 1]} : vector<2x256xf32> to vector<2x64xf32>
    %193 = arith.negf %192 : vector<2x64xf32>
    %194 = math.exp %193 : vector<2x64xf32>
    %cst_42 = arith.constant 1.000000e+00 : f32
    %195 = vector.broadcast %cst_42 : f32 to vector<2x64xf32>
    %196 = arith.addf %195, %194 : vector<2x64xf32>
    %197 = arith.divf %195, %196 : vector<2x64xf32>
    %198 = vector.extract_strided_slice %185 {offsets = [0, 128], sizes = [2, 64], strides = [1, 1]} : vector<2x256xf32> to vector<2x64xf32>
    %199 = math.tanh %198 : vector<2x64xf32>
    %200 = vector.extract_strided_slice %185 {offsets = [0, 192], sizes = [2, 64], strides = [1, 1]} : vector<2x256xf32> to vector<2x64xf32>
    %201 = arith.negf %200 : vector<2x64xf32>
    %202 = math.exp %201 : vector<2x64xf32>
    %cst_43 = arith.constant 1.000000e+00 : f32
    %203 = vector.broadcast %cst_43 : f32 to vector<2x64xf32>
    %204 = arith.addf %203, %202 : vector<2x64xf32>
    %205 = arith.divf %203, %204 : vector<2x64xf32>
    %206 = arith.mulf %197, %179 : vector<2x64xf32>
    %207 = arith.mulf %191, %199 : vector<2x64xf32>
    %208 = arith.addf %206, %207 : vector<2x64xf32>
    %209 = math.tanh %208 : vector<2x64xf32>
    %210 = arith.mulf %205, %209 : vector<2x64xf32>
    %c12 = arith.constant 12 : index
    %c0_44 = arith.constant 0 : index
    %211 = vector.load %arg14[%c12, %c0_44] : memref<16x64xf32, #tpu.memory_space<vmem>>, vector<2x64xf32>
    tpu.vector_store %arg14[%c12, %c0_44], %210 {strides = array<i32>} : memref<16x64xf32, #tpu.memory_space<vmem>>, vector<2x64xf32>,
    %212 = vector.extract_strided_slice %5 {offsets = [14, 0], sizes = [2, 256], strides = [1, 1]} : vector<16x256xf32> to vector<2x256xf32>
    %cst_45 = arith.constant dense<0.000000e+00> : vector<2x256xf32>
    %213 = tpu.matmul %210, %6, %cst_45 {dimension_numbers = #tpu.dot_dimension_numbers<[1], [0], [0], [1], [0, 0, 1, 1], [], []>} : vector<2x64xf32>, vector<64x256xf32>, vector<2x256xf32> -> vector<2x256xf32>
    %214 = arith.addf %212, %213 : vector<2x256xf32>
    %215 = vector.extract_strided_slice %214 {offsets = [0, 0], sizes = [2, 64], strides = [1, 1]} : vector<2x256xf32> to vector<2x64xf32>
    %216 = arith.negf %215 : vector<2x64xf32>
    %217 = math.exp %216 : vector<2x64xf32>
    %cst_46 = arith.constant 1.000000e+00 : f32
    %218 = vector.broadcast %cst_46 : f32 to vector<2x64xf32>
    %219 = arith.addf %218, %217 : vector<2x64xf32>
    %220 = arith.divf %218, %219 : vector<2x64xf32>
    %221 = vector.extract_strided_slice %214 {offsets = [0, 64], sizes = [2, 64], strides = [1, 1]} : vector<2x256xf32> to vector<2x64xf32>
    %222 = arith.negf %221 : vector<2x64xf32>
    %223 = math.exp %222 : vector<2x64xf32>
    %cst_47 = arith.constant 1.000000e+00 : f32
    %224 = vector.broadcast %cst_47 : f32 to vector<2x64xf32>
    %225 = arith.addf %224, %223 : vector<2x64xf32>
    %226 = arith.divf %224, %225 : vector<2x64xf32>
    %227 = vector.extract_strided_slice %214 {offsets = [0, 128], sizes = [2, 64], strides = [1, 1]} : vector<2x256xf32> to vector<2x64xf32>
    %228 = math.tanh %227 : vector<2x64xf32>
    %229 = vector.extract_strided_slice %214 {offsets = [0, 192], sizes = [2, 64], strides = [1, 1]} : vector<2x256xf32> to vector<2x64xf32>
    %230 = arith.negf %229 : vector<2x64xf32>
    %231 = math.exp %230 : vector<2x64xf32>
    %cst_48 = arith.constant 1.000000e+00 : f32
    %232 = vector.broadcast %cst_48 : f32 to vector<2x64xf32>
    %233 = arith.addf %232, %231 : vector<2x64xf32>
    %234 = arith.divf %232, %233 : vector<2x64xf32>
    %235 = arith.mulf %226, %208 : vector<2x64xf32>
    %236 = arith.mulf %220, %228 : vector<2x64xf32>
    %237 = arith.addf %235, %236 : vector<2x64xf32>
    %238 = math.tanh %237 : vector<2x64xf32>
    %239 = arith.mulf %234, %238 : vector<2x64xf32>
    %c14 = arith.constant 14 : index
    %c0_49 = arith.constant 0 : index
    %240 = vector.load %arg14[%c14, %c0_49] : memref<16x64xf32, #tpu.memory_space<vmem>>, vector<2x64xf32>
    tpu.vector_store %arg14[%c14, %c0_49], %239 {strides = array<i32>} : memref<16x64xf32, #tpu.memory_space<vmem>>, vector<2x64xf32>,
    %c0_50 = arith.constant 0 : index
    %c0_51 = arith.constant 0 : index
    %241 = vector.load %arg14[%c0_50, %c0_51] : memref<16x64xf32, #tpu.memory_space<vmem>>, vector<16x64xf32>
    %c0_52 = arith.constant 0 : index
    %c0_53 = arith.constant 0 : index
    %242 = vector.load %arg4[%c0_52, %c0_53] : memref<64x256xf32, #tpu.memory_space<vmem>>, vector<64x256xf32>
    %cst_54 = arith.constant dense<0.000000e+00> : vector<16x256xf32>
    %243 = tpu.matmul %241, %242, %cst_54 {dimension_numbers = #tpu.dot_dimension_numbers<[1], [0], [0], [1], [0, 0, 1, 1], [], []>} : vector<16x64xf32>, vector<64x256xf32>, vector<16x256xf32> -> vector<16x256xf32>
    %c0_55 = arith.constant 0 : index
    %c0_56 = arith.constant 0 : index
    %244 = vector.load %arg6[%c0_55, %c0_56] : memref<1x256xf32, #tpu.memory_space<vmem>>, vector<1x256xf32>
    %245 = vector.broadcast %244 : vector<1x256xf32> to vector<16x256xf32>
    %246 = arith.addf %243, %245 : vector<16x256xf32>
    %c0_57 = arith.constant 0 : index
    %c0_58 = arith.constant 0 : index
    %247 = vector.load %arg5[%c0_57, %c0_58] : memref<64x256xf32, #tpu.memory_space<vmem>>, vector<64x256xf32>
    %cst_59 = arith.constant 0.000000e+00 : f32
    %248 = vector.broadcast %cst_59 : f32 to vector<2x64xf32>
    %cst_60 = arith.constant 0.000000e+00 : f32
    %249 = vector.broadcast %cst_60 : f32 to vector<2x64xf32>
    %250 = vector.extract_strided_slice %246 {offsets = [0, 0], sizes = [2, 256], strides = [1, 1]} : vector<16x256xf32> to vector<2x256xf32>
    %cst_61 = arith.constant dense<0.000000e+00> : vector<2x256xf32>
    %251 = tpu.matmul %248, %247, %cst_61 {dimension_numbers = #tpu.dot_dimension_numbers<[1], [0], [0], [1], [0, 0, 1, 1], [], []>} : vector<2x64xf32>, vector<64x256xf32>, vector<2x256xf32> -> vector<2x256xf32>
    %252 = arith.addf %250, %251 : vector<2x256xf32>
    %253 = vector.extract_strided_slice %252 {offsets = [0, 0], sizes = [2, 64], strides = [1, 1]} : vector<2x256xf32> to vector<2x64xf32>
    %254 = arith.negf %253 : vector<2x64xf32>
    %255 = math.exp %254 : vector<2x64xf32>
    %cst_62 = arith.constant 1.000000e+00 : f32
    %256 = vector.broadcast %cst_62 : f32 to vector<2x64xf32>
    %257 = arith.addf %256, %255 : vector<2x64xf32>
    %258 = arith.divf %256, %257 : vector<2x64xf32>
    %259 = vector.extract_strided_slice %252 {offsets = [0, 64], sizes = [2, 64], strides = [1, 1]} : vector<2x256xf32> to vector<2x64xf32>
    %260 = arith.negf %259 : vector<2x64xf32>
    %261 = math.exp %260 : vector<2x64xf32>
    %cst_63 = arith.constant 1.000000e+00 : f32
    %262 = vector.broadcast %cst_63 : f32 to vector<2x64xf32>
    %263 = arith.addf %262, %261 : vector<2x64xf32>
    %264 = arith.divf %262, %263 : vector<2x64xf32>
    %265 = vector.extract_strided_slice %252 {offsets = [0, 128], sizes = [2, 64], strides = [1, 1]} : vector<2x256xf32> to vector<2x64xf32>
    %266 = math.tanh %265 : vector<2x64xf32>
    %267 = vector.extract_strided_slice %252 {offsets = [0, 192], sizes = [2, 64], strides = [1, 1]} : vector<2x256xf32> to vector<2x64xf32>
    %268 = arith.negf %267 : vector<2x64xf32>
    %269 = math.exp %268 : vector<2x64xf32>
    %cst_64 = arith.constant 1.000000e+00 : f32
    %270 = vector.broadcast %cst_64 : f32 to vector<2x64xf32>
    %271 = arith.addf %270, %269 : vector<2x64xf32>
    %272 = arith.divf %270, %271 : vector<2x64xf32>
    %273 = arith.mulf %264, %249 : vector<2x64xf32>
    %274 = arith.mulf %258, %266 : vector<2x64xf32>
    %275 = arith.addf %273, %274 : vector<2x64xf32>
    %276 = math.tanh %275 : vector<2x64xf32>
    %277 = arith.mulf %272, %276 : vector<2x64xf32>
    %c0_65 = arith.constant 0 : index
    %c0_66 = arith.constant 0 : index
    %278 = vector.load %arg14[%c0_65, %c0_66] : memref<16x64xf32, #tpu.memory_space<vmem>>, vector<2x64xf32>
    tpu.vector_store %arg14[%c0_65, %c0_66], %277 {strides = array<i32>} : memref<16x64xf32, #tpu.memory_space<vmem>>, vector<2x64xf32>,
    %279 = vector.extract_strided_slice %246 {offsets = [2, 0], sizes = [2, 256], strides = [1, 1]} : vector<16x256xf32> to vector<2x256xf32>
    %cst_67 = arith.constant dense<0.000000e+00> : vector<2x256xf32>
    %280 = tpu.matmul %277, %247, %cst_67 {dimension_numbers = #tpu.dot_dimension_numbers<[1], [0], [0], [1], [0, 0, 1, 1], [], []>} : vector<2x64xf32>, vector<64x256xf32>, vector<2x256xf32> -> vector<2x256xf32>
    %281 = arith.addf %279, %280 : vector<2x256xf32>
    %282 = vector.extract_strided_slice %281 {offsets = [0, 0], sizes = [2, 64], strides = [1, 1]} : vector<2x256xf32> to vector<2x64xf32>
    %283 = arith.negf %282 : vector<2x64xf32>
    %284 = math.exp %283 : vector<2x64xf32>
    %cst_68 = arith.constant 1.000000e+00 : f32
    %285 = vector.broadcast %cst_68 : f32 to vector<2x64xf32>
    %286 = arith.addf %285, %284 : vector<2x64xf32>
    %287 = arith.divf %285, %286 : vector<2x64xf32>
    %288 = vector.extract_strided_slice %281 {offsets = [0, 64], sizes = [2, 64], strides = [1, 1]} : vector<2x256xf32> to vector<2x64xf32>
    %289 = arith.negf %288 : vector<2x64xf32>
    %290 = math.exp %289 : vector<2x64xf32>
    %cst_69 = arith.constant 1.000000e+00 : f32
    %291 = vector.broadcast %cst_69 : f32 to vector<2x64xf32>
    %292 = arith.addf %291, %290 : vector<2x64xf32>
    %293 = arith.divf %291, %292 : vector<2x64xf32>
    %294 = vector.extract_strided_slice %281 {offsets = [0, 128], sizes = [2, 64], strides = [1, 1]} : vector<2x256xf32> to vector<2x64xf32>
    %295 = math.tanh %294 : vector<2x64xf32>
    %296 = vector.extract_strided_slice %281 {offsets = [0, 192], sizes = [2, 64], strides = [1, 1]} : vector<2x256xf32> to vector<2x64xf32>
    %297 = arith.negf %296 : vector<2x64xf32>
    %298 = math.exp %297 : vector<2x64xf32>
    %cst_70 = arith.constant 1.000000e+00 : f32
    %299 = vector.broadcast %cst_70 : f32 to vector<2x64xf32>
    %300 = arith.addf %299, %298 : vector<2x64xf32>
    %301 = arith.divf %299, %300 : vector<2x64xf32>
    %302 = arith.mulf %293, %275 : vector<2x64xf32>
    %303 = arith.mulf %287, %295 : vector<2x64xf32>
    %304 = arith.addf %302, %303 : vector<2x64xf32>
    %305 = math.tanh %304 : vector<2x64xf32>
    %306 = arith.mulf %301, %305 : vector<2x64xf32>
    %c2_71 = arith.constant 2 : index
    %c0_72 = arith.constant 0 : index
    %307 = vector.load %arg14[%c2_71, %c0_72] : memref<16x64xf32, #tpu.memory_space<vmem>>, vector<2x64xf32>
    tpu.vector_store %arg14[%c2_71, %c0_72], %306 {strides = array<i32>} : memref<16x64xf32, #tpu.memory_space<vmem>>, vector<2x64xf32>,
    %308 = vector.extract_strided_slice %246 {offsets = [4, 0], sizes = [2, 256], strides = [1, 1]} : vector<16x256xf32> to vector<2x256xf32>
    %cst_73 = arith.constant dense<0.000000e+00> : vector<2x256xf32>
    %309 = tpu.matmul %306, %247, %cst_73 {dimension_numbers = #tpu.dot_dimension_numbers<[1], [0], [0], [1], [0, 0, 1, 1], [], []>} : vector<2x64xf32>, vector<64x256xf32>, vector<2x256xf32> -> vector<2x256xf32>
    %310 = arith.addf %308, %309 : vector<2x256xf32>
    %311 = vector.extract_strided_slice %310 {offsets = [0, 0], sizes = [2, 64], strides = [1, 1]} : vector<2x256xf32> to vector<2x64xf32>
    %312 = arith.negf %311 : vector<2x64xf32>
    %313 = math.exp %312 : vector<2x64xf32>
    %cst_74 = arith.constant 1.000000e+00 : f32
    %314 = vector.broadcast %cst_74 : f32 to vector<2x64xf32>
    %315 = arith.addf %314, %313 : vector<2x64xf32>
    %316 = arith.divf %314, %315 : vector<2x64xf32>
    %317 = vector.extract_strided_slice %310 {offsets = [0, 64], sizes = [2, 64], strides = [1, 1]} : vector<2x256xf32> to vector<2x64xf32>
    %318 = arith.negf %317 : vector<2x64xf32>
    %319 = math.exp %318 : vector<2x64xf32>
    %cst_75 = arith.constant 1.000000e+00 : f32
    %320 = vector.broadcast %cst_75 : f32 to vector<2x64xf32>
    %321 = arith.addf %320, %319 : vector<2x64xf32>
    %322 = arith.divf %320, %321 : vector<2x64xf32>
    %323 = vector.extract_strided_slice %310 {offsets = [0, 128], sizes = [2, 64], strides = [1, 1]} : vector<2x256xf32> to vector<2x64xf32>
    %324 = math.tanh %323 : vector<2x64xf32>
    %325 = vector.extract_strided_slice %310 {offsets = [0, 192], sizes = [2, 64], strides = [1, 1]} : vector<2x256xf32> to vector<2x64xf32>
    %326 = arith.negf %325 : vector<2x64xf32>
    %327 = math.exp %326 : vector<2x64xf32>
    %cst_76 = arith.constant 1.000000e+00 : f32
    %328 = vector.broadcast %cst_76 : f32 to vector<2x64xf32>
    %329 = arith.addf %328, %327 : vector<2x64xf32>
    %330 = arith.divf %328, %329 : vector<2x64xf32>
    %331 = arith.mulf %322, %304 : vector<2x64xf32>
    %332 = arith.mulf %316, %324 : vector<2x64xf32>
    %333 = arith.addf %331, %332 : vector<2x64xf32>
    %334 = math.tanh %333 : vector<2x64xf32>
    %335 = arith.mulf %330, %334 : vector<2x64xf32>
    %c4_77 = arith.constant 4 : index
    %c0_78 = arith.constant 0 : index
    %336 = vector.load %arg14[%c4_77, %c0_78] : memref<16x64xf32, #tpu.memory_space<vmem>>, vector<2x64xf32>
    tpu.vector_store %arg14[%c4_77, %c0_78], %335 {strides = array<i32>} : memref<16x64xf32, #tpu.memory_space<vmem>>, vector<2x64xf32>,
    %337 = vector.extract_strided_slice %246 {offsets = [6, 0], sizes = [2, 256], strides = [1, 1]} : vector<16x256xf32> to vector<2x256xf32>
    %cst_79 = arith.constant dense<0.000000e+00> : vector<2x256xf32>
    %338 = tpu.matmul %335, %247, %cst_79 {dimension_numbers = #tpu.dot_dimension_numbers<[1], [0], [0], [1], [0, 0, 1, 1], [], []>} : vector<2x64xf32>, vector<64x256xf32>, vector<2x256xf32> -> vector<2x256xf32>
    %339 = arith.addf %337, %338 : vector<2x256xf32>
    %340 = vector.extract_strided_slice %339 {offsets = [0, 0], sizes = [2, 64], strides = [1, 1]} : vector<2x256xf32> to vector<2x64xf32>
    %341 = arith.negf %340 : vector<2x64xf32>
    %342 = math.exp %341 : vector<2x64xf32>
    %cst_80 = arith.constant 1.000000e+00 : f32
    %343 = vector.broadcast %cst_80 : f32 to vector<2x64xf32>
    %344 = arith.addf %343, %342 : vector<2x64xf32>
    %345 = arith.divf %343, %344 : vector<2x64xf32>
    %346 = vector.extract_strided_slice %339 {offsets = [0, 64], sizes = [2, 64], strides = [1, 1]} : vector<2x256xf32> to vector<2x64xf32>
    %347 = arith.negf %346 : vector<2x64xf32>
    %348 = math.exp %347 : vector<2x64xf32>
    %cst_81 = arith.constant 1.000000e+00 : f32
    %349 = vector.broadcast %cst_81 : f32 to vector<2x64xf32>
    %350 = arith.addf %349, %348 : vector<2x64xf32>
    %351 = arith.divf %349, %350 : vector<2x64xf32>
    %352 = vector.extract_strided_slice %339 {offsets = [0, 128], sizes = [2, 64], strides = [1, 1]} : vector<2x256xf32> to vector<2x64xf32>
    %353 = math.tanh %352 : vector<2x64xf32>
    %354 = vector.extract_strided_slice %339 {offsets = [0, 192], sizes = [2, 64], strides = [1, 1]} : vector<2x256xf32> to vector<2x64xf32>
    %355 = arith.negf %354 : vector<2x64xf32>
    %356 = math.exp %355 : vector<2x64xf32>
    %cst_82 = arith.constant 1.000000e+00 : f32
    %357 = vector.broadcast %cst_82 : f32 to vector<2x64xf32>
    %358 = arith.addf %357, %356 : vector<2x64xf32>
    %359 = arith.divf %357, %358 : vector<2x64xf32>
    %360 = arith.mulf %351, %333 : vector<2x64xf32>
    %361 = arith.mulf %345, %353 : vector<2x64xf32>
    %362 = arith.addf %360, %361 : vector<2x64xf32>
    %363 = math.tanh %362 : vector<2x64xf32>
    %364 = arith.mulf %359, %363 : vector<2x64xf32>
    %c6_83 = arith.constant 6 : index
    %c0_84 = arith.constant 0 : index
    %365 = vector.load %arg14[%c6_83, %c0_84] : memref<16x64xf32, #tpu.memory_space<vmem>>, vector<2x64xf32>
    tpu.vector_store %arg14[%c6_83, %c0_84], %364 {strides = array<i32>} : memref<16x64xf32, #tpu.memory_space<vmem>>, vector<2x64xf32>,
    %366 = vector.extract_strided_slice %246 {offsets = [8, 0], sizes = [2, 256], strides = [1, 1]} : vector<16x256xf32> to vector<2x256xf32>
    %cst_85 = arith.constant dense<0.000000e+00> : vector<2x256xf32>
    %367 = tpu.matmul %364, %247, %cst_85 {dimension_numbers = #tpu.dot_dimension_numbers<[1], [0], [0], [1], [0, 0, 1, 1], [], []>} : vector<2x64xf32>, vector<64x256xf32>, vector<2x256xf32> -> vector<2x256xf32>
    %368 = arith.addf %366, %367 : vector<2x256xf32>
    %369 = vector.extract_strided_slice %368 {offsets = [0, 0], sizes = [2, 64], strides = [1, 1]} : vector<2x256xf32> to vector<2x64xf32>
    %370 = arith.negf %369 : vector<2x64xf32>
    %371 = math.exp %370 : vector<2x64xf32>
    %cst_86 = arith.constant 1.000000e+00 : f32
    %372 = vector.broadcast %cst_86 : f32 to vector<2x64xf32>
    %373 = arith.addf %372, %371 : vector<2x64xf32>
    %374 = arith.divf %372, %373 : vector<2x64xf32>
    %375 = vector.extract_strided_slice %368 {offsets = [0, 64], sizes = [2, 64], strides = [1, 1]} : vector<2x256xf32> to vector<2x64xf32>
    %376 = arith.negf %375 : vector<2x64xf32>
    %377 = math.exp %376 : vector<2x64xf32>
    %cst_87 = arith.constant 1.000000e+00 : f32
    %378 = vector.broadcast %cst_87 : f32 to vector<2x64xf32>
    %379 = arith.addf %378, %377 : vector<2x64xf32>
    %380 = arith.divf %378, %379 : vector<2x64xf32>
    %381 = vector.extract_strided_slice %368 {offsets = [0, 128], sizes = [2, 64], strides = [1, 1]} : vector<2x256xf32> to vector<2x64xf32>
    %382 = math.tanh %381 : vector<2x64xf32>
    %383 = vector.extract_strided_slice %368 {offsets = [0, 192], sizes = [2, 64], strides = [1, 1]} : vector<2x256xf32> to vector<2x64xf32>
    %384 = arith.negf %383 : vector<2x64xf32>
    %385 = math.exp %384 : vector<2x64xf32>
    %cst_88 = arith.constant 1.000000e+00 : f32
    %386 = vector.broadcast %cst_88 : f32 to vector<2x64xf32>
    %387 = arith.addf %386, %385 : vector<2x64xf32>
    %388 = arith.divf %386, %387 : vector<2x64xf32>
    %389 = arith.mulf %380, %362 : vector<2x64xf32>
    %390 = arith.mulf %374, %382 : vector<2x64xf32>
    %391 = arith.addf %389, %390 : vector<2x64xf32>
    %392 = math.tanh %391 : vector<2x64xf32>
    %393 = arith.mulf %388, %392 : vector<2x64xf32>
    %c8_89 = arith.constant 8 : index
    %c0_90 = arith.constant 0 : index
    %394 = vector.load %arg14[%c8_89, %c0_90] : memref<16x64xf32, #tpu.memory_space<vmem>>, vector<2x64xf32>
    tpu.vector_store %arg14[%c8_89, %c0_90], %393 {strides = array<i32>} : memref<16x64xf32, #tpu.memory_space<vmem>>, vector<2x64xf32>,
    %395 = vector.extract_strided_slice %246 {offsets = [10, 0], sizes = [2, 256], strides = [1, 1]} : vector<16x256xf32> to vector<2x256xf32>
    %cst_91 = arith.constant dense<0.000000e+00> : vector<2x256xf32>
    %396 = tpu.matmul %393, %247, %cst_91 {dimension_numbers = #tpu.dot_dimension_numbers<[1], [0], [0], [1], [0, 0, 1, 1], [], []>} : vector<2x64xf32>, vector<64x256xf32>, vector<2x256xf32> -> vector<2x256xf32>
    %397 = arith.addf %395, %396 : vector<2x256xf32>
    %398 = vector.extract_strided_slice %397 {offsets = [0, 0], sizes = [2, 64], strides = [1, 1]} : vector<2x256xf32> to vector<2x64xf32>
    %399 = arith.negf %398 : vector<2x64xf32>
    %400 = math.exp %399 : vector<2x64xf32>
    %cst_92 = arith.constant 1.000000e+00 : f32
    %401 = vector.broadcast %cst_92 : f32 to vector<2x64xf32>
    %402 = arith.addf %401, %400 : vector<2x64xf32>
    %403 = arith.divf %401, %402 : vector<2x64xf32>
    %404 = vector.extract_strided_slice %397 {offsets = [0, 64], sizes = [2, 64], strides = [1, 1]} : vector<2x256xf32> to vector<2x64xf32>
    %405 = arith.negf %404 : vector<2x64xf32>
    %406 = math.exp %405 : vector<2x64xf32>
    %cst_93 = arith.constant 1.000000e+00 : f32
    %407 = vector.broadcast %cst_93 : f32 to vector<2x64xf32>
    %408 = arith.addf %407, %406 : vector<2x64xf32>
    %409 = arith.divf %407, %408 : vector<2x64xf32>
    %410 = vector.extract_strided_slice %397 {offsets = [0, 128], sizes = [2, 64], strides = [1, 1]} : vector<2x256xf32> to vector<2x64xf32>
    %411 = math.tanh %410 : vector<2x64xf32>
    %412 = vector.extract_strided_slice %397 {offsets = [0, 192], sizes = [2, 64], strides = [1, 1]} : vector<2x256xf32> to vector<2x64xf32>
    %413 = arith.negf %412 : vector<2x64xf32>
    %414 = math.exp %413 : vector<2x64xf32>
    %cst_94 = arith.constant 1.000000e+00 : f32
    %415 = vector.broadcast %cst_94 : f32 to vector<2x64xf32>
    %416 = arith.addf %415, %414 : vector<2x64xf32>
    %417 = arith.divf %415, %416 : vector<2x64xf32>
    %418 = arith.mulf %409, %391 : vector<2x64xf32>
    %419 = arith.mulf %403, %411 : vector<2x64xf32>
    %420 = arith.addf %418, %419 : vector<2x64xf32>
    %421 = math.tanh %420 : vector<2x64xf32>
    %422 = arith.mulf %417, %421 : vector<2x64xf32>
    %c10_95 = arith.constant 10 : index
    %c0_96 = arith.constant 0 : index
    %423 = vector.load %arg14[%c10_95, %c0_96] : memref<16x64xf32, #tpu.memory_space<vmem>>, vector<2x64xf32>
    tpu.vector_store %arg14[%c10_95, %c0_96], %422 {strides = array<i32>} : memref<16x64xf32, #tpu.memory_space<vmem>>, vector<2x64xf32>,
    %424 = vector.extract_strided_slice %246 {offsets = [12, 0], sizes = [2, 256], strides = [1, 1]} : vector<16x256xf32> to vector<2x256xf32>
    %cst_97 = arith.constant dense<0.000000e+00> : vector<2x256xf32>
    %425 = tpu.matmul %422, %247, %cst_97 {dimension_numbers = #tpu.dot_dimension_numbers<[1], [0], [0], [1], [0, 0, 1, 1], [], []>} : vector<2x64xf32>, vector<64x256xf32>, vector<2x256xf32> -> vector<2x256xf32>
    %426 = arith.addf %424, %425 : vector<2x256xf32>
    %427 = vector.extract_strided_slice %426 {offsets = [0, 0], sizes = [2, 64], strides = [1, 1]} : vector<2x256xf32> to vector<2x64xf32>
    %428 = arith.negf %427 : vector<2x64xf32>
    %429 = math.exp %428 : vector<2x64xf32>
    %cst_98 = arith.constant 1.000000e+00 : f32
    %430 = vector.broadcast %cst_98 : f32 to vector<2x64xf32>
    %431 = arith.addf %430, %429 : vector<2x64xf32>
    %432 = arith.divf %430, %431 : vector<2x64xf32>
    %433 = vector.extract_strided_slice %426 {offsets = [0, 64], sizes = [2, 64], strides = [1, 1]} : vector<2x256xf32> to vector<2x64xf32>
    %434 = arith.negf %433 : vector<2x64xf32>
    %435 = math.exp %434 : vector<2x64xf32>
    %cst_99 = arith.constant 1.000000e+00 : f32
    %436 = vector.broadcast %cst_99 : f32 to vector<2x64xf32>
    %437 = arith.addf %436, %435 : vector<2x64xf32>
    %438 = arith.divf %436, %437 : vector<2x64xf32>
    %439 = vector.extract_strided_slice %426 {offsets = [0, 128], sizes = [2, 64], strides = [1, 1]} : vector<2x256xf32> to vector<2x64xf32>
    %440 = math.tanh %439 : vector<2x64xf32>
    %441 = vector.extract_strided_slice %426 {offsets = [0, 192], sizes = [2, 64], strides = [1, 1]} : vector<2x256xf32> to vector<2x64xf32>
    %442 = arith.negf %441 : vector<2x64xf32>
    %443 = math.exp %442 : vector<2x64xf32>
    %cst_100 = arith.constant 1.000000e+00 : f32
    %444 = vector.broadcast %cst_100 : f32 to vector<2x64xf32>
    %445 = arith.addf %444, %443 : vector<2x64xf32>
    %446 = arith.divf %444, %445 : vector<2x64xf32>
    %447 = arith.mulf %438, %420 : vector<2x64xf32>
    %448 = arith.mulf %432, %440 : vector<2x64xf32>
    %449 = arith.addf %447, %448 : vector<2x64xf32>
    %450 = math.tanh %449 : vector<2x64xf32>
    %451 = arith.mulf %446, %450 : vector<2x64xf32>
    %c12_101 = arith.constant 12 : index
    %c0_102 = arith.constant 0 : index
    %452 = vector.load %arg14[%c12_101, %c0_102] : memref<16x64xf32, #tpu.memory_space<vmem>>, vector<2x64xf32>
    tpu.vector_store %arg14[%c12_101, %c0_102], %451 {strides = array<i32>} : memref<16x64xf32, #tpu.memory_space<vmem>>, vector<2x64xf32>,
    %453 = vector.extract_strided_slice %246 {offsets = [14, 0], sizes = [2, 256], strides = [1, 1]} : vector<16x256xf32> to vector<2x256xf32>
    %cst_103 = arith.constant dense<0.000000e+00> : vector<2x256xf32>
    %454 = tpu.matmul %451, %247, %cst_103 {dimension_numbers = #tpu.dot_dimension_numbers<[1], [0], [0], [1], [0, 0, 1, 1], [], []>} : vector<2x64xf32>, vector<64x256xf32>, vector<2x256xf32> -> vector<2x256xf32>
    %455 = arith.addf %453, %454 : vector<2x256xf32>
    %456 = vector.extract_strided_slice %455 {offsets = [0, 0], sizes = [2, 64], strides = [1, 1]} : vector<2x256xf32> to vector<2x64xf32>
    %457 = arith.negf %456 : vector<2x64xf32>
    %458 = math.exp %457 : vector<2x64xf32>
    %cst_104 = arith.constant 1.000000e+00 : f32
    %459 = vector.broadcast %cst_104 : f32 to vector<2x64xf32>
    %460 = arith.addf %459, %458 : vector<2x64xf32>
    %461 = arith.divf %459, %460 : vector<2x64xf32>
    %462 = vector.extract_strided_slice %455 {offsets = [0, 64], sizes = [2, 64], strides = [1, 1]} : vector<2x256xf32> to vector<2x64xf32>
    %463 = arith.negf %462 : vector<2x64xf32>
    %464 = math.exp %463 : vector<2x64xf32>
    %cst_105 = arith.constant 1.000000e+00 : f32
    %465 = vector.broadcast %cst_105 : f32 to vector<2x64xf32>
    %466 = arith.addf %465, %464 : vector<2x64xf32>
    %467 = arith.divf %465, %466 : vector<2x64xf32>
    %468 = vector.extract_strided_slice %455 {offsets = [0, 128], sizes = [2, 64], strides = [1, 1]} : vector<2x256xf32> to vector<2x64xf32>
    %469 = math.tanh %468 : vector<2x64xf32>
    %470 = vector.extract_strided_slice %455 {offsets = [0, 192], sizes = [2, 64], strides = [1, 1]} : vector<2x256xf32> to vector<2x64xf32>
    %471 = arith.negf %470 : vector<2x64xf32>
    %472 = math.exp %471 : vector<2x64xf32>
    %cst_106 = arith.constant 1.000000e+00 : f32
    %473 = vector.broadcast %cst_106 : f32 to vector<2x64xf32>
    %474 = arith.addf %473, %472 : vector<2x64xf32>
    %475 = arith.divf %473, %474 : vector<2x64xf32>
    %476 = arith.mulf %467, %449 : vector<2x64xf32>
    %477 = arith.mulf %461, %469 : vector<2x64xf32>
    %478 = arith.addf %476, %477 : vector<2x64xf32>
    %479 = math.tanh %478 : vector<2x64xf32>
    %480 = arith.mulf %475, %479 : vector<2x64xf32>
    %c14_107 = arith.constant 14 : index
    %c0_108 = arith.constant 0 : index
    %481 = vector.load %arg14[%c14_107, %c0_108] : memref<16x64xf32, #tpu.memory_space<vmem>>, vector<2x64xf32>
    tpu.vector_store %arg14[%c14_107, %c0_108], %480 {strides = array<i32>} : memref<16x64xf32, #tpu.memory_space<vmem>>, vector<2x64xf32>,
    %c0_109 = arith.constant 0 : index
    %c0_110 = arith.constant 0 : index
    %482 = vector.load %arg14[%c0_109, %c0_110] : memref<16x64xf32, #tpu.memory_space<vmem>>, vector<16x64xf32>
    %c0_111 = arith.constant 0 : index
    %c0_112 = arith.constant 0 : index
    %483 = vector.load %arg7[%c0_111, %c0_112] : memref<64x256xf32, #tpu.memory_space<vmem>>, vector<64x256xf32>
    %cst_113 = arith.constant dense<0.000000e+00> : vector<16x256xf32>
    %484 = tpu.matmul %482, %483, %cst_113 {dimension_numbers = #tpu.dot_dimension_numbers<[1], [0], [0], [1], [0, 0, 1, 1], [], []>} : vector<16x64xf32>, vector<64x256xf32>, vector<16x256xf32> -> vector<16x256xf32>
    %c0_114 = arith.constant 0 : index
    %c0_115 = arith.constant 0 : index
    %485 = vector.load %arg9[%c0_114, %c0_115] : memref<1x256xf32, #tpu.memory_space<vmem>>, vector<1x256xf32>
    %486 = vector.broadcast %485 : vector<1x256xf32> to vector<16x256xf32>
    %487 = arith.addf %484, %486 : vector<16x256xf32>
    %c0_116 = arith.constant 0 : index
    %c0_117 = arith.constant 0 : index
    %488 = vector.load %arg8[%c0_116, %c0_117] : memref<64x256xf32, #tpu.memory_space<vmem>>, vector<64x256xf32>
    %cst_118 = arith.constant 0.000000e+00 : f32
    %489 = vector.broadcast %cst_118 : f32 to vector<2x64xf32>
    %cst_119 = arith.constant 0.000000e+00 : f32
    %490 = vector.broadcast %cst_119 : f32 to vector<2x64xf32>
    %491 = vector.extract_strided_slice %487 {offsets = [0, 0], sizes = [2, 256], strides = [1, 1]} : vector<16x256xf32> to vector<2x256xf32>
    %cst_120 = arith.constant dense<0.000000e+00> : vector<2x256xf32>
    %492 = tpu.matmul %489, %488, %cst_120 {dimension_numbers = #tpu.dot_dimension_numbers<[1], [0], [0], [1], [0, 0, 1, 1], [], []>} : vector<2x64xf32>, vector<64x256xf32>, vector<2x256xf32> -> vector<2x256xf32>
    %493 = arith.addf %491, %492 : vector<2x256xf32>
    %494 = vector.extract_strided_slice %493 {offsets = [0, 0], sizes = [2, 64], strides = [1, 1]} : vector<2x256xf32> to vector<2x64xf32>
    %495 = arith.negf %494 : vector<2x64xf32>
    %496 = math.exp %495 : vector<2x64xf32>
    %cst_121 = arith.constant 1.000000e+00 : f32
    %497 = vector.broadcast %cst_121 : f32 to vector<2x64xf32>
    %498 = arith.addf %497, %496 : vector<2x64xf32>
    %499 = arith.divf %497, %498 : vector<2x64xf32>
    %500 = vector.extract_strided_slice %493 {offsets = [0, 64], sizes = [2, 64], strides = [1, 1]} : vector<2x256xf32> to vector<2x64xf32>
    %501 = arith.negf %500 : vector<2x64xf32>
    %502 = math.exp %501 : vector<2x64xf32>
    %cst_122 = arith.constant 1.000000e+00 : f32
    %503 = vector.broadcast %cst_122 : f32 to vector<2x64xf32>
    %504 = arith.addf %503, %502 : vector<2x64xf32>
    %505 = arith.divf %503, %504 : vector<2x64xf32>
    %506 = vector.extract_strided_slice %493 {offsets = [0, 128], sizes = [2, 64], strides = [1, 1]} : vector<2x256xf32> to vector<2x64xf32>
    %507 = math.tanh %506 : vector<2x64xf32>
    %508 = vector.extract_strided_slice %493 {offsets = [0, 192], sizes = [2, 64], strides = [1, 1]} : vector<2x256xf32> to vector<2x64xf32>
    %509 = arith.negf %508 : vector<2x64xf32>
    %510 = math.exp %509 : vector<2x64xf32>
    %cst_123 = arith.constant 1.000000e+00 : f32
    %511 = vector.broadcast %cst_123 : f32 to vector<2x64xf32>
    %512 = arith.addf %511, %510 : vector<2x64xf32>
    %513 = arith.divf %511, %512 : vector<2x64xf32>
    %514 = arith.mulf %505, %490 : vector<2x64xf32>
    %515 = arith.mulf %499, %507 : vector<2x64xf32>
    %516 = arith.addf %514, %515 : vector<2x64xf32>
    %517 = math.tanh %516 : vector<2x64xf32>
    %518 = arith.mulf %513, %517 : vector<2x64xf32>
    %c0_124 = arith.constant 0 : index
    %c0_125 = arith.constant 0 : index
    %519 = vector.load %arg14[%c0_124, %c0_125] : memref<16x64xf32, #tpu.memory_space<vmem>>, vector<2x64xf32>
    tpu.vector_store %arg14[%c0_124, %c0_125], %518 {strides = array<i32>} : memref<16x64xf32, #tpu.memory_space<vmem>>, vector<2x64xf32>,
    %520 = vector.extract_strided_slice %487 {offsets = [2, 0], sizes = [2, 256], strides = [1, 1]} : vector<16x256xf32> to vector<2x256xf32>
    %cst_126 = arith.constant dense<0.000000e+00> : vector<2x256xf32>
    %521 = tpu.matmul %518, %488, %cst_126 {dimension_numbers = #tpu.dot_dimension_numbers<[1], [0], [0], [1], [0, 0, 1, 1], [], []>} : vector<2x64xf32>, vector<64x256xf32>, vector<2x256xf32> -> vector<2x256xf32>
    %522 = arith.addf %520, %521 : vector<2x256xf32>
    %523 = vector.extract_strided_slice %522 {offsets = [0, 0], sizes = [2, 64], strides = [1, 1]} : vector<2x256xf32> to vector<2x64xf32>
    %524 = arith.negf %523 : vector<2x64xf32>
    %525 = math.exp %524 : vector<2x64xf32>
    %cst_127 = arith.constant 1.000000e+00 : f32
    %526 = vector.broadcast %cst_127 : f32 to vector<2x64xf32>
    %527 = arith.addf %526, %525 : vector<2x64xf32>
    %528 = arith.divf %526, %527 : vector<2x64xf32>
    %529 = vector.extract_strided_slice %522 {offsets = [0, 64], sizes = [2, 64], strides = [1, 1]} : vector<2x256xf32> to vector<2x64xf32>
    %530 = arith.negf %529 : vector<2x64xf32>
    %531 = math.exp %530 : vector<2x64xf32>
    %cst_128 = arith.constant 1.000000e+00 : f32
    %532 = vector.broadcast %cst_128 : f32 to vector<2x64xf32>
    %533 = arith.addf %532, %531 : vector<2x64xf32>
    %534 = arith.divf %532, %533 : vector<2x64xf32>
    %535 = vector.extract_strided_slice %522 {offsets = [0, 128], sizes = [2, 64], strides = [1, 1]} : vector<2x256xf32> to vector<2x64xf32>
    %536 = math.tanh %535 : vector<2x64xf32>
    %537 = vector.extract_strided_slice %522 {offsets = [0, 192], sizes = [2, 64], strides = [1, 1]} : vector<2x256xf32> to vector<2x64xf32>
    %538 = arith.negf %537 : vector<2x64xf32>
    %539 = math.exp %538 : vector<2x64xf32>
    %cst_129 = arith.constant 1.000000e+00 : f32
    %540 = vector.broadcast %cst_129 : f32 to vector<2x64xf32>
    %541 = arith.addf %540, %539 : vector<2x64xf32>
    %542 = arith.divf %540, %541 : vector<2x64xf32>
    %543 = arith.mulf %534, %516 : vector<2x64xf32>
    %544 = arith.mulf %528, %536 : vector<2x64xf32>
    %545 = arith.addf %543, %544 : vector<2x64xf32>
    %546 = math.tanh %545 : vector<2x64xf32>
    %547 = arith.mulf %542, %546 : vector<2x64xf32>
    %c2_130 = arith.constant 2 : index
    %c0_131 = arith.constant 0 : index
    %548 = vector.load %arg14[%c2_130, %c0_131] : memref<16x64xf32, #tpu.memory_space<vmem>>, vector<2x64xf32>
    tpu.vector_store %arg14[%c2_130, %c0_131], %547 {strides = array<i32>} : memref<16x64xf32, #tpu.memory_space<vmem>>, vector<2x64xf32>,
    %549 = vector.extract_strided_slice %487 {offsets = [4, 0], sizes = [2, 256], strides = [1, 1]} : vector<16x256xf32> to vector<2x256xf32>
    %cst_132 = arith.constant dense<0.000000e+00> : vector<2x256xf32>
    %550 = tpu.matmul %547, %488, %cst_132 {dimension_numbers = #tpu.dot_dimension_numbers<[1], [0], [0], [1], [0, 0, 1, 1], [], []>} : vector<2x64xf32>, vector<64x256xf32>, vector<2x256xf32> -> vector<2x256xf32>
    %551 = arith.addf %549, %550 : vector<2x256xf32>
    %552 = vector.extract_strided_slice %551 {offsets = [0, 0], sizes = [2, 64], strides = [1, 1]} : vector<2x256xf32> to vector<2x64xf32>
    %553 = arith.negf %552 : vector<2x64xf32>
    %554 = math.exp %553 : vector<2x64xf32>
    %cst_133 = arith.constant 1.000000e+00 : f32
    %555 = vector.broadcast %cst_133 : f32 to vector<2x64xf32>
    %556 = arith.addf %555, %554 : vector<2x64xf32>
    %557 = arith.divf %555, %556 : vector<2x64xf32>
    %558 = vector.extract_strided_slice %551 {offsets = [0, 64], sizes = [2, 64], strides = [1, 1]} : vector<2x256xf32> to vector<2x64xf32>
    %559 = arith.negf %558 : vector<2x64xf32>
    %560 = math.exp %559 : vector<2x64xf32>
    %cst_134 = arith.constant 1.000000e+00 : f32
    %561 = vector.broadcast %cst_134 : f32 to vector<2x64xf32>
    %562 = arith.addf %561, %560 : vector<2x64xf32>
    %563 = arith.divf %561, %562 : vector<2x64xf32>
    %564 = vector.extract_strided_slice %551 {offsets = [0, 128], sizes = [2, 64], strides = [1, 1]} : vector<2x256xf32> to vector<2x64xf32>
    %565 = math.tanh %564 : vector<2x64xf32>
    %566 = vector.extract_strided_slice %551 {offsets = [0, 192], sizes = [2, 64], strides = [1, 1]} : vector<2x256xf32> to vector<2x64xf32>
    %567 = arith.negf %566 : vector<2x64xf32>
    %568 = math.exp %567 : vector<2x64xf32>
    %cst_135 = arith.constant 1.000000e+00 : f32
    %569 = vector.broadcast %cst_135 : f32 to vector<2x64xf32>
    %570 = arith.addf %569, %568 : vector<2x64xf32>
    %571 = arith.divf %569, %570 : vector<2x64xf32>
    %572 = arith.mulf %563, %545 : vector<2x64xf32>
    %573 = arith.mulf %557, %565 : vector<2x64xf32>
    %574 = arith.addf %572, %573 : vector<2x64xf32>
    %575 = math.tanh %574 : vector<2x64xf32>
    %576 = arith.mulf %571, %575 : vector<2x64xf32>
    %c4_136 = arith.constant 4 : index
    %c0_137 = arith.constant 0 : index
    %577 = vector.load %arg14[%c4_136, %c0_137] : memref<16x64xf32, #tpu.memory_space<vmem>>, vector<2x64xf32>
    tpu.vector_store %arg14[%c4_136, %c0_137], %576 {strides = array<i32>} : memref<16x64xf32, #tpu.memory_space<vmem>>, vector<2x64xf32>,
    %578 = vector.extract_strided_slice %487 {offsets = [6, 0], sizes = [2, 256], strides = [1, 1]} : vector<16x256xf32> to vector<2x256xf32>
    %cst_138 = arith.constant dense<0.000000e+00> : vector<2x256xf32>
    %579 = tpu.matmul %576, %488, %cst_138 {dimension_numbers = #tpu.dot_dimension_numbers<[1], [0], [0], [1], [0, 0, 1, 1], [], []>} : vector<2x64xf32>, vector<64x256xf32>, vector<2x256xf32> -> vector<2x256xf32>
    %580 = arith.addf %578, %579 : vector<2x256xf32>
    %581 = vector.extract_strided_slice %580 {offsets = [0, 0], sizes = [2, 64], strides = [1, 1]} : vector<2x256xf32> to vector<2x64xf32>
    %582 = arith.negf %581 : vector<2x64xf32>
    %583 = math.exp %582 : vector<2x64xf32>
    %cst_139 = arith.constant 1.000000e+00 : f32
    %584 = vector.broadcast %cst_139 : f32 to vector<2x64xf32>
    %585 = arith.addf %584, %583 : vector<2x64xf32>
    %586 = arith.divf %584, %585 : vector<2x64xf32>
    %587 = vector.extract_strided_slice %580 {offsets = [0, 64], sizes = [2, 64], strides = [1, 1]} : vector<2x256xf32> to vector<2x64xf32>
    %588 = arith.negf %587 : vector<2x64xf32>
    %589 = math.exp %588 : vector<2x64xf32>
    %cst_140 = arith.constant 1.000000e+00 : f32
    %590 = vector.broadcast %cst_140 : f32 to vector<2x64xf32>
    %591 = arith.addf %590, %589 : vector<2x64xf32>
    %592 = arith.divf %590, %591 : vector<2x64xf32>
    %593 = vector.extract_strided_slice %580 {offsets = [0, 128], sizes = [2, 64], strides = [1, 1]} : vector<2x256xf32> to vector<2x64xf32>
    %594 = math.tanh %593 : vector<2x64xf32>
    %595 = vector.extract_strided_slice %580 {offsets = [0, 192], sizes = [2, 64], strides = [1, 1]} : vector<2x256xf32> to vector<2x64xf32>
    %596 = arith.negf %595 : vector<2x64xf32>
    %597 = math.exp %596 : vector<2x64xf32>
    %cst_141 = arith.constant 1.000000e+00 : f32
    %598 = vector.broadcast %cst_141 : f32 to vector<2x64xf32>
    %599 = arith.addf %598, %597 : vector<2x64xf32>
    %600 = arith.divf %598, %599 : vector<2x64xf32>
    %601 = arith.mulf %592, %574 : vector<2x64xf32>
    %602 = arith.mulf %586, %594 : vector<2x64xf32>
    %603 = arith.addf %601, %602 : vector<2x64xf32>
    %604 = math.tanh %603 : vector<2x64xf32>
    %605 = arith.mulf %600, %604 : vector<2x64xf32>
    %c6_142 = arith.constant 6 : index
    %c0_143 = arith.constant 0 : index
    %606 = vector.load %arg14[%c6_142, %c0_143] : memref<16x64xf32, #tpu.memory_space<vmem>>, vector<2x64xf32>
    tpu.vector_store %arg14[%c6_142, %c0_143], %605 {strides = array<i32>} : memref<16x64xf32, #tpu.memory_space<vmem>>, vector<2x64xf32>,
    %607 = vector.extract_strided_slice %487 {offsets = [8, 0], sizes = [2, 256], strides = [1, 1]} : vector<16x256xf32> to vector<2x256xf32>
    %cst_144 = arith.constant dense<0.000000e+00> : vector<2x256xf32>
    %608 = tpu.matmul %605, %488, %cst_144 {dimension_numbers = #tpu.dot_dimension_numbers<[1], [0], [0], [1], [0, 0, 1, 1], [], []>} : vector<2x64xf32>, vector<64x256xf32>, vector<2x256xf32> -> vector<2x256xf32>
    %609 = arith.addf %607, %608 : vector<2x256xf32>
    %610 = vector.extract_strided_slice %609 {offsets = [0, 0], sizes = [2, 64], strides = [1, 1]} : vector<2x256xf32> to vector<2x64xf32>
    %611 = arith.negf %610 : vector<2x64xf32>
    %612 = math.exp %611 : vector<2x64xf32>
    %cst_145 = arith.constant 1.000000e+00 : f32
    %613 = vector.broadcast %cst_145 : f32 to vector<2x64xf32>
    %614 = arith.addf %613, %612 : vector<2x64xf32>
    %615 = arith.divf %613, %614 : vector<2x64xf32>
    %616 = vector.extract_strided_slice %609 {offsets = [0, 64], sizes = [2, 64], strides = [1, 1]} : vector<2x256xf32> to vector<2x64xf32>
    %617 = arith.negf %616 : vector<2x64xf32>
    %618 = math.exp %617 : vector<2x64xf32>
    %cst_146 = arith.constant 1.000000e+00 : f32
    %619 = vector.broadcast %cst_146 : f32 to vector<2x64xf32>
    %620 = arith.addf %619, %618 : vector<2x64xf32>
    %621 = arith.divf %619, %620 : vector<2x64xf32>
    %622 = vector.extract_strided_slice %609 {offsets = [0, 128], sizes = [2, 64], strides = [1, 1]} : vector<2x256xf32> to vector<2x64xf32>
    %623 = math.tanh %622 : vector<2x64xf32>
    %624 = vector.extract_strided_slice %609 {offsets = [0, 192], sizes = [2, 64], strides = [1, 1]} : vector<2x256xf32> to vector<2x64xf32>
    %625 = arith.negf %624 : vector<2x64xf32>
    %626 = math.exp %625 : vector<2x64xf32>
    %cst_147 = arith.constant 1.000000e+00 : f32
    %627 = vector.broadcast %cst_147 : f32 to vector<2x64xf32>
    %628 = arith.addf %627, %626 : vector<2x64xf32>
    %629 = arith.divf %627, %628 : vector<2x64xf32>
    %630 = arith.mulf %621, %603 : vector<2x64xf32>
    %631 = arith.mulf %615, %623 : vector<2x64xf32>
    %632 = arith.addf %630, %631 : vector<2x64xf32>
    %633 = math.tanh %632 : vector<2x64xf32>
    %634 = arith.mulf %629, %633 : vector<2x64xf32>
    %c8_148 = arith.constant 8 : index
    %c0_149 = arith.constant 0 : index
    %635 = vector.load %arg14[%c8_148, %c0_149] : memref<16x64xf32, #tpu.memory_space<vmem>>, vector<2x64xf32>
    tpu.vector_store %arg14[%c8_148, %c0_149], %634 {strides = array<i32>} : memref<16x64xf32, #tpu.memory_space<vmem>>, vector<2x64xf32>,
    %636 = vector.extract_strided_slice %487 {offsets = [10, 0], sizes = [2, 256], strides = [1, 1]} : vector<16x256xf32> to vector<2x256xf32>
    %cst_150 = arith.constant dense<0.000000e+00> : vector<2x256xf32>
    %637 = tpu.matmul %634, %488, %cst_150 {dimension_numbers = #tpu.dot_dimension_numbers<[1], [0], [0], [1], [0, 0, 1, 1], [], []>} : vector<2x64xf32>, vector<64x256xf32>, vector<2x256xf32> -> vector<2x256xf32>
    %638 = arith.addf %636, %637 : vector<2x256xf32>
    %639 = vector.extract_strided_slice %638 {offsets = [0, 0], sizes = [2, 64], strides = [1, 1]} : vector<2x256xf32> to vector<2x64xf32>
    %640 = arith.negf %639 : vector<2x64xf32>
    %641 = math.exp %640 : vector<2x64xf32>
    %cst_151 = arith.constant 1.000000e+00 : f32
    %642 = vector.broadcast %cst_151 : f32 to vector<2x64xf32>
    %643 = arith.addf %642, %641 : vector<2x64xf32>
    %644 = arith.divf %642, %643 : vector<2x64xf32>
    %645 = vector.extract_strided_slice %638 {offsets = [0, 64], sizes = [2, 64], strides = [1, 1]} : vector<2x256xf32> to vector<2x64xf32>
    %646 = arith.negf %645 : vector<2x64xf32>
    %647 = math.exp %646 : vector<2x64xf32>
    %cst_152 = arith.constant 1.000000e+00 : f32
    %648 = vector.broadcast %cst_152 : f32 to vector<2x64xf32>
    %649 = arith.addf %648, %647 : vector<2x64xf32>
    %650 = arith.divf %648, %649 : vector<2x64xf32>
    %651 = vector.extract_strided_slice %638 {offsets = [0, 128], sizes = [2, 64], strides = [1, 1]} : vector<2x256xf32> to vector<2x64xf32>
    %652 = math.tanh %651 : vector<2x64xf32>
    %653 = vector.extract_strided_slice %638 {offsets = [0, 192], sizes = [2, 64], strides = [1, 1]} : vector<2x256xf32> to vector<2x64xf32>
    %654 = arith.negf %653 : vector<2x64xf32>
    %655 = math.exp %654 : vector<2x64xf32>
    %cst_153 = arith.constant 1.000000e+00 : f32
    %656 = vector.broadcast %cst_153 : f32 to vector<2x64xf32>
    %657 = arith.addf %656, %655 : vector<2x64xf32>
    %658 = arith.divf %656, %657 : vector<2x64xf32>
    %659 = arith.mulf %650, %632 : vector<2x64xf32>
    %660 = arith.mulf %644, %652 : vector<2x64xf32>
    %661 = arith.addf %659, %660 : vector<2x64xf32>
    %662 = math.tanh %661 : vector<2x64xf32>
    %663 = arith.mulf %658, %662 : vector<2x64xf32>
    %c10_154 = arith.constant 10 : index
    %c0_155 = arith.constant 0 : index
    %664 = vector.load %arg14[%c10_154, %c0_155] : memref<16x64xf32, #tpu.memory_space<vmem>>, vector<2x64xf32>
    tpu.vector_store %arg14[%c10_154, %c0_155], %663 {strides = array<i32>} : memref<16x64xf32, #tpu.memory_space<vmem>>, vector<2x64xf32>,
    %665 = vector.extract_strided_slice %487 {offsets = [12, 0], sizes = [2, 256], strides = [1, 1]} : vector<16x256xf32> to vector<2x256xf32>
    %cst_156 = arith.constant dense<0.000000e+00> : vector<2x256xf32>
    %666 = tpu.matmul %663, %488, %cst_156 {dimension_numbers = #tpu.dot_dimension_numbers<[1], [0], [0], [1], [0, 0, 1, 1], [], []>} : vector<2x64xf32>, vector<64x256xf32>, vector<2x256xf32> -> vector<2x256xf32>
    %667 = arith.addf %665, %666 : vector<2x256xf32>
    %668 = vector.extract_strided_slice %667 {offsets = [0, 0], sizes = [2, 64], strides = [1, 1]} : vector<2x256xf32> to vector<2x64xf32>
    %669 = arith.negf %668 : vector<2x64xf32>
    %670 = math.exp %669 : vector<2x64xf32>
    %cst_157 = arith.constant 1.000000e+00 : f32
    %671 = vector.broadcast %cst_157 : f32 to vector<2x64xf32>
    %672 = arith.addf %671, %670 : vector<2x64xf32>
    %673 = arith.divf %671, %672 : vector<2x64xf32>
    %674 = vector.extract_strided_slice %667 {offsets = [0, 64], sizes = [2, 64], strides = [1, 1]} : vector<2x256xf32> to vector<2x64xf32>
    %675 = arith.negf %674 : vector<2x64xf32>
    %676 = math.exp %675 : vector<2x64xf32>
    %cst_158 = arith.constant 1.000000e+00 : f32
    %677 = vector.broadcast %cst_158 : f32 to vector<2x64xf32>
    %678 = arith.addf %677, %676 : vector<2x64xf32>
    %679 = arith.divf %677, %678 : vector<2x64xf32>
    %680 = vector.extract_strided_slice %667 {offsets = [0, 128], sizes = [2, 64], strides = [1, 1]} : vector<2x256xf32> to vector<2x64xf32>
    %681 = math.tanh %680 : vector<2x64xf32>
    %682 = vector.extract_strided_slice %667 {offsets = [0, 192], sizes = [2, 64], strides = [1, 1]} : vector<2x256xf32> to vector<2x64xf32>
    %683 = arith.negf %682 : vector<2x64xf32>
    %684 = math.exp %683 : vector<2x64xf32>
    %cst_159 = arith.constant 1.000000e+00 : f32
    %685 = vector.broadcast %cst_159 : f32 to vector<2x64xf32>
    %686 = arith.addf %685, %684 : vector<2x64xf32>
    %687 = arith.divf %685, %686 : vector<2x64xf32>
    %688 = arith.mulf %679, %661 : vector<2x64xf32>
    %689 = arith.mulf %673, %681 : vector<2x64xf32>
    %690 = arith.addf %688, %689 : vector<2x64xf32>
    %691 = math.tanh %690 : vector<2x64xf32>
    %692 = arith.mulf %687, %691 : vector<2x64xf32>
    %c12_160 = arith.constant 12 : index
    %c0_161 = arith.constant 0 : index
    %693 = vector.load %arg14[%c12_160, %c0_161] : memref<16x64xf32, #tpu.memory_space<vmem>>, vector<2x64xf32>
    tpu.vector_store %arg14[%c12_160, %c0_161], %692 {strides = array<i32>} : memref<16x64xf32, #tpu.memory_space<vmem>>, vector<2x64xf32>,
    %694 = vector.extract_strided_slice %487 {offsets = [14, 0], sizes = [2, 256], strides = [1, 1]} : vector<16x256xf32> to vector<2x256xf32>
    %cst_162 = arith.constant dense<0.000000e+00> : vector<2x256xf32>
    %695 = tpu.matmul %692, %488, %cst_162 {dimension_numbers = #tpu.dot_dimension_numbers<[1], [0], [0], [1], [0, 0, 1, 1], [], []>} : vector<2x64xf32>, vector<64x256xf32>, vector<2x256xf32> -> vector<2x256xf32>
    %696 = arith.addf %694, %695 : vector<2x256xf32>
    %697 = vector.extract_strided_slice %696 {offsets = [0, 0], sizes = [2, 64], strides = [1, 1]} : vector<2x256xf32> to vector<2x64xf32>
    %698 = arith.negf %697 : vector<2x64xf32>
    %699 = math.exp %698 : vector<2x64xf32>
    %cst_163 = arith.constant 1.000000e+00 : f32
    %700 = vector.broadcast %cst_163 : f32 to vector<2x64xf32>
    %701 = arith.addf %700, %699 : vector<2x64xf32>
    %702 = arith.divf %700, %701 : vector<2x64xf32>
    %703 = vector.extract_strided_slice %696 {offsets = [0, 64], sizes = [2, 64], strides = [1, 1]} : vector<2x256xf32> to vector<2x64xf32>
    %704 = arith.negf %703 : vector<2x64xf32>
    %705 = math.exp %704 : vector<2x64xf32>
    %cst_164 = arith.constant 1.000000e+00 : f32
    %706 = vector.broadcast %cst_164 : f32 to vector<2x64xf32>
    %707 = arith.addf %706, %705 : vector<2x64xf32>
    %708 = arith.divf %706, %707 : vector<2x64xf32>
    %709 = vector.extract_strided_slice %696 {offsets = [0, 128], sizes = [2, 64], strides = [1, 1]} : vector<2x256xf32> to vector<2x64xf32>
    %710 = math.tanh %709 : vector<2x64xf32>
    %711 = vector.extract_strided_slice %696 {offsets = [0, 192], sizes = [2, 64], strides = [1, 1]} : vector<2x256xf32> to vector<2x64xf32>
    %712 = arith.negf %711 : vector<2x64xf32>
    %713 = math.exp %712 : vector<2x64xf32>
    %cst_165 = arith.constant 1.000000e+00 : f32
    %714 = vector.broadcast %cst_165 : f32 to vector<2x64xf32>
    %715 = arith.addf %714, %713 : vector<2x64xf32>
    %716 = arith.divf %714, %715 : vector<2x64xf32>
    %717 = arith.mulf %708, %690 : vector<2x64xf32>
    %718 = arith.mulf %702, %710 : vector<2x64xf32>
    %719 = arith.addf %717, %718 : vector<2x64xf32>
    %720 = math.tanh %719 : vector<2x64xf32>
    %721 = arith.mulf %716, %720 : vector<2x64xf32>
    %c14_166 = arith.constant 14 : index
    %c0_167 = arith.constant 0 : index
    %722 = vector.load %arg14[%c14_166, %c0_167] : memref<16x64xf32, #tpu.memory_space<vmem>>, vector<2x64xf32>
    tpu.vector_store %arg14[%c14_166, %c0_167], %721 {strides = array<i32>} : memref<16x64xf32, #tpu.memory_space<vmem>>, vector<2x64xf32>,
    %c0_168 = arith.constant 0 : index
    %c0_169 = arith.constant 0 : index
    %723 = vector.load %arg14[%c0_168, %c0_169] : memref<16x64xf32, #tpu.memory_space<vmem>>, vector<16x64xf32>
    %c0_170 = arith.constant 0 : index
    %c0_171 = arith.constant 0 : index
    %724 = vector.load %arg10[%c0_170, %c0_171] : memref<64x128xf32, #tpu.memory_space<vmem>>, vector<64x128xf32>
    %cst_172 = arith.constant dense<0.000000e+00> : vector<16x128xf32>
    %725 = tpu.matmul %723, %724, %cst_172 {dimension_numbers = #tpu.dot_dimension_numbers<[1], [0], [0], [1], [0, 0, 1, 1], [], []>} : vector<16x64xf32>, vector<64x128xf32>, vector<16x128xf32> -> vector<16x128xf32>
    %c0_173 = arith.constant 0 : index
    %c0_174 = arith.constant 0 : index
    %726 = vector.load %arg12[%c0_173, %c0_174] : memref<1x128xf32, #tpu.memory_space<vmem>>, vector<1x128xf32>
    %727 = vector.broadcast %726 : vector<1x128xf32> to vector<16x128xf32>
    %728 = arith.addf %725, %727 : vector<16x128xf32>
    %c0_175 = arith.constant 0 : index
    %c0_176 = arith.constant 0 : index
    %729 = vector.load %arg11[%c0_175, %c0_176] : memref<32x128xf32, #tpu.memory_space<vmem>>, vector<32x128xf32>
    %cst_177 = arith.constant 0.000000e+00 : f32
    %730 = vector.broadcast %cst_177 : f32 to vector<2x32xf32>
    %cst_178 = arith.constant 0.000000e+00 : f32
    %731 = vector.broadcast %cst_178 : f32 to vector<2x32xf32>
    %732 = vector.extract_strided_slice %728 {offsets = [0, 0], sizes = [2, 128], strides = [1, 1]} : vector<16x128xf32> to vector<2x128xf32>
    %cst_179 = arith.constant dense<0.000000e+00> : vector<2x128xf32>
    %733 = tpu.matmul %730, %729, %cst_179 {dimension_numbers = #tpu.dot_dimension_numbers<[1], [0], [0], [1], [0, 0, 1, 1], [], []>} : vector<2x32xf32>, vector<32x128xf32>, vector<2x128xf32> -> vector<2x128xf32>
    %734 = arith.addf %732, %733 : vector<2x128xf32>
    %735 = vector.extract_strided_slice %734 {offsets = [0, 0], sizes = [2, 32], strides = [1, 1]} : vector<2x128xf32> to vector<2x32xf32>
    %736 = arith.negf %735 : vector<2x32xf32>
    %737 = math.exp %736 : vector<2x32xf32>
    %cst_180 = arith.constant 1.000000e+00 : f32
    %738 = vector.broadcast %cst_180 : f32 to vector<2x32xf32>
    %739 = arith.addf %738, %737 : vector<2x32xf32>
    %740 = arith.divf %738, %739 : vector<2x32xf32>
    %741 = vector.extract_strided_slice %734 {offsets = [0, 32], sizes = [2, 32], strides = [1, 1]} : vector<2x128xf32> to vector<2x32xf32>
    %742 = arith.negf %741 : vector<2x32xf32>
    %743 = math.exp %742 : vector<2x32xf32>
    %cst_181 = arith.constant 1.000000e+00 : f32
    %744 = vector.broadcast %cst_181 : f32 to vector<2x32xf32>
    %745 = arith.addf %744, %743 : vector<2x32xf32>
    %746 = arith.divf %744, %745 : vector<2x32xf32>
    %747 = vector.extract_strided_slice %734 {offsets = [0, 64], sizes = [2, 32], strides = [1, 1]} : vector<2x128xf32> to vector<2x32xf32>
    %748 = math.tanh %747 : vector<2x32xf32>
    %749 = vector.extract_strided_slice %734 {offsets = [0, 96], sizes = [2, 32], strides = [1, 1]} : vector<2x128xf32> to vector<2x32xf32>
    %750 = arith.negf %749 : vector<2x32xf32>
    %751 = math.exp %750 : vector<2x32xf32>
    %cst_182 = arith.constant 1.000000e+00 : f32
    %752 = vector.broadcast %cst_182 : f32 to vector<2x32xf32>
    %753 = arith.addf %752, %751 : vector<2x32xf32>
    %754 = arith.divf %752, %753 : vector<2x32xf32>
    %755 = arith.mulf %746, %731 : vector<2x32xf32>
    %756 = arith.mulf %740, %748 : vector<2x32xf32>
    %757 = arith.addf %755, %756 : vector<2x32xf32>
    %758 = math.tanh %757 : vector<2x32xf32>
    %759 = arith.mulf %754, %758 : vector<2x32xf32>
    %760 = vector.extract_strided_slice %728 {offsets = [2, 0], sizes = [2, 128], strides = [1, 1]} : vector<16x128xf32> to vector<2x128xf32>
    %cst_183 = arith.constant dense<0.000000e+00> : vector<2x128xf32>
    %761 = tpu.matmul %759, %729, %cst_183 {dimension_numbers = #tpu.dot_dimension_numbers<[1], [0], [0], [1], [0, 0, 1, 1], [], []>} : vector<2x32xf32>, vector<32x128xf32>, vector<2x128xf32> -> vector<2x128xf32>
    %762 = arith.addf %760, %761 : vector<2x128xf32>
    %763 = vector.extract_strided_slice %762 {offsets = [0, 0], sizes = [2, 32], strides = [1, 1]} : vector<2x128xf32> to vector<2x32xf32>
    %764 = arith.negf %763 : vector<2x32xf32>
    %765 = math.exp %764 : vector<2x32xf32>
    %cst_184 = arith.constant 1.000000e+00 : f32
    %766 = vector.broadcast %cst_184 : f32 to vector<2x32xf32>
    %767 = arith.addf %766, %765 : vector<2x32xf32>
    %768 = arith.divf %766, %767 : vector<2x32xf32>
    %769 = vector.extract_strided_slice %762 {offsets = [0, 32], sizes = [2, 32], strides = [1, 1]} : vector<2x128xf32> to vector<2x32xf32>
    %770 = arith.negf %769 : vector<2x32xf32>
    %771 = math.exp %770 : vector<2x32xf32>
    %cst_185 = arith.constant 1.000000e+00 : f32
    %772 = vector.broadcast %cst_185 : f32 to vector<2x32xf32>
    %773 = arith.addf %772, %771 : vector<2x32xf32>
    %774 = arith.divf %772, %773 : vector<2x32xf32>
    %775 = vector.extract_strided_slice %762 {offsets = [0, 64], sizes = [2, 32], strides = [1, 1]} : vector<2x128xf32> to vector<2x32xf32>
    %776 = math.tanh %775 : vector<2x32xf32>
    %777 = vector.extract_strided_slice %762 {offsets = [0, 96], sizes = [2, 32], strides = [1, 1]} : vector<2x128xf32> to vector<2x32xf32>
    %778 = arith.negf %777 : vector<2x32xf32>
    %779 = math.exp %778 : vector<2x32xf32>
    %cst_186 = arith.constant 1.000000e+00 : f32
    %780 = vector.broadcast %cst_186 : f32 to vector<2x32xf32>
    %781 = arith.addf %780, %779 : vector<2x32xf32>
    %782 = arith.divf %780, %781 : vector<2x32xf32>
    %783 = arith.mulf %774, %757 : vector<2x32xf32>
    %784 = arith.mulf %768, %776 : vector<2x32xf32>
    %785 = arith.addf %783, %784 : vector<2x32xf32>
    %786 = math.tanh %785 : vector<2x32xf32>
    %787 = arith.mulf %782, %786 : vector<2x32xf32>
    %788 = vector.extract_strided_slice %728 {offsets = [4, 0], sizes = [2, 128], strides = [1, 1]} : vector<16x128xf32> to vector<2x128xf32>
    %cst_187 = arith.constant dense<0.000000e+00> : vector<2x128xf32>
    %789 = tpu.matmul %787, %729, %cst_187 {dimension_numbers = #tpu.dot_dimension_numbers<[1], [0], [0], [1], [0, 0, 1, 1], [], []>} : vector<2x32xf32>, vector<32x128xf32>, vector<2x128xf32> -> vector<2x128xf32>
    %790 = arith.addf %788, %789 : vector<2x128xf32>
    %791 = vector.extract_strided_slice %790 {offsets = [0, 0], sizes = [2, 32], strides = [1, 1]} : vector<2x128xf32> to vector<2x32xf32>
    %792 = arith.negf %791 : vector<2x32xf32>
    %793 = math.exp %792 : vector<2x32xf32>
    %cst_188 = arith.constant 1.000000e+00 : f32
    %794 = vector.broadcast %cst_188 : f32 to vector<2x32xf32>
    %795 = arith.addf %794, %793 : vector<2x32xf32>
    %796 = arith.divf %794, %795 : vector<2x32xf32>
    %797 = vector.extract_strided_slice %790 {offsets = [0, 32], sizes = [2, 32], strides = [1, 1]} : vector<2x128xf32> to vector<2x32xf32>
    %798 = arith.negf %797 : vector<2x32xf32>
    %799 = math.exp %798 : vector<2x32xf32>
    %cst_189 = arith.constant 1.000000e+00 : f32
    %800 = vector.broadcast %cst_189 : f32 to vector<2x32xf32>
    %801 = arith.addf %800, %799 : vector<2x32xf32>
    %802 = arith.divf %800, %801 : vector<2x32xf32>
    %803 = vector.extract_strided_slice %790 {offsets = [0, 64], sizes = [2, 32], strides = [1, 1]} : vector<2x128xf32> to vector<2x32xf32>
    %804 = math.tanh %803 : vector<2x32xf32>
    %805 = vector.extract_strided_slice %790 {offsets = [0, 96], sizes = [2, 32], strides = [1, 1]} : vector<2x128xf32> to vector<2x32xf32>
    %806 = arith.negf %805 : vector<2x32xf32>
    %807 = math.exp %806 : vector<2x32xf32>
    %cst_190 = arith.constant 1.000000e+00 : f32
    %808 = vector.broadcast %cst_190 : f32 to vector<2x32xf32>
    %809 = arith.addf %808, %807 : vector<2x32xf32>
    %810 = arith.divf %808, %809 : vector<2x32xf32>
    %811 = arith.mulf %802, %785 : vector<2x32xf32>
    %812 = arith.mulf %796, %804 : vector<2x32xf32>
    %813 = arith.addf %811, %812 : vector<2x32xf32>
    %814 = math.tanh %813 : vector<2x32xf32>
    %815 = arith.mulf %810, %814 : vector<2x32xf32>
    %816 = vector.extract_strided_slice %728 {offsets = [6, 0], sizes = [2, 128], strides = [1, 1]} : vector<16x128xf32> to vector<2x128xf32>
    %cst_191 = arith.constant dense<0.000000e+00> : vector<2x128xf32>
    %817 = tpu.matmul %815, %729, %cst_191 {dimension_numbers = #tpu.dot_dimension_numbers<[1], [0], [0], [1], [0, 0, 1, 1], [], []>} : vector<2x32xf32>, vector<32x128xf32>, vector<2x128xf32> -> vector<2x128xf32>
    %818 = arith.addf %816, %817 : vector<2x128xf32>
    %819 = vector.extract_strided_slice %818 {offsets = [0, 0], sizes = [2, 32], strides = [1, 1]} : vector<2x128xf32> to vector<2x32xf32>
    %820 = arith.negf %819 : vector<2x32xf32>
    %821 = math.exp %820 : vector<2x32xf32>
    %cst_192 = arith.constant 1.000000e+00 : f32
    %822 = vector.broadcast %cst_192 : f32 to vector<2x32xf32>
    %823 = arith.addf %822, %821 : vector<2x32xf32>
    %824 = arith.divf %822, %823 : vector<2x32xf32>
    %825 = vector.extract_strided_slice %818 {offsets = [0, 32], sizes = [2, 32], strides = [1, 1]} : vector<2x128xf32> to vector<2x32xf32>
    %826 = arith.negf %825 : vector<2x32xf32>
    %827 = math.exp %826 : vector<2x32xf32>
    %cst_193 = arith.constant 1.000000e+00 : f32
    %828 = vector.broadcast %cst_193 : f32 to vector<2x32xf32>
    %829 = arith.addf %828, %827 : vector<2x32xf32>
    %830 = arith.divf %828, %829 : vector<2x32xf32>
    %831 = vector.extract_strided_slice %818 {offsets = [0, 64], sizes = [2, 32], strides = [1, 1]} : vector<2x128xf32> to vector<2x32xf32>
    %832 = math.tanh %831 : vector<2x32xf32>
    %833 = vector.extract_strided_slice %818 {offsets = [0, 96], sizes = [2, 32], strides = [1, 1]} : vector<2x128xf32> to vector<2x32xf32>
    %834 = arith.negf %833 : vector<2x32xf32>
    %835 = math.exp %834 : vector<2x32xf32>
    %cst_194 = arith.constant 1.000000e+00 : f32
    %836 = vector.broadcast %cst_194 : f32 to vector<2x32xf32>
    %837 = arith.addf %836, %835 : vector<2x32xf32>
    %838 = arith.divf %836, %837 : vector<2x32xf32>
    %839 = arith.mulf %830, %813 : vector<2x32xf32>
    %840 = arith.mulf %824, %832 : vector<2x32xf32>
    %841 = arith.addf %839, %840 : vector<2x32xf32>
    %842 = math.tanh %841 : vector<2x32xf32>
    %843 = arith.mulf %838, %842 : vector<2x32xf32>
    %844 = vector.extract_strided_slice %728 {offsets = [8, 0], sizes = [2, 128], strides = [1, 1]} : vector<16x128xf32> to vector<2x128xf32>
    %cst_195 = arith.constant dense<0.000000e+00> : vector<2x128xf32>
    %845 = tpu.matmul %843, %729, %cst_195 {dimension_numbers = #tpu.dot_dimension_numbers<[1], [0], [0], [1], [0, 0, 1, 1], [], []>} : vector<2x32xf32>, vector<32x128xf32>, vector<2x128xf32> -> vector<2x128xf32>
    %846 = arith.addf %844, %845 : vector<2x128xf32>
    %847 = vector.extract_strided_slice %846 {offsets = [0, 0], sizes = [2, 32], strides = [1, 1]} : vector<2x128xf32> to vector<2x32xf32>
    %848 = arith.negf %847 : vector<2x32xf32>
    %849 = math.exp %848 : vector<2x32xf32>
    %cst_196 = arith.constant 1.000000e+00 : f32
    %850 = vector.broadcast %cst_196 : f32 to vector<2x32xf32>
    %851 = arith.addf %850, %849 : vector<2x32xf32>
    %852 = arith.divf %850, %851 : vector<2x32xf32>
    %853 = vector.extract_strided_slice %846 {offsets = [0, 32], sizes = [2, 32], strides = [1, 1]} : vector<2x128xf32> to vector<2x32xf32>
    %854 = arith.negf %853 : vector<2x32xf32>
    %855 = math.exp %854 : vector<2x32xf32>
    %cst_197 = arith.constant 1.000000e+00 : f32
    %856 = vector.broadcast %cst_197 : f32 to vector<2x32xf32>
    %857 = arith.addf %856, %855 : vector<2x32xf32>
    %858 = arith.divf %856, %857 : vector<2x32xf32>
    %859 = vector.extract_strided_slice %846 {offsets = [0, 64], sizes = [2, 32], strides = [1, 1]} : vector<2x128xf32> to vector<2x32xf32>
    %860 = math.tanh %859 : vector<2x32xf32>
    %861 = vector.extract_strided_slice %846 {offsets = [0, 96], sizes = [2, 32], strides = [1, 1]} : vector<2x128xf32> to vector<2x32xf32>
    %862 = arith.negf %861 : vector<2x32xf32>
    %863 = math.exp %862 : vector<2x32xf32>
    %cst_198 = arith.constant 1.000000e+00 : f32
    %864 = vector.broadcast %cst_198 : f32 to vector<2x32xf32>
    %865 = arith.addf %864, %863 : vector<2x32xf32>
    %866 = arith.divf %864, %865 : vector<2x32xf32>
    %867 = arith.mulf %858, %841 : vector<2x32xf32>
    %868 = arith.mulf %852, %860 : vector<2x32xf32>
    %869 = arith.addf %867, %868 : vector<2x32xf32>
    %870 = math.tanh %869 : vector<2x32xf32>
    %871 = arith.mulf %866, %870 : vector<2x32xf32>
    %872 = vector.extract_strided_slice %728 {offsets = [10, 0], sizes = [2, 128], strides = [1, 1]} : vector<16x128xf32> to vector<2x128xf32>
    %cst_199 = arith.constant dense<0.000000e+00> : vector<2x128xf32>
    %873 = tpu.matmul %871, %729, %cst_199 {dimension_numbers = #tpu.dot_dimension_numbers<[1], [0], [0], [1], [0, 0, 1, 1], [], []>} : vector<2x32xf32>, vector<32x128xf32>, vector<2x128xf32> -> vector<2x128xf32>
    %874 = arith.addf %872, %873 : vector<2x128xf32>
    %875 = vector.extract_strided_slice %874 {offsets = [0, 0], sizes = [2, 32], strides = [1, 1]} : vector<2x128xf32> to vector<2x32xf32>
    %876 = arith.negf %875 : vector<2x32xf32>
    %877 = math.exp %876 : vector<2x32xf32>
    %cst_200 = arith.constant 1.000000e+00 : f32
    %878 = vector.broadcast %cst_200 : f32 to vector<2x32xf32>
    %879 = arith.addf %878, %877 : vector<2x32xf32>
    %880 = arith.divf %878, %879 : vector<2x32xf32>
    %881 = vector.extract_strided_slice %874 {offsets = [0, 32], sizes = [2, 32], strides = [1, 1]} : vector<2x128xf32> to vector<2x32xf32>
    %882 = arith.negf %881 : vector<2x32xf32>
    %883 = math.exp %882 : vector<2x32xf32>
    %cst_201 = arith.constant 1.000000e+00 : f32
    %884 = vector.broadcast %cst_201 : f32 to vector<2x32xf32>
    %885 = arith.addf %884, %883 : vector<2x32xf32>
    %886 = arith.divf %884, %885 : vector<2x32xf32>
    %887 = vector.extract_strided_slice %874 {offsets = [0, 64], sizes = [2, 32], strides = [1, 1]} : vector<2x128xf32> to vector<2x32xf32>
    %888 = math.tanh %887 : vector<2x32xf32>
    %889 = vector.extract_strided_slice %874 {offsets = [0, 96], sizes = [2, 32], strides = [1, 1]} : vector<2x128xf32> to vector<2x32xf32>
    %890 = arith.negf %889 : vector<2x32xf32>
    %891 = math.exp %890 : vector<2x32xf32>
    %cst_202 = arith.constant 1.000000e+00 : f32
    %892 = vector.broadcast %cst_202 : f32 to vector<2x32xf32>
    %893 = arith.addf %892, %891 : vector<2x32xf32>
    %894 = arith.divf %892, %893 : vector<2x32xf32>
    %895 = arith.mulf %886, %869 : vector<2x32xf32>
    %896 = arith.mulf %880, %888 : vector<2x32xf32>
    %897 = arith.addf %895, %896 : vector<2x32xf32>
    %898 = math.tanh %897 : vector<2x32xf32>
    %899 = arith.mulf %894, %898 : vector<2x32xf32>
    %900 = vector.extract_strided_slice %728 {offsets = [12, 0], sizes = [2, 128], strides = [1, 1]} : vector<16x128xf32> to vector<2x128xf32>
    %cst_203 = arith.constant dense<0.000000e+00> : vector<2x128xf32>
    %901 = tpu.matmul %899, %729, %cst_203 {dimension_numbers = #tpu.dot_dimension_numbers<[1], [0], [0], [1], [0, 0, 1, 1], [], []>} : vector<2x32xf32>, vector<32x128xf32>, vector<2x128xf32> -> vector<2x128xf32>
    %902 = arith.addf %900, %901 : vector<2x128xf32>
    %903 = vector.extract_strided_slice %902 {offsets = [0, 0], sizes = [2, 32], strides = [1, 1]} : vector<2x128xf32> to vector<2x32xf32>
    %904 = arith.negf %903 : vector<2x32xf32>
    %905 = math.exp %904 : vector<2x32xf32>
    %cst_204 = arith.constant 1.000000e+00 : f32
    %906 = vector.broadcast %cst_204 : f32 to vector<2x32xf32>
    %907 = arith.addf %906, %905 : vector<2x32xf32>
    %908 = arith.divf %906, %907 : vector<2x32xf32>
    %909 = vector.extract_strided_slice %902 {offsets = [0, 32], sizes = [2, 32], strides = [1, 1]} : vector<2x128xf32> to vector<2x32xf32>
    %910 = arith.negf %909 : vector<2x32xf32>
    %911 = math.exp %910 : vector<2x32xf32>
    %cst_205 = arith.constant 1.000000e+00 : f32
    %912 = vector.broadcast %cst_205 : f32 to vector<2x32xf32>
    %913 = arith.addf %912, %911 : vector<2x32xf32>
    %914 = arith.divf %912, %913 : vector<2x32xf32>
    %915 = vector.extract_strided_slice %902 {offsets = [0, 64], sizes = [2, 32], strides = [1, 1]} : vector<2x128xf32> to vector<2x32xf32>
    %916 = math.tanh %915 : vector<2x32xf32>
    %917 = vector.extract_strided_slice %902 {offsets = [0, 96], sizes = [2, 32], strides = [1, 1]} : vector<2x128xf32> to vector<2x32xf32>
    %918 = arith.negf %917 : vector<2x32xf32>
    %919 = math.exp %918 : vector<2x32xf32>
    %cst_206 = arith.constant 1.000000e+00 : f32
    %920 = vector.broadcast %cst_206 : f32 to vector<2x32xf32>
    %921 = arith.addf %920, %919 : vector<2x32xf32>
    %922 = arith.divf %920, %921 : vector<2x32xf32>
    %923 = arith.mulf %914, %897 : vector<2x32xf32>
    %924 = arith.mulf %908, %916 : vector<2x32xf32>
    %925 = arith.addf %923, %924 : vector<2x32xf32>
    %926 = math.tanh %925 : vector<2x32xf32>
    %927 = arith.mulf %922, %926 : vector<2x32xf32>
    %928 = vector.extract_strided_slice %728 {offsets = [14, 0], sizes = [2, 128], strides = [1, 1]} : vector<16x128xf32> to vector<2x128xf32>
    %cst_207 = arith.constant dense<0.000000e+00> : vector<2x128xf32>
    %929 = tpu.matmul %927, %729, %cst_207 {dimension_numbers = #tpu.dot_dimension_numbers<[1], [0], [0], [1], [0, 0, 1, 1], [], []>} : vector<2x32xf32>, vector<32x128xf32>, vector<2x128xf32> -> vector<2x128xf32>
    %930 = arith.addf %928, %929 : vector<2x128xf32>
    %931 = vector.extract_strided_slice %930 {offsets = [0, 0], sizes = [2, 32], strides = [1, 1]} : vector<2x128xf32> to vector<2x32xf32>
    %932 = arith.negf %931 : vector<2x32xf32>
    %933 = math.exp %932 : vector<2x32xf32>
    %cst_208 = arith.constant 1.000000e+00 : f32
    %934 = vector.broadcast %cst_208 : f32 to vector<2x32xf32>
    %935 = arith.addf %934, %933 : vector<2x32xf32>
    %936 = arith.divf %934, %935 : vector<2x32xf32>
    %937 = vector.extract_strided_slice %930 {offsets = [0, 32], sizes = [2, 32], strides = [1, 1]} : vector<2x128xf32> to vector<2x32xf32>
    %938 = arith.negf %937 : vector<2x32xf32>
    %939 = math.exp %938 : vector<2x32xf32>
    %cst_209 = arith.constant 1.000000e+00 : f32
    %940 = vector.broadcast %cst_209 : f32 to vector<2x32xf32>
    %941 = arith.addf %940, %939 : vector<2x32xf32>
    %942 = arith.divf %940, %941 : vector<2x32xf32>
    %943 = vector.extract_strided_slice %930 {offsets = [0, 64], sizes = [2, 32], strides = [1, 1]} : vector<2x128xf32> to vector<2x32xf32>
    %944 = math.tanh %943 : vector<2x32xf32>
    %945 = vector.extract_strided_slice %930 {offsets = [0, 96], sizes = [2, 32], strides = [1, 1]} : vector<2x128xf32> to vector<2x32xf32>
    %946 = arith.negf %945 : vector<2x32xf32>
    %947 = math.exp %946 : vector<2x32xf32>
    %cst_210 = arith.constant 1.000000e+00 : f32
    %948 = vector.broadcast %cst_210 : f32 to vector<2x32xf32>
    %949 = arith.addf %948, %947 : vector<2x32xf32>
    %950 = arith.divf %948, %949 : vector<2x32xf32>
    %951 = arith.mulf %942, %925 : vector<2x32xf32>
    %952 = arith.mulf %936, %944 : vector<2x32xf32>
    %953 = arith.addf %951, %952 : vector<2x32xf32>
    %954 = math.tanh %953 : vector<2x32xf32>
    %955 = arith.mulf %950, %954 : vector<2x32xf32>
    %c0_211 = arith.constant 0 : index
    %c0_212 = arith.constant 0 : index
    %956 = vector.load %arg13[%c0_211, %c0_212] : memref<2x32xf32, #tpu.memory_space<vmem>>, vector<2x32xf32>
    tpu.vector_store %arg13[%c0_211, %c0_212], %955 {strides = array<i32>} : memref<2x32xf32, #tpu.memory_space<vmem>>, vector<2x32xf32>,
    return
  }
}

</mosaic_0001>

<llo_original>
// kernel: encoder_forward.1
$region0: #{encoder_forward.1}
  #allocation0 [shape = 'u32[]', space=smem, size = 0x4, offset = 0x4, fixed_abs, tag = 'smem constant byte address 0x4 - core index']
  #allocation1 [shape = 'u32[72,128]{1,0:T(1,128)}', space=vmem, size = 0x9000, scoped, tag = 'internal scratch']
  #allocation2 [shape = 'f32[16,64]{1,0:T(8,128)}', space=vmem, size = 0x2000, scoped, tag = 'scratch operand']
  %s0 = inlined_call_operand.vmem [shape: f32[16,4], index: 0, kind: input, shape index: {}]
  %s1 = inlined_call_operand.hbm [shape: f32[4,256], index: 1, kind: input, shape index: {}]
  %s2 = inlined_call_operand.hbm [shape: f32[64,256], index: 2, kind: input, shape index: {}]
  %s3 = inlined_call_operand.vmem [shape: f32[1,256], index: 3, kind: input, shape index: {}]
  %s4 = inlined_call_operand.hbm [shape: f32[64,256], index: 4, kind: input, shape index: {}]
  %s5 = inlined_call_operand.hbm [shape: f32[64,256], index: 5, kind: input, shape index: {}]
  %s6 = inlined_call_operand.vmem [shape: f32[1,256], index: 6, kind: input, shape index: {}]
  %s7 = inlined_call_operand.hbm [shape: f32[64,256], index: 7, kind: input, shape index: {}]
  %s8 = inlined_call_operand.hbm [shape: f32[64,256], index: 8, kind: input, shape index: {}]
  %s9 = inlined_call_operand.hbm [shape: f32[1,256], index: 9, kind: input, shape index: {}]
  %s10 = inlined_call_operand.hbm [shape: f32[64,128], index: 10, kind: input, shape index: {}]
  %s11 = inlined_call_operand.vmem [shape: f32[32,128], index: 11, kind: input, shape index: {}]
  %s12 = inlined_call_operand.vmem [shape: f32[1,128], index: 12, kind: input, shape index: {}]
  %s13 = inlined_call_operand.hbm [shape: f32[2,32], index: 13, kind: output, shape index: {}]
  %s14 = sld [smem:[#allocation0]]
  $region94: #{encoder_forward.1} parent=0
    _
  %s16 = ssub.s32 1, %s14
  %s17 = scalar_select 0, %s16, %s14
  $region1: #{encoder_forward.1} parent=0
    #allocation3 [shape = 'u8[4096]{0}', space=vmem, size = 0x1000, scoped, tag = 'input window, operand 1, single buffered']
    #allocation4 [shape = 's32[1]{0}', space=sflag, size = 0x4, scoped, tag = 'scoped memory for encoder_forward.1']
    #allocation5 [shape = 's32[1]{0}', space=sflag, size = 0x4, scoped, tag = 'scoped memory for encoder_forward.1']
    #allocation6 [shape = 'u8[65536]{0}', space=vmem, size = 0x10000, scoped, tag = 'input window, operand 2, single buffered']
    #allocation7 [shape = 's32[1]{0}', space=sflag, size = 0x4, scoped, tag = 'scoped memory for encoder_forward.1']
    #allocation8 [shape = 'u8[65536]{0}', space=vmem, size = 0x10000, scoped, tag = 'input window, operand 4, single buffered']
    #allocation9 [shape = 'u8[65536]{0}', space=vmem, size = 0x10000, scoped, tag = 'input window, operand 5, single buffered']
    #allocation10 [shape = 's32[1]{0}', space=sflag, size = 0x4, scoped, tag = 'scoped memory for encoder_forward.1']
    #allocation11 [shape = 'u8[65536]{0}', space=vmem, size = 0x10000, scoped, tag = 'input window, operand 7, single buffered']
    #allocation12 [shape = 'u8[65536]{0}', space=vmem, size = 0x10000, scoped, tag = 'input window, operand 8, single buffered']
    #allocation13 [shape = 's32[1]{0}', space=sflag, size = 0x4, scoped, tag = 'scoped memory for encoder_forward.1']
    #allocation14 [shape = 'u8[1024]{0}', space=vmem, size = 0x400, scoped, tag = 'input window, operand 9, single buffered']
    #allocation15 [shape = 'u8[32768]{0}', space=vmem, size = 0x8000, scoped, tag = 'input window, operand 10, single buffered']
    #allocation16 [shape = 's32[1]{0}', space=sflag, size = 0x4, scoped, tag = 'scoped memory for encoder_forward.1']
    #allocation17 [shape = 'u8[1024]{0}', space=vmem, size = 0x400, scoped, tag = 'output window, operand 0, single buffered']
    %18 = vsyncpa [#allocation4], 0
    %19 = vsyncpa [#allocation7], 0
    %20 = vsyncpa [#allocation10], 0
    %21 = vsyncpa [#allocation13], 0
    %22 = vsyncpa [#allocation16], 0
    %23 = vsyncpa [#allocation5], 0
    // Predicated region
    $region2: #{encoder_forward.1} parent=1 // pred_check
      _
    $region3: #{encoder_forward.1} parent=1 // pred_check_branch
      %25 = sbr.rel (0) target = $region5
    $region4: #{encoder_forward.1} parent=1 // pred_region
      _
    $region5: #{encoder_forward.1} parent=1 // pred_fallthru
      _
    // Predicated region
    $region6: #{encoder_forward.1} parent=1 // pred_check
      _
    $region7: #{encoder_forward.1} parent=1 // pred_check_branch
      %27 = sbr.rel (0) target = $region9
    $region8: #{encoder_forward.1} parent=1 // pred_region
      %29 = vsyncadd [#allocation4], 0
      %s31 = sshll.u32 %s1, 4
      %s32 = int_to_ptr.hbm [resolvable:$true] %s31
      %s33 = sshll.u32 [#allocation3], 4
      %s34 = int_to_ptr.vmem [resolvable:$true] %s33
      %36 = dma.hbm_to_vmem [thread:$0]  %s32, 128, %s34, [#allocation4]
    $region9: #{encoder_forward.1} parent=1 // pred_fallthru
      _
    // Predicated region
    $region10: #{encoder_forward.1} parent=1 // pred_check
      _
    $region11: #{encoder_forward.1} parent=1 // pred_check_branch
      %38 = sbr.rel (0) target = $region13
    $region12: #{encoder_forward.1} parent=1 // pred_region
      %40 = vsyncadd [#allocation7], 0
      %s41 = sshll.u32 %s2, 4
      %s42 = int_to_ptr.hbm [resolvable:$true] %s41
      %s43 = sshll.u32 [#allocation6], 4
      %s44 = int_to_ptr.vmem [resolvable:$true] %s43
      %49 = dma.hbm_to_vmem [thread:$0]  %s42, 2048, %s44, [#allocation7], 256, 256, 16
    $region13: #{encoder_forward.1} parent=1 // pred_fallthru
      _
    // Predicated region
    $region14: #{encoder_forward.1} parent=1 // pred_check
      _
    $region15: #{encoder_forward.1} parent=1 // pred_check_branch
      %51 = sbr.rel (0) target = $region17
    $region16: #{encoder_forward.1} parent=1 // pred_region
      _
    $region17: #{encoder_forward.1} parent=1 // pred_fallthru
      _
    // Predicated region
    $region18: #{encoder_forward.1} parent=1 // pred_check
      _
    $region19: #{encoder_forward.1} parent=1 // pred_check_branch
      %53 = sbr.rel (0) target = $region21
    $region20: #{encoder_forward.1} parent=1 // pred_region
      %55 = vsyncadd [#allocation7], 0
      %s56 = sshll.u32 %s4, 4
      %s57 = int_to_ptr.hbm [resolvable:$true] %s56
      %s58 = sshll.u32 [#allocation8], 4
      %s59 = int_to_ptr.vmem [resolvable:$true] %s58
      %64 = dma.hbm_to_vmem [thread:$0]  %s57, 2048, %s59, [#allocation7], 256, 256, 16
    $region21: #{encoder_forward.1} parent=1 // pred_fallthru
      _
    // Predicated region
    $region22: #{encoder_forward.1} parent=1 // pred_check
      _
    $region23: #{encoder_forward.1} parent=1 // pred_check_branch
      %66 = sbr.rel (0) target = $region25
    $region24: #{encoder_forward.1} parent=1 // pred_region
      %68 = vsyncadd [#allocation10], 0
      %s69 = sshll.u32 %s5, 4
      %s70 = int_to_ptr.hbm [resolvable:$true] %s69
      %s71 = sshll.u32 [#allocation9], 4
      %s72 = int_to_ptr.vmem [resolvable:$true] %s71
      %77 = dma.hbm_to_vmem [thread:$0]  %s70, 2048, %s72, [#allocation10], 256, 256, 16
    $region25: #{encoder_forward.1} parent=1 // pred_fallthru
      _
    // Predicated region
    $region26: #{encoder_forward.1} parent=1 // pred_check
      _
    $region27: #{encoder_forward.1} parent=1 // pred_check_branch
      %79 = sbr.rel (0) target = $region29
    $region28: #{encoder_forward.1} parent=1 // pred_region
      _
    $region29: #{encoder_forward.1} parent=1 // pred_fallthru
      _
    // Predicated region
    $region30: #{encoder_forward.1} parent=1 // pred_check
      _
    $region31: #{encoder_forward.1} parent=1 // pred_check_branch
      %81 = sbr.rel (0) target = $region33
    $region32: #{encoder_forward.1} parent=1 // pred_region
      %83 = vsyncadd [#allocation10], 0
      %s84 = sshll.u32 %s7, 4
      %s85 = int_to_ptr.hbm [resolvable:$true] %s84
      %s86 = sshll.u32 [#allocation11], 4
      %s87 = int_to_ptr.vmem [resolvable:$true] %s86
      %92 = dma.hbm_to_vmem [thread:$0]  %s85, 2048, %s87, [#allocation10], 256, 256, 16
    $region33: #{encoder_forward.1} parent=1 // pred_fallthru
      _
    // Predicated region
    $region34: #{encoder_forward.1} parent=1 // pred_check
      _
    $region35: #{encoder_forward.1} parent=1 // pred_check_branch
      %94 = sbr.rel (0) target = $region37
    $region36: #{encoder_forward.1} parent=1 // pred_region
      %96 = vsyncadd [#allocation13], 0
      %s97 = sshll.u32 %s8, 4
      %s98 = int_to_ptr.hbm [resolvable:$true] %s97
      %s99 = sshll.u32 [#allocation12], 4
      %s100 = int_to_ptr.vmem [resolvable:$true] %s99
      %105 = dma.hbm_to_vmem [thread:$0]  %s98, 2048, %s100, [#allocation13], 256, 256, 16
    $region37: #{encoder_forward.1} parent=1 // pred_fallthru
      _
    // Predicated region
    $region38: #{encoder_forward.1} parent=1 // pred_check
      _
    $region39: #{encoder_forward.1} parent=1 // pred_check_branch
      %107 = sbr.rel (0) target = $region41
    $region40: #{encoder_forward.1} parent=1 // pred_region
      %109 = vsyncadd [#allocation13], 0
      %s111 = sshll.u32 %s9, 4
      %s112 = int_to_ptr.hbm [resolvable:$true] %s111
      %s113 = sshll.u32 [#allocation14], 4
      %s114 = int_to_ptr.vmem [resolvable:$true] %s113
      %116 = dma.hbm_to_vmem [thread:$0]  %s112, 32, %s114, [#allocation13]
    $region41: #{encoder_forward.1} parent=1 // pred_fallthru
      _
    // Predicated region
    $region42: #{encoder_forward.1} parent=1 // pred_check
      _
    $region43: #{encoder_forward.1} parent=1 // pred_check_branch
      %118 = sbr.rel (0) target = $region45
    $region44: #{encoder_forward.1} parent=1 // pred_region
      %120 = vsyncadd [#allocation16], 0
      %s121 = sshll.u32 %s10, 4
      %s122 = int_to_ptr.hbm [resolvable:$true] %s121
      %s123 = sshll.u32 [#allocation15], 4
      %s124 = int_to_ptr.vmem [resolvable:$true] %s123
      %129 = dma.hbm_to_vmem [thread:$0]  %s122, 1024, %s124, [#allocation16], 128, 128, 8
    $region45: #{encoder_forward.1} parent=1 // pred_fallthru
      _
    // Predicated region
    $region46: #{encoder_forward.1} parent=1 // pred_check
      _
    $region47: #{encoder_forward.1} parent=1 // pred_check_branch
      %131 = sbr.rel (0) target = $region49
    $region48: #{encoder_forward.1} parent=1 // pred_region
      _
    $region49: #{encoder_forward.1} parent=1 // pred_fallthru
      _
    // Predicated region
    $region50: #{encoder_forward.1} parent=1 // pred_check
      _
    $region51: #{encoder_forward.1} parent=1 // pred_check_branch
      %133 = sbr.rel (0) target = $region53
    $region52: #{encoder_forward.1} parent=1 // pred_region
      _
    $region53: #{encoder_forward.1} parent=1 // pred_fallthru
      _
    // Predicated region
    $region54: #{encoder_forward.1} parent=1 // pred_check
      _
    $region55: #{encoder_forward.1} parent=1 // pred_check_branch
      %135 = sbr.rel (0) target = $region57
    $region56: #{encoder_forward.1} parent=1 // pred_region
      %137 = dma.done [#allocation4], 128
    $region57: #{encoder_forward.1} parent=1 // pred_fallthru
      _
    // Predicated region
    $region58: #{encoder_forward.1} parent=1 // pred_check
      _
    $region59: #{encoder_forward.1} parent=1 // pred_check_branch
      %139 = sbr.rel (0) target = $region61
    $region60: #{encoder_forward.1} parent=1 // pred_region
      %141 = dma.done [#allocation7], 2048
    $region61: #{encoder_forward.1} parent=1 // pred_fallthru
      _
    // Predicated region
    $region62: #{encoder_forward.1} parent=1 // pred_check
      _
    $region63: #{encoder_forward.1} parent=1 // pred_check_branch
      %143 = sbr.rel (0) target = $region65
    $region64: #{encoder_forward.1} parent=1 // pred_region
      %145 = dma.done [#allocation7], 2048
    $region65: #{encoder_forward.1} parent=1 // pred_fallthru
      _
    // Predicated region
    $region66: #{encoder_forward.1} parent=1 // pred_check
      _
    $region67: #{encoder_forward.1} parent=1 // pred_check_branch
      %147 = sbr.rel (0) target = $region69
    $region68: #{encoder_forward.1} parent=1 // pred_region
      %149 = dma.done [#allocation10], 2048
    $region69: #{encoder_forward.1} parent=1 // pred_fallthru
      _
    // Predicated region
    $region70: #{encoder_forward.1} parent=1 // pred_check
      _
    $region71: #{encoder_forward.1} parent=1 // pred_check_branch
      %151 = sbr.rel (0) target = $region73
    $region72: #{encoder_forward.1} parent=1 // pred_region
      %153 = dma.done [#allocation10], 2048
    $region73: #{encoder_forward.1} parent=1 // pred_fallthru
      _
    // Predicated region
    $region74: #{encoder_forward.1} parent=1 // pred_check
      _
    $region75: #{encoder_forward.1} parent=1 // pred_check_branch
      %155 = sbr.rel (0) target = $region77
    $region76: #{encoder_forward.1} parent=1 // pred_region
      %157 = dma.done [#allocation13], 2048
    $region77: #{encoder_forward.1} parent=1 // pred_fallthru
      _
    // Predicated region
    $region78: #{encoder_forward.1} parent=1 // pred_check
      _
    $region79: #{encoder_forward.1} parent=1 // pred_check_branch
      %159 = sbr.rel (0) target = $region81
    $region80: #{encoder_forward.1} parent=1 // pred_region
      %161 = dma.done [#allocation13], 32
    $region81: #{encoder_forward.1} parent=1 // pred_fallthru
      _
    // Predicated region
    $region82: #{encoder_forward.1} parent=1 // pred_check
      _
    $region83: #{encoder_forward.1} parent=1 // pred_check_branch
      %163 = sbr.rel (0) target = $region85
    $region84: #{encoder_forward.1} parent=1 // pred_region
      %165 = dma.done [#allocation16], 1024
    $region85: #{encoder_forward.1} parent=1 // pred_fallthru
      _
    %v166 = vld [vmem:[%s0] sm:$0xff]
    %v167 = vld [vmem:[%s0 + $0x8] sm:$0xff]
    %v168 = vld [vmem:[#allocation3] sm:$0xff]
    %v169 = vld [vmem:[%s3] sm:$0x3]
    %v171 = vperm.slane %v169, 0
    %v172 = vperm.slane %v169, 1
    %176 = vst [vmem:[#allocation1] ss:$2 sm:$0xff] %v168
    %v177 = vld.sshfl [vmem:[#allocation1] sm:$0xff pattern:$0x75316420]
    %v178 = vld.sshfl [vmem:[#allocation1 + $0x8] sm:$0xff pattern:$0x75316420]
    %vm179 = vcmask 31744
    %v181 = vsel %vm179, %v166, 0
    %v184 = vsel %vm179, %v167, 0
    %vm186 = vcmask 1043456
    %v187 = vsel %vm186, %v177, 0
    %v189 = vsel %vm186, %v178, 0
    %191 = vmatpush.msra.mxu0 0.0
    %192 = vmatpush.msra.mxu0 0.0
    %193 = vmatpush.msra.mxu0 0.0
    %194 = vmatpush.msra.mxu0 0.0
    %195 = vmatpush.msra.mxu0 0.0
    %196 = vmatpush.msra.mxu0 0.0
    %197 = vmatpush.msra.mxu0 0.0
    %198 = vmatpush.msra.mxu0 0.0
    %199 = vmatpush.msra.mxu0 0.0
    %200 = vmatpush.msra.mxu0 0.0
    %201 = vmatpush.msra.mxu0 0.0
    %202 = vmatpush.msra.mxu0 0.0
    %203 = vmatpush.msra.mxu0 0.0
    %204 = vmatpush.msra.mxu0 0.0
    %205 = vmatpush.msra.mxu0 0.0
    %206 = vmatpush.msra.mxu0 %v187
    %207 = vmatmul.f32.gmra.mxu0 %v181
    %v208 = vpop.f32.mrf.mxu0
    %v209 = vadd.f32 %v171, %v208
    %210 = vmatmul.f32.gmra.mxu0 %v184
    %v211 = vpop.f32.mrf.mxu0
    %v212 = vadd.f32 %v171, %v211
    %213 = vdwg.mxu0
    %214 = vmatpush.msra.mxu0 0.0
    %215 = vmatpush.msra.mxu0 0.0
    %216 = vmatpush.msra.mxu0 0.0
    %217 = vmatpush.msra.mxu0 0.0
    %218 = vmatpush.msra.mxu0 0.0
    %219 = vmatpush.msra.mxu0 0.0
    %220 = vmatpush.msra.mxu0 0.0
    %221 = vmatpush.msra.mxu0 0.0
    %222 = vmatpush.msra.mxu0 0.0
    %223 = vmatpush.msra.mxu0 0.0
    %224 = vmatpush.msra.mxu0 0.0
    %225 = vmatpush.msra.mxu0 0.0
    %226 = vmatpush.msra.mxu0 0.0
    %227 = vmatpush.msra.mxu0 0.0
    %228 = vmatpush.msra.mxu0 0.0
    %229 = vmatpush.msra.mxu0 %v189
    %230 = vmatmul.f32.gmra.mxu0 %v181
    %v231 = vpop.f32.mrf.mxu0
    %v232 = vadd.f32 %v172, %v231
    %233 = vmatmul.f32.gmra.mxu0 %v184
    %v234 = vpop.f32.mrf.mxu0
    %v235 = vadd.f32 %v172, %v234
    %236 = vdwg.mxu0
    %v237 = vld [vmem:[#allocation6] sm:$0xff]
    %v238 = vld [vmem:[#allocation6 + $0x8] sm:$0xff]
    %v239 = vld [vmem:[#allocation6 + $0x10] sm:$0xff]
    %v240 = vld [vmem:[#allocation6 + $0x18] sm:$0xff]
    %v241 = vld [vmem:[#allocation6 + $0x20] sm:$0xff]
    %v242 = vld [vmem:[#allocation6 + $0x28] sm:$0xff]
    %v243 = vld [vmem:[#allocation6 + $0x30] sm:$0xff]
    %v244 = vld [vmem:[#allocation6 + $0x38] sm:$0xff]
    %v245 = vld [vmem:[#allocation6 + $0x40] sm:$0xff]
    %v246 = vld [vmem:[#allocation6 + $0x48] sm:$0xff]
    %v247 = vld [vmem:[#allocation6 + $0x50] sm:$0xff]
    %v248 = vld [vmem:[#allocation6 + $0x58] sm:$0xff]
    %v249 = vld [vmem:[#allocation6 + $0x60] sm:$0xff]
    %v250 = vld [vmem:[#allocation6 + $0x68] sm:$0xff]
    %v251 = vld [vmem:[#allocation6 + $0x70] sm:$0xff]
    %v252 = vld [vmem:[#allocation6 + $0x78] sm:$0xff]
    %vm253 = vcmask 523264
    %v255 = vsel %vm253, 0.0, 0
    %257 = vmatpush.msra.mxu0 0.0
    %258 = vmatpush.msra.mxu0 0.0
    %259 = vmatpush.msra.mxu0 0.0
    %260 = vmatpush.msra.mxu0 0.0
    %261 = vmatpush.msra.mxu0 0.0
    %262 = vmatpush.msra.mxu0 0.0
    %263 = vmatpush.msra.mxu0 0.0
    %264 = vmatpush.msra.mxu0 0.0
    %265 = vmatpush.msra.mxu0 %v251
    %266 = vmatpush.msra.mxu0 %v249
    %267 = vmatpush.msra.mxu0 %v247
    %268 = vmatpush.msra.mxu0 %v245
    %269 = vmatpush.msra.mxu0 %v243
    %270 = vmatpush.msra.mxu0 %v241
    %271 = vmatpush.msra.mxu0 %v239
    %272 = vmatpush.msra.mxu0 %v237
    %273 = vmatmul.f32.gmra.mxu0 %v255
    %v274 = vpop.f32.mrf.mxu0
    %v275 = vadd.f32 0.0, %v274
    %276 = vdwg.mxu0
    %277 = vmatpush.msra.mxu0 0.0
    %278 = vmatpush.msra.mxu0 0.0
    %279 = vmatpush.msra.mxu0 0.0
    %280 = vmatpush.msra.mxu0 0.0
    %281 = vmatpush.msra.mxu0 0.0
    %282 = vmatpush.msra.mxu0 0.0
    %283 = vmatpush.msra.mxu0 0.0
    %284 = vmatpush.msra.mxu0 0.0
    %285 = vmatpush.msra.mxu0 %v252
    %286 = vmatpush.msra.mxu0 %v250
    %287 = vmatpush.msra.mxu0 %v248
    %288 = vmatpush.msra.mxu0 %v246
    %289 = vmatpush.msra.mxu0 %v244
    %290 = vmatpush.msra.mxu0 %v242
    %291 = vmatpush.msra.mxu0 %v240
    %292 = vmatpush.msra.mxu0 %v238
    %293 = vmatmul.f32.gmra.mxu0 %v255
    %v294 = vpop.f32.mrf.mxu0
    %v295 = vadd.f32 0.0, %v294
    %296 = vdwg.mxu0
    %v297 = vadd.f32 %v209, %v275
    %v298 = vadd.f32 %v232, %v295
    %v299 = vxor.u32 %v297, 2147483648
    %v300 = vmul.f32 %v299, 1.442695
    %v301 = vpow.pop %v300
    %v302 = vadd.f32 %v301, 1.0
    %v303 = vrcp.pop %v302
    %v304 = vmul.f32 %v302, %v303
    %v305 = vsub.f32 1.0, %v304
    %v306 = vmul.f32 %v303, %v305
    %v307 = vadd.f32 %v303, %v306
    %vm308 = vweird.f32 %v302
    %vm309 = vweird.f32 %v303
    %vm310 = vmor %vm308, %vm309
    %v311 = vsel %vm310, %v303, %v307
    %v312 = vand.u32 2147483647, %v302
    %vm313 = vcmp.eq.f32.partialorder %v312, 8.507059e+37
    %v314 = vand.u32 %v302, 2147483648
    %v315 = vor.u32 1.1754944e-38, %v314
    %v316 = vsel %vm313, %v315, %v311
    %v317 = vmul.f32 1.0, %v316
    %v318 = vtanh.pop %v298
    %v319 = vxor.u32 %v298, 2147483648
    %v320 = vmul.f32 %v319, 1.442695
    %v321 = vpow.pop %v320
    %v322 = vadd.f32 %v321, 1.0
    %v323 = vrcp.pop %v322
    %v324 = vmul.f32 %v322, %v323
    %v325 = vsub.f32 1.0, %v324
    %v326 = vmul.f32 %v323, %v325
    %v327 = vadd.f32 %v323, %v326
    %vm328 = vweird.f32 %v322
    %vm329 = vweird.f32 %v323
    %vm330 = vmor %vm328, %vm329
    %v331 = vsel %vm330, %v323, %v327
    %v332 = vand.u32 2147483647, %v322
    %vm333 = vcmp.eq.f32.partialorder %v332, 8.507059e+37
    %v334 = vand.u32 %v322, 2147483648
    %v335 = vor.u32 1.1754944e-38, %v334
    %v336 = vsel %vm333, %v335, %v331
    %v337 = vmul.f32 1.0, %v336
    %v338 = vmul.f32 %v317, 0.0
    %v339 = vmul.f32 %v317, %v318
    %341 = vrot.lane.b32.xlu0 %v339, 64
    %v342 = vpop.permute.xlu0 %341
    %v344 = vadd.f32 %v338, %v342
    %v345 = vtanh.pop %v344
    %v346 = vmul.f32 %v337, %v345
    %348 = vrot.lane.b32.xlu0 %v346, 64
    %v349 = vpop.permute.xlu0 %348
    %vm351 = vcmask 517120
    %352 = vst.msk [vmem:[#allocation2] sm:$0x3] %vm351, %v349
    %v353 = vsel %vm253, %v349, 0
    %355 = vmatpush.msra.mxu0 0.0
    %356 = vmatpush.msra.mxu0 0.0
    %357 = vmatpush.msra.mxu0 0.0
    %358 = vmatpush.msra.mxu0 0.0
    %359 = vmatpush.msra.mxu0 0.0
    %360 = vmatpush.msra.mxu0 0.0
    %361 = vmatpush.msra.mxu0 0.0
    %362 = vmatpush.msra.mxu0 0.0
    %363 = vmatpush.msra.mxu0 %v251
    %364 = vmatpush.msra.mxu0 %v249
    %365 = vmatpush.msra.mxu0 %v247
    %366 = vmatpush.msra.mxu0 %v245
    %367 = vmatpush.msra.mxu0 %v243
    %368 = vmatpush.msra.mxu0 %v241
    %369 = vmatpush.msra.mxu0 %v239
    %370 = vmatpush.msra.mxu0 %v237
    %371 = vmatmul.f32.gmra.mxu0 %v353
    %v372 = vpop.f32.mrf.mxu0
    %v373 = vadd.f32 0.0, %v372
    %374 = vdwg.mxu0
    %375 = vmatpush.msra.mxu0 0.0
    %376 = vmatpush.msra.mxu0 0.0
    %377 = vmatpush.msra.mxu0 0.0
    %378 = vmatpush.msra.mxu0 0.0
    %379 = vmatpush.msra.mxu0 0.0
    %380 = vmatpush.msra.mxu0 0.0
    %381 = vmatpush.msra.mxu0 0.0
    %382 = vmatpush.msra.mxu0 0.0
    %383 = vmatpush.msra.mxu0 %v252
    %384 = vmatpush.msra.mxu0 %v250
    %385 = vmatpush.msra.mxu0 %v248
    %386 = vmatpush.msra.mxu0 %v246
    %387 = vmatpush.msra.mxu0 %v244
    %388 = vmatpush.msra.mxu0 %v242
    %389 = vmatpush.msra.mxu0 %v240
    %390 = vmatpush.msra.mxu0 %v238
    %391 = vmatmul.f32.gmra.mxu0 %v353
    %v392 = vpop.f32.mrf.mxu0
    %v393 = vadd.f32 0.0, %v392
    %394 = vdwg.mxu0
    %v397 = vrot.slane %v373, 6
    %v398 = vrot.slane %v393, 6
    %v401 = vadd.f32 %v209, %v397
    %v402 = vadd.f32 %v232, %v398
    %v403 = vxor.u32 %v401, 2147483648
    %v404 = vmul.f32 %v403, 1.442695
    %v405 = vpow.pop %v404
    %v406 = vadd.f32 %v405, 1.0
    %v407 = vrcp.pop %v406
    %v408 = vmul.f32 %v406, %v407
    %v409 = vsub.f32 1.0, %v408
    %v410 = vmul.f32 %v407, %v409
    %v411 = vadd.f32 %v407, %v410
    %vm412 = vweird.f32 %v406
    %vm413 = vweird.f32 %v407
    %vm414 = vmor %vm412, %vm413
    %v415 = vsel %vm414, %v407, %v411
    %v416 = vand.u32 2147483647, %v406
    %vm417 = vcmp.eq.f32.partialorder %v416, 8.507059e+37
    %v418 = vand.u32 %v406, 2147483648
    %v419 = vor.u32 1.1754944e-38, %v418
    %v420 = vsel %vm417, %v419, %v415
    %v421 = vmul.f32 1.0, %v420
    %v422 = vtanh.pop %v402
    %v423 = vxor.u32 %v402, 2147483648
    %v424 = vmul.f32 %v423, 1.442695
    %v425 = vpow.pop %v424
    %v426 = vadd.f32 %v425, 1.0
    %v427 = vrcp.pop %v426
    %v428 = vmul.f32 %v426, %v427
    %v429 = vsub.f32 1.0, %v428
    %v430 = vmul.f32 %v427, %v429
    %v431 = vadd.f32 %v427, %v430
    %vm432 = vweird.f32 %v426
    %vm433 = vweird.f32 %v427
    %vm434 = vmor %vm432, %vm433
    %v435 = vsel %vm434, %v427, %v431
    %v436 = vand.u32 2147483647, %v426
    %vm437 = vcmp.eq.f32.partialorder %v436, 8.507059e+37
    %v438 = vand.u32 %v426, 2147483648
    %v439 = vor.u32 1.1754944e-38, %v438
    %v440 = vsel %vm437, %v439, %v435
    %v441 = vmul.f32 1.0, %v440
    %v443 = vrot.slane %v344, 6
    %v445 = vmul.f32 %v421, %v443
    %v446 = vmul.f32 %v421, %v422
    %448 = vrot.lane.b32.xlu0 %v446, 64
    %v449 = vpop.permute.xlu0 %448
    %v451 = vadd.f32 %v445, %v449
    %v452 = vtanh.pop %v451
    %v453 = vmul.f32 %v441, %v452
    %455 = vrot.lane.b32.xlu0 %v453, 64
    %v456 = vpop.permute.xlu0 %455
    %vm458 = vcmask 519170
    %459 = vst.msk [vmem:[#allocation2] sm:$0xc] %vm458, %v456
    %v460 = vrot.slane %v453, 2
    %461 = vrot.lane.b32.xlu0 %v460, 64
    %v462 = vpop.permute.xlu0 %461
    %v463 = vsel %vm253, %v462, 0
    %465 = vmatpush.msra.mxu0 0.0
    %466 = vmatpush.msra.mxu0 0.0
    %467 = vmatpush.msra.mxu0 0.0
    %468 = vmatpush.msra.mxu0 0.0
    %469 = vmatpush.msra.mxu0 0.0
    %470 = vmatpush.msra.mxu0 0.0
    %471 = vmatpush.msra.mxu0 0.0
    %472 = vmatpush.msra.mxu0 0.0
    %473 = vmatpush.msra.mxu0 %v251
    %474 = vmatpush.msra.mxu0 %v249
    %475 = vmatpush.msra.mxu0 %v247
    %476 = vmatpush.msra.mxu0 %v245
    %477 = vmatpush.msra.mxu0 %v243
    %478 = vmatpush.msra.mxu0 %v241
    %479 = vmatpush.msra.mxu0 %v239
    %480 = vmatpush.msra.mxu0 %v237
    %481 = vmatmul.f32.gmra.mxu0 %v463
    %v482 = vpop.f32.mrf.mxu0
    %v483 = vadd.f32 0.0, %v482
    %484 = vdwg.mxu0
    %485 = vmatpush.msra.mxu0 0.0
    %486 = vmatpush.msra.mxu0 0.0
    %487 = vmatpush.msra.mxu0 0.0
    %488 = vmatpush.msra.mxu0 0.0
    %489 = vmatpush.msra.mxu0 0.0
    %490 = vmatpush.msra.mxu0 0.0
    %491 = vmatpush.msra.mxu0 0.0
    %492 = vmatpush.msra.mxu0 0.0
    %493 = vmatpush.msra.mxu0 %v252
    %494 = vmatpush.msra.mxu0 %v250
    %495 = vmatpush.msra.mxu0 %v248
    %496 = vmatpush.msra.mxu0 %v246
    %497 = vmatpush.msra.mxu0 %v244
    %498 = vmatpush.msra.mxu0 %v242
    %499 = vmatpush.msra.mxu0 %v240
    %500 = vmatpush.msra.mxu0 %v238
    %501 = vmatmul.f32.gmra.mxu0 %v463
    %v502 = vpop.f32.mrf.mxu0
    %v503 = vadd.f32 0.0, %v502
    %504 = vdwg.mxu0
    %v507 = vrot.slane %v483, 4
    %v508 = vrot.slane %v503, 4
    %v511 = vadd.f32 %v209, %v507
    %v512 = vadd.f32 %v232, %v508
    %v513 = vxor.u32 %v511, 2147483648
    %v514 = vmul.f32 %v513, 1.442695
    %v515 = vpow.pop %v514
    %v516 = vadd.f32 %v515, 1.0
    %v517 = vrcp.pop %v516
    %v518 = vmul.f32 %v516, %v517
    %v519 = vsub.f32 1.0, %v518
    %v520 = vmul.f32 %v517, %v519
    %v521 = vadd.f32 %v517, %v520
    %vm522 = vweird.f32 %v516
    %vm523 = vweird.f32 %v517
    %vm524 = vmor %vm522, %vm523
    %v525 = vsel %vm524, %v517, %v521
    %v526 = vand.u32 2147483647, %v516
    %vm527 = vcmp.eq.f32.partialorder %v526, 8.507059e+37
    %v528 = vand.u32 %v516, 2147483648
    %v529 = vor.u32 1.1754944e-38, %v528
    %v530 = vsel %vm527, %v529, %v525
    %v531 = vmul.f32 1.0, %v530
    %v532 = vtanh.pop %v512
    %v533 = vxor.u32 %v512, 2147483648
    %v534 = vmul.f32 %v533, 1.442695
    %v535 = vpow.pop %v534
    %v536 = vadd.f32 %v535, 1.0
    %v537 = vrcp.pop %v536
    %v538 = vmul.f32 %v536, %v537
    %v539 = vsub.f32 1.0, %v538
    %v540 = vmul.f32 %v537, %v539
    %v541 = vadd.f32 %v537, %v540
    %vm542 = vweird.f32 %v536
    %vm543 = vweird.f32 %v537
    %vm544 = vmor %vm542, %vm543
    %v545 = vsel %vm544, %v537, %v541
    %v546 = vand.u32 2147483647, %v536
    %vm547 = vcmp.eq.f32.partialorder %v546, 8.507059e+37
    %v548 = vand.u32 %v536, 2147483648
    %v549 = vor.u32 1.1754944e-38, %v548
    %v550 = vsel %vm547, %v549, %v545
    %v551 = vmul.f32 1.0, %v550
    %v553 = vrot.slane %v451, 6
    %v555 = vmul.f32 %v531, %v553
    %v556 = vmul.f32 %v531, %v532
    %558 = vrot.lane.b32.xlu0 %v556, 64
    %v559 = vpop.permute.xlu0 %558
    %v561 = vadd.f32 %v555, %v559
    %v562 = vtanh.pop %v561
    %v563 = vmul.f32 %v551, %v562
    %565 = vrot.lane.b32.xlu0 %v563, 64
    %v566 = vpop.permute.xlu0 %565
    %vm568 = vcmask 521220
    %569 = vst.msk [vmem:[#allocation2] sm:$0x30] %vm568, %v566
    %v570 = vrot.slane %v563, 4
    %571 = vrot.lane.b32.xlu0 %v570, 64
    %v572 = vpop.permute.xlu0 %571
    %v573 = vsel %vm253, %v572, 0
    %575 = vmatpush.msra.mxu0 0.0
    %576 = vmatpush.msra.mxu0 0.0
    %577 = vmatpush.msra.mxu0 0.0
    %578 = vmatpush.msra.mxu0 0.0
    %579 = vmatpush.msra.mxu0 0.0
    %580 = vmatpush.msra.mxu0 0.0
    %581 = vmatpush.msra.mxu0 0.0
    %582 = vmatpush.msra.mxu0 0.0
    %583 = vmatpush.msra.mxu0 %v251
    %584 = vmatpush.msra.mxu0 %v249
    %585 = vmatpush.msra.mxu0 %v247
    %586 = vmatpush.msra.mxu0 %v245
    %587 = vmatpush.msra.mxu0 %v243
    %588 = vmatpush.msra.mxu0 %v241
    %589 = vmatpush.msra.mxu0 %v239
    %590 = vmatpush.msra.mxu0 %v237
    %591 = vmatmul.f32.gmra.mxu0 %v573
    %v592 = vpop.f32.mrf.mxu0
    %v593 = vadd.f32 0.0, %v592
    %594 = vdwg.mxu0
    %595 = vmatpush.msra.mxu0 0.0
    %596 = vmatpush.msra.mxu0 0.0
    %597 = vmatpush.msra.mxu0 0.0
    %598 = vmatpush.msra.mxu0 0.0
    %599 = vmatpush.msra.mxu0 0.0
    %600 = vmatpush.msra.mxu0 0.0
    %601 = vmatpush.msra.mxu0 0.0
    %602 = vmatpush.msra.mxu0 0.0
    %603 = vmatpush.msra.mxu0 %v252
    %604 = vmatpush.msra.mxu0 %v250
    %605 = vmatpush.msra.mxu0 %v248
    %606 = vmatpush.msra.mxu0 %v246
    %607 = vmatpush.msra.mxu0 %v244
    %608 = vmatpush.msra.mxu0 %v242
    %609 = vmatpush.msra.mxu0 %v240
    %610 = vmatpush.msra.mxu0 %v238
    %611 = vmatmul.f32.gmra.mxu0 %v573
    %v612 = vpop.f32.mrf.mxu0
    %v613 = vadd.f32 0.0, %v612
    %614 = vdwg.mxu0
    %v617 = vrot.slane %v593, 2
    %v618 = vrot.slane %v613, 2
    %v621 = vadd.f32 %v209, %v617
    %v622 = vadd.f32 %v232, %v618
    %v623 = vxor.u32 %v621, 2147483648
    %v624 = vmul.f32 %v623, 1.442695
    %v625 = vpow.pop %v624
    %v626 = vadd.f32 %v625, 1.0
    %v627 = vrcp.pop %v626
    %v628 = vmul.f32 %v626, %v627
    %v629 = vsub.f32 1.0, %v628
    %v630 = vmul.f32 %v627, %v629
    %v631 = vadd.f32 %v627, %v630
    %vm632 = vweird.f32 %v626
    %vm633 = vweird.f32 %v627
    %vm634 = vmor %vm632, %vm633
    %v635 = vsel %vm634, %v627, %v631
    %v636 = vand.u32 2147483647, %v626
    %vm637 = vcmp.eq.f32.partialorder %v636, 8.507059e+37
    %v638 = vand.u32 %v626, 2147483648
    %v639 = vor.u32 1.1754944e-38, %v638
    %v640 = vsel %vm637, %v639, %v635
    %v641 = vmul.f32 1.0, %v640
    %v642 = vtanh.pop %v622
    %v643 = vxor.u32 %v622, 2147483648
    %v644 = vmul.f32 %v643, 1.442695
    %v645 = vpow.pop %v644
    %v646 = vadd.f32 %v645, 1.0
    %v647 = vrcp.pop %v646
    %v648 = vmul.f32 %v646, %v647
    %v649 = vsub.f32 1.0, %v648
    %v650 = vmul.f32 %v647, %v649
    %v651 = vadd.f32 %v647, %v650
    %vm652 = vweird.f32 %v646
    %vm653 = vweird.f32 %v647
    %vm654 = vmor %vm652, %vm653
    %v655 = vsel %vm654, %v647, %v651
    %v656 = vand.u32 2147483647, %v646
    %vm657 = vcmp.eq.f32.partialorder %v656, 8.507059e+37
    %v658 = vand.u32 %v646, 2147483648
    %v659 = vor.u32 1.1754944e-38, %v658
    %v660 = vsel %vm657, %v659, %v655
    %v661 = vmul.f32 1.0, %v660
    %v663 = vrot.slane %v561, 6
    %v665 = vmul.f32 %v641, %v663
    %v666 = vmul.f32 %v641, %v642
    %668 = vrot.lane.b32.xlu0 %v666, 64
    %v669 = vpop.permute.xlu0 %668
    %v671 = vadd.f32 %v665, %v669
    %v672 = vtanh.pop %v671
    %v673 = vmul.f32 %v661, %v672
    %675 = vrot.lane.b32.xlu0 %v673, 64
    %v676 = vpop.permute.xlu0 %675
    %vm678 = vcmask 523270
    %679 = vst.msk [vmem:[#allocation2] sm:$0xc0] %vm678, %v676
    %v680 = vrot.slane %v673, 6
    %681 = vrot.lane.b32.xlu0 %v680, 64
    %v682 = vpop.permute.xlu0 %681
    %v683 = vsel %vm253, %v682, 0
    %685 = vmatpush.msra.mxu0 0.0
    %686 = vmatpush.msra.mxu0 0.0
    %687 = vmatpush.msra.mxu0 0.0
    %688 = vmatpush.msra.mxu0 0.0
    %689 = vmatpush.msra.mxu0 0.0
    %690 = vmatpush.msra.mxu0 0.0
    %691 = vmatpush.msra.mxu0 0.0
    %692 = vmatpush.msra.mxu0 0.0
    %693 = vmatpush.msra.mxu0 %v251
    %694 = vmatpush.msra.mxu0 %v249
    %695 = vmatpush.msra.mxu0 %v247
    %696 = vmatpush.msra.mxu0 %v245
    %697 = vmatpush.msra.mxu0 %v243
    %698 = vmatpush.msra.mxu0 %v241
    %699 = vmatpush.msra.mxu0 %v239
    %700 = vmatpush.msra.mxu0 %v237
    %701 = vmatmul.f32.gmra.mxu0 %v683
    %v702 = vpop.f32.mrf.mxu0
    %v703 = vadd.f32 0.0, %v702
    %704 = vdwg.mxu0
    %705 = vmatpush.msra.mxu0 0.0
    %706 = vmatpush.msra.mxu0 0.0
    %707 = vmatpush.msra.mxu0 0.0
    %708 = vmatpush.msra.mxu0 0.0
    %709 = vmatpush.msra.mxu0 0.0
    %710 = vmatpush.msra.mxu0 0.0
    %711 = vmatpush.msra.mxu0 0.0
    %712 = vmatpush.msra.mxu0 0.0
    %713 = vmatpush.msra.mxu0 %v252
    %714 = vmatpush.msra.mxu0 %v250
    %715 = vmatpush.msra.mxu0 %v248
    %716 = vmatpush.msra.mxu0 %v246
    %717 = vmatpush.msra.mxu0 %v244
    %718 = vmatpush.msra.mxu0 %v242
    %719 = vmatpush.msra.mxu0 %v240
    %720 = vmatpush.msra.mxu0 %v238
    %721 = vmatmul.f32.gmra.mxu0 %v683
    %v722 = vpop.f32.mrf.mxu0
    %v723 = vadd.f32 0.0, %v722
    %724 = vdwg.mxu0
    %v725 = vadd.f32 %v212, %v703
    %v726 = vadd.f32 %v235, %v723
    %v727 = vxor.u32 %v725, 2147483648
    %v728 = vmul.f32 %v727, 1.442695
    %v729 = vpow.pop %v728
    %v730 = vadd.f32 %v729, 1.0
    %v731 = vrcp.pop %v730
    %v732 = vmul.f32 %v730, %v731
    %v733 = vsub.f32 1.0, %v732
    %v734 = vmul.f32 %v731, %v733
    %v735 = vadd.f32 %v731, %v734
    %vm736 = vweird.f32 %v730
    %vm737 = vweird.f32 %v731
    %vm738 = vmor %vm736, %vm737
    %v739 = vsel %vm738, %v731, %v735
    %v740 = vand.u32 2147483647, %v730
    %vm741 = vcmp.eq.f32.partialorder %v740, 8.507059e+37
    %v742 = vand.u32 %v730, 2147483648
    %v743 = vor.u32 1.1754944e-38, %v742
    %v744 = vsel %vm741, %v743, %v739
    %v745 = vmul.f32 1.0, %v744
    %v746 = vtanh.pop %v726
    %v747 = vxor.u32 %v726, 2147483648
    %v748 = vmul.f32 %v747, 1.442695
    %v749 = vpow.pop %v748
    %v750 = vadd.f32 %v749, 1.0
    %v751 = vrcp.pop %v750
    %v752 = vmul.f32 %v750, %v751
    %v753 = vsub.f32 1.0, %v752
    %v754 = vmul.f32 %v751, %v753
    %v755 = vadd.f32 %v751, %v754
    %vm756 = vweird.f32 %v750
    %vm757 = vweird.f32 %v751
    %vm758 = vmor %vm756, %vm757
    %v759 = vsel %vm758, %v751, %v755
    %v760 = vand.u32 2147483647, %v750
    %vm761 = vcmp.eq.f32.partialorder %v760, 8.507059e+37
    %v762 = vand.u32 %v750, 2147483648
    %v763 = vor.u32 1.1754944e-38, %v762
    %v764 = vsel %vm761, %v763, %v759
    %v765 = vmul.f32 1.0, %v764
    %v767 = vrot.slane %v671, 6
    %v769 = vmul.f32 %v745, %v767
    %v770 = vmul.f32 %v745, %v746
    %772 = vrot.lane.b32.xlu0 %v770, 64
    %v773 = vpop.permute.xlu0 %772
    %v775 = vadd.f32 %v769, %v773
    %v776 = vtanh.pop %v775
    %v777 = vmul.f32 %v765, %v776
    %779 = vrot.lane.b32.xlu0 %v777, 64
    %v780 = vpop.permute.xlu0 %779
    %782 = vst.msk [vmem:[#allocation2 + $0x8] sm:$0x3] %vm351, %v780
    %v783 = vsel %vm253, %v780, 0
    %785 = vmatpush.msra.mxu0 0.0
    %786 = vmatpush.msra.mxu0 0.0
    %787 = vmatpush.msra.mxu0 0.0
    %788 = vmatpush.msra.mxu0 0.0
    %789 = vmatpush.msra.mxu0 0.0
    %790 = vmatpush.msra.mxu0 0.0
    %791 = vmatpush.msra.mxu0 0.0
    %792 = vmatpush.msra.mxu0 0.0
    %793 = vmatpush.msra.mxu0 %v251
    %794 = vmatpush.msra.mxu0 %v249
    %795 = vmatpush.msra.mxu0 %v247
    %796 = vmatpush.msra.mxu0 %v245
    %797 = vmatpush.msra.mxu0 %v243
    %798 = vmatpush.msra.mxu0 %v241
    %799 = vmatpush.msra.mxu0 %v239
    %800 = vmatpush.msra.mxu0 %v237
    %801 = vmatmul.f32.gmra.mxu0 %v783
    %v802 = vpop.f32.mrf.mxu0
    %v803 = vadd.f32 0.0, %v802
    %804 = vdwg.mxu0
    %805 = vmatpush.msra.mxu0 0.0
    %806 = vmatpush.msra.mxu0 0.0
    %807 = vmatpush.msra.mxu0 0.0
    %808 = vmatpush.msra.mxu0 0.0
    %809 = vmatpush.msra.mxu0 0.0
    %810 = vmatpush.msra.mxu0 0.0
    %811 = vmatpush.msra.mxu0 0.0
    %812 = vmatpush.msra.mxu0 0.0
    %813 = vmatpush.msra.mxu0 %v252
    %814 = vmatpush.msra.mxu0 %v250
    %815 = vmatpush.msra.mxu0 %v248
    %816 = vmatpush.msra.mxu0 %v246
    %817 = vmatpush.msra.mxu0 %v244
    %818 = vmatpush.msra.mxu0 %v242
    %819 = vmatpush.msra.mxu0 %v240
    %820 = vmatpush.msra.mxu0 %v238
    %821 = vmatmul.f32.gmra.mxu0 %v783
    %v822 = vpop.f32.mrf.mxu0
    %v823 = vadd.f32 0.0, %v822
    %824 = vdwg.mxu0
    %v827 = vrot.slane %v803, 6
    %v828 = vrot.slane %v823, 6
    %v831 = vadd.f32 %v212, %v827
    %v832 = vadd.f32 %v235, %v828
    %v833 = vxor.u32 %v831, 2147483648
    %v834 = vmul.f32 %v833, 1.442695
    %v835 = vpow.pop %v834
    %v836 = vadd.f32 %v835, 1.0
    %v837 = vrcp.pop %v836
    %v838 = vmul.f32 %v836, %v837
    %v839 = vsub.f32 1.0, %v838
    %v840 = vmul.f32 %v837, %v839
    %v841 = vadd.f32 %v837, %v840
    %vm842 = vweird.f32 %v836
    %vm843 = vweird.f32 %v837
    %vm844 = vmor %vm842, %vm843
    %v845 = vsel %vm844, %v837, %v841
    %v846 = vand.u32 2147483647, %v836
    %vm847 = vcmp.eq.f32.partialorder %v846, 8.507059e+37
    %v848 = vand.u32 %v836, 2147483648
    %v849 = vor.u32 1.1754944e-38, %v848
    %v850 = vsel %vm847, %v849, %v845
    %v851 = vmul.f32 1.0, %v850
    %v852 = vtanh.pop %v832
    %v853 = vxor.u32 %v832, 2147483648
    %v854 = vmul.f32 %v853, 1.442695
    %v855 = vpow.pop %v854
    %v856 = vadd.f32 %v855, 1.0
    %v857 = vrcp.pop %v856
    %v858 = vmul.f32 %v856, %v857
    %v859 = vsub.f32 1.0, %v858
    %v860 = vmul.f32 %v857, %v859
    %v861 = vadd.f32 %v857, %v860
    %vm862 = vweird.f32 %v856
    %vm863 = vweird.f32 %v857
    %vm864 = vmor %vm862, %vm863
    %v865 = vsel %vm864, %v857, %v861
    %v866 = vand.u32 2147483647, %v856
    %vm867 = vcmp.eq.f32.partialorder %v866, 8.507059e+37
    %v868 = vand.u32 %v856, 2147483648
    %v869 = vor.u32 1.1754944e-38, %v868
    %v870 = vsel %vm867, %v869, %v865
    %v871 = vmul.f32 1.0, %v870
    %v873 = vrot.slane %v775, 6
    %v875 = vmul.f32 %v851, %v873
    %v876 = vmul.f32 %v851, %v852
    %878 = vrot.lane.b32.xlu0 %v876, 64
    %v879 = vpop.permute.xlu0 %878
    %v881 = vadd.f32 %v875, %v879
    %v882 = vtanh.pop %v881
    %v883 = vmul.f32 %v871, %v882
    %885 = vrot.lane.b32.xlu0 %v883, 64
    %v886 = vpop.permute.xlu0 %885
    %888 = vst.msk [vmem:[#allocation2 + $0x8] sm:$0xc] %vm458, %v886
    %v889 = vrot.slane %v883, 2
    %890 = vrot.lane.b32.xlu0 %v889, 64
    %v891 = vpop.permute.xlu0 %890
    %v892 = vsel %vm253, %v891, 0
    %894 = vmatpush.msra.mxu0 0.0
    %895 = vmatpush.msra.mxu0 0.0
    %896 = vmatpush.msra.mxu0 0.0
    %897 = vmatpush.msra.mxu0 0.0
    %898 = vmatpush.msra.mxu0 0.0
    %899 = vmatpush.msra.mxu0 0.0
    %900 = vmatpush.msra.mxu0 0.0
    %901 = vmatpush.msra.mxu0 0.0
    %902 = vmatpush.msra.mxu0 %v251
    %903 = vmatpush.msra.mxu0 %v249
    %904 = vmatpush.msra.mxu0 %v247
    %905 = vmatpush.msra.mxu0 %v245
    %906 = vmatpush.msra.mxu0 %v243
    %907 = vmatpush.msra.mxu0 %v241
    %908 = vmatpush.msra.mxu0 %v239
    %909 = vmatpush.msra.mxu0 %v237
    %910 = vmatmul.f32.gmra.mxu0 %v892
    %v911 = vpop.f32.mrf.mxu0
    %v912 = vadd.f32 0.0, %v911
    %913 = vdwg.mxu0
    %914 = vmatpush.msra.mxu0 0.0
    %915 = vmatpush.msra.mxu0 0.0
    %916 = vmatpush.msra.mxu0 0.0
    %917 = vmatpush.msra.mxu0 0.0
    %918 = vmatpush.msra.mxu0 0.0
    %919 = vmatpush.msra.mxu0 0.0
    %920 = vmatpush.msra.mxu0 0.0
    %921 = vmatpush.msra.mxu0 0.0
    %922 = vmatpush.msra.mxu0 %v252
    %923 = vmatpush.msra.mxu0 %v250
    %924 = vmatpush.msra.mxu0 %v248
    %925 = vmatpush.msra.mxu0 %v246
    %926 = vmatpush.msra.mxu0 %v244
    %927 = vmatpush.msra.mxu0 %v242
    %928 = vmatpush.msra.mxu0 %v240
    %929 = vmatpush.msra.mxu0 %v238
    %930 = vmatmul.f32.gmra.mxu0 %v892
    %v931 = vpop.f32.mrf.mxu0
    %v932 = vadd.f32 0.0, %v931
    %933 = vdwg.mxu0
    %v936 = vrot.slane %v912, 4
    %v937 = vrot.slane %v932, 4
    %v940 = vadd.f32 %v212, %v936
    %v941 = vadd.f32 %v235, %v937
    %v942 = vxor.u32 %v940, 2147483648
    %v943 = vmul.f32 %v942, 1.442695
    %v944 = vpow.pop %v943
    %v945 = vadd.f32 %v944, 1.0
    %v946 = vrcp.pop %v945
    %v947 = vmul.f32 %v945, %v946
    %v948 = vsub.f32 1.0, %v947
    %v949 = vmul.f32 %v946, %v948
    %v950 = vadd.f32 %v946, %v949
    %vm951 = vweird.f32 %v945
    %vm952 = vweird.f32 %v946
    %vm953 = vmor %vm951, %vm952
    %v954 = vsel %vm953, %v946, %v950
    %v955 = vand.u32 2147483647, %v945
    %vm956 = vcmp.eq.f32.partialorder %v955, 8.507059e+37
    %v957 = vand.u32 %v945, 2147483648
    %v958 = vor.u32 1.1754944e-38, %v957
    %v959 = vsel %vm956, %v958, %v954
    %v960 = vmul.f32 1.0, %v959
    %v961 = vtanh.pop %v941
    %v962 = vxor.u32 %v941, 2147483648
    %v963 = vmul.f32 %v962, 1.442695
    %v964 = vpow.pop %v963
    %v965 = vadd.f32 %v964, 1.0
    %v966 = vrcp.pop %v965
    %v967 = vmul.f32 %v965, %v966
    %v968 = vsub.f32 1.0, %v967
    %v969 = vmul.f32 %v966, %v968
    %v970 = vadd.f32 %v966, %v969
    %vm971 = vweird.f32 %v965
    %vm972 = vweird.f32 %v966
    %vm973 = vmor %vm971, %vm972
    %v974 = vsel %vm973, %v966, %v970
    %v975 = vand.u32 2147483647, %v965
    %vm976 = vcmp.eq.f32.partialorder %v975, 8.507059e+37
    %v977 = vand.u32 %v965, 2147483648
    %v978 = vor.u32 1.1754944e-38, %v977
    %v979 = vsel %vm976, %v978, %v974
    %v980 = vmul.f32 1.0, %v979
    %v982 = vrot.slane %v881, 6
    %v984 = vmul.f32 %v960, %v982
    %v985 = vmul.f32 %v960, %v961
    %987 = vrot.lane.b32.xlu0 %v985, 64
    %v988 = vpop.permute.xlu0 %987
    %v990 = vadd.f32 %v984, %v988
    %v991 = vtanh.pop %v990
    %v992 = vmul.f32 %v980, %v991
    %994 = vrot.lane.b32.xlu0 %v992, 64
    %v995 = vpop.permute.xlu0 %994
    %997 = vst.msk [vmem:[#allocation2 + $0x8] sm:$0x30] %vm568, %v995
    %v998 = vrot.slane %v992, 4
    %999 = vrot.lane.b32.xlu0 %v998, 64
    %v1000 = vpop.permute.xlu0 %999
    %v1001 = vsel %vm253, %v1000, 0
    %1003 = vmatpush.msra.mxu0 0.0
    %1004 = vmatpush.msra.mxu0 0.0
    %1005 = vmatpush.msra.mxu0 0.0
    %1006 = vmatpush.msra.mxu0 0.0
    %1007 = vmatpush.msra.mxu0 0.0
    %1008 = vmatpush.msra.mxu0 0.0
    %1009 = vmatpush.msra.mxu0 0.0
    %1010 = vmatpush.msra.mxu0 0.0
    %1011 = vmatpush.msra.mxu0 %v251
    %1012 = vmatpush.msra.mxu0 %v249
    %1013 = vmatpush.msra.mxu0 %v247
    %1014 = vmatpush.msra.mxu0 %v245
    %1015 = vmatpush.msra.mxu0 %v243
    %1016 = vmatpush.msra.mxu0 %v241
    %1017 = vmatpush.msra.mxu0 %v239
    %1018 = vmatpush.msra.mxu0 %v237
    %1019 = vmatmul.f32.gmra.mxu0 %v1001
    %v1020 = vpop.f32.mrf.mxu0
    %v1021 = vadd.f32 0.0, %v1020
    %1022 = vdwg.mxu0
    %1023 = vmatpush.msra.mxu0 0.0
    %1024 = vmatpush.msra.mxu0 0.0
    %1025 = vmatpush.msra.mxu0 0.0
    %1026 = vmatpush.msra.mxu0 0.0
    %1027 = vmatpush.msra.mxu0 0.0
    %1028 = vmatpush.msra.mxu0 0.0
    %1029 = vmatpush.msra.mxu0 0.0
    %1030 = vmatpush.msra.mxu0 0.0
    %1031 = vmatpush.msra.mxu0 %v252
    %1032 = vmatpush.msra.mxu0 %v250
    %1033 = vmatpush.msra.mxu0 %v248
    %1034 = vmatpush.msra.mxu0 %v246
    %1035 = vmatpush.msra.mxu0 %v244
    %1036 = vmatpush.msra.mxu0 %v242
    %1037 = vmatpush.msra.mxu0 %v240
    %1038 = vmatpush.msra.mxu0 %v238
    %1039 = vmatmul.f32.gmra.mxu0 %v1001
    %v1040 = vpop.f32.mrf.mxu0
    %v1041 = vadd.f32 0.0, %v1040
    %1042 = vdwg.mxu0
    %v1045 = vrot.slane %v1021, 2
    %v1046 = vrot.slane %v1041, 2
    %v1049 = vadd.f32 %v212, %v1045
    %v1050 = vadd.f32 %v235, %v1046
    %v1051 = vxor.u32 %v1049, 2147483648
    %v1052 = vmul.f32 %v1051, 1.442695
    %v1053 = vpow.pop %v1052
    %v1054 = vadd.f32 %v1053, 1.0
    %v1055 = vrcp.pop %v1054
    %v1056 = vmul.f32 %v1054, %v1055
    %v1057 = vsub.f32 1.0, %v1056
    %v1058 = vmul.f32 %v1055, %v1057
    %v1059 = vadd.f32 %v1055, %v1058
    %vm1060 = vweird.f32 %v1054
    %vm1061 = vweird.f32 %v1055
    %vm1062 = vmor %vm1060, %vm1061
    %v1063 = vsel %vm1062, %v1055, %v1059
    %v1064 = vand.u32 2147483647, %v1054
    %vm1065 = vcmp.eq.f32.partialorder %v1064, 8.507059e+37
    %v1066 = vand.u32 %v1054, 2147483648
    %v1067 = vor.u32 1.1754944e-38, %v1066
    %v1068 = vsel %vm1065, %v1067, %v1063
    %v1069 = vmul.f32 1.0, %v1068
    %v1070 = vtanh.pop %v1050
    %v1071 = vxor.u32 %v1050, 2147483648
    %v1072 = vmul.f32 %v1071, 1.442695
    %v1073 = vpow.pop %v1072
    %v1074 = vadd.f32 %v1073, 1.0
    %v1075 = vrcp.pop %v1074
    %v1076 = vmul.f32 %v1074, %v1075
    %v1077 = vsub.f32 1.0, %v1076
    %v1078 = vmul.f32 %v1075, %v1077
    %v1079 = vadd.f32 %v1075, %v1078
    %vm1080 = vweird.f32 %v1074
    %vm1081 = vweird.f32 %v1075
    %vm1082 = vmor %vm1080, %vm1081
    %v1083 = vsel %vm1082, %v1075, %v1079
    %v1084 = vand.u32 2147483647, %v1074
    %vm1085 = vcmp.eq.f32.partialorder %v1084, 8.507059e+37
    %v1086 = vand.u32 %v1074, 2147483648
    %v1087 = vor.u32 1.1754944e-38, %v1086
    %v1088 = vsel %vm1085, %v1087, %v1083
    %v1089 = vmul.f32 1.0, %v1088
    %v1091 = vrot.slane %v990, 6
    %v1093 = vmul.f32 %v1069, %v1091
    %v1094 = vmul.f32 %v1069, %v1070
    %1096 = vrot.lane.b32.xlu0 %v1094, 64
    %v1097 = vpop.permute.xlu0 %1096
    %v1099 = vadd.f32 %v1093, %v1097
    %v1100 = vtanh.pop %v1099
    %v1101 = vmul.f32 %v1089, %v1100
    %1103 = vrot.lane.b32.xlu0 %v1101, 64
    %v1104 = vpop.permute.xlu0 %1103
    %1106 = vst.msk [vmem:[#allocation2 + $0x8] sm:$0xc0] %vm678, %v1104
    %v1107 = vld [vmem:[#allocation2] sm:$0xff]
    %v1108 = vld [vmem:[#allocation2 + $0x8] sm:$0xff]
    %v1109 = vld [vmem:[#allocation8] sm:$0xff]
    %v1110 = vld [vmem:[#allocation8 + $0x8] sm:$0xff]
    %v1111 = vld [vmem:[#allocation8 + $0x10] sm:$0xff]
    %v1112 = vld [vmem:[#allocation8 + $0x18] sm:$0xff]
    %v1113 = vld [vmem:[#allocation8 + $0x20] sm:$0xff]
    %v1114 = vld [vmem:[#allocation8 + $0x28] sm:$0xff]
    %v1115 = vld [vmem:[#allocation8 + $0x30] sm:$0xff]
    %v1116 = vld [vmem:[#allocation8 + $0x38] sm:$0xff]
    %v1117 = vld [vmem:[#allocation8 + $0x40] sm:$0xff]
    %v1118 = vld [vmem:[#allocation8 + $0x48] sm:$0xff]
    %v1119 = vld [vmem:[#allocation8 + $0x50] sm:$0xff]
    %v1120 = vld [vmem:[#allocation8 + $0x58] sm:$0xff]
    %v1121 = vld [vmem:[#allocation8 + $0x60] sm:$0xff]
    %v1122 = vld [vmem:[#allocation8 + $0x68] sm:$0xff]
    %v1123 = vld [vmem:[#allocation8 + $0x70] sm:$0xff]
    %v1124 = vld [vmem:[#allocation8 + $0x78] sm:$0xff]
    %v1125 = vld [vmem:[%s6] sm:$0x3]
    %v1127 = vperm.slane %v1125, 0
    %v1128 = vperm.slane %v1125, 1
    %v1132 = vsel %vm253, %v1107, 0
    %v1135 = vsel %vm253, %v1108, 0
    %1137 = vmatpush.msra.mxu0 0.0
    %1138 = vmatpush.msra.mxu0 0.0
    %1139 = vmatpush.msra.mxu0 0.0
    %1140 = vmatpush.msra.mxu0 0.0
    %1141 = vmatpush.msra.mxu0 0.0
    %1142 = vmatpush.msra.mxu0 0.0
    %1143 = vmatpush.msra.mxu0 0.0
    %1144 = vmatpush.msra.mxu0 0.0
    %1145 = vmatpush.msra.mxu0 %v1123
    %1146 = vmatpush.msra.mxu0 %v1121
    %1147 = vmatpush.msra.mxu0 %v1119
    %1148 = vmatpush.msra.mxu0 %v1117
    %1149 = vmatpush.msra.mxu0 %v1115
    %1150 = vmatpush.msra.mxu0 %v1113
    %1151 = vmatpush.msra.mxu0 %v1111
    %1152 = vmatpush.msra.mxu0 %v1109
    %1153 = vmatmul.f32.gmra.mxu0 %v1132
    %v1154 = vpop.f32.mrf.mxu0
    %v1155 = vadd.f32 %v1127, %v1154
    %1156 = vmatmul.f32.gmra.mxu0 %v1135
    %v1157 = vpop.f32.mrf.mxu0
    %v1158 = vadd.f32 %v1127, %v1157
    %1159 = vdwg.mxu0
    %1160 = vmatpush.msra.mxu0 0.0
    %1161 = vmatpush.msra.mxu0 0.0
    %1162 = vmatpush.msra.mxu0 0.0
    %1163 = vmatpush.msra.mxu0 0.0
    %1164 = vmatpush.msra.mxu0 0.0
    %1165 = vmatpush.msra.mxu0 0.0
    %1166 = vmatpush.msra.mxu0 0.0
    %1167 = vmatpush.msra.mxu0 0.0
    %1168 = vmatpush.msra.mxu0 %v1124
    %1169 = vmatpush.msra.mxu0 %v1122
    %1170 = vmatpush.msra.mxu0 %v1120
    %1171 = vmatpush.msra.mxu0 %v1118
    %1172 = vmatpush.msra.mxu0 %v1116
    %1173 = vmatpush.msra.mxu0 %v1114
    %1174 = vmatpush.msra.mxu0 %v1112
    %1175 = vmatpush.msra.mxu0 %v1110
    %1176 = vmatmul.f32.gmra.mxu0 %v1132
    %v1177 = vpop.f32.mrf.mxu0
    %v1178 = vadd.f32 %v1128, %v1177
    %1179 = vmatmul.f32.gmra.mxu0 %v1135
    %v1180 = vpop.f32.mrf.mxu0
    %v1181 = vadd.f32 %v1128, %v1180
    %1182 = vdwg.mxu0
    %v1183 = vld [vmem:[#allocation9] sm:$0xff]
    %v1184 = vld [vmem:[#allocation9 + $0x8] sm:$0xff]
    %v1185 = vld [vmem:[#allocation9 + $0x10] sm:$0xff]
    %v1186 = vld [vmem:[#allocation9 + $0x18] sm:$0xff]
    %v1187 = vld [vmem:[#allocation9 + $0x20] sm:$0xff]
    %v1188 = vld [vmem:[#allocation9 + $0x28] sm:$0xff]
    %v1189 = vld [vmem:[#allocation9 + $0x30] sm:$0xff]
    %v1190 = vld [vmem:[#allocation9 + $0x38] sm:$0xff]
    %v1191 = vld [vmem:[#allocation9 + $0x40] sm:$0xff]
    %v1192 = vld [vmem:[#allocation9 + $0x48] sm:$0xff]
    %v1193 = vld [vmem:[#allocation9 + $0x50] sm:$0xff]
    %v1194 = vld [vmem:[#allocation9 + $0x58] sm:$0xff]
    %v1195 = vld [vmem:[#allocation9 + $0x60] sm:$0xff]
    %v1196 = vld [vmem:[#allocation9 + $0x68] sm:$0xff]
    %v1197 = vld [vmem:[#allocation9 + $0x70] sm:$0xff]
    %v1198 = vld [vmem:[#allocation9 + $0x78] sm:$0xff]
    %1199 = vmatpush.msra.mxu0 0.0
    %1200 = vmatpush.msra.mxu0 0.0
    %1201 = vmatpush.msra.mxu0 0.0
    %1202 = vmatpush.msra.mxu0 0.0
    %1203 = vmatpush.msra.mxu0 0.0
    %1204 = vmatpush.msra.mxu0 0.0
    %1205 = vmatpush.msra.mxu0 0.0
    %1206 = vmatpush.msra.mxu0 0.0
    %1207 = vmatpush.msra.mxu0 %v1197
    %1208 = vmatpush.msra.mxu0 %v1195
    %1209 = vmatpush.msra.mxu0 %v1193
    %1210 = vmatpush.msra.mxu0 %v1191
    %1211 = vmatpush.msra.mxu0 %v1189
    %1212 = vmatpush.msra.mxu0 %v1187
    %1213 = vmatpush.msra.mxu0 %v1185
    %1214 = vmatpush.msra.mxu0 %v1183
    %1215 = vmatmul.f32.gmra.mxu0 %v255
    %v1216 = vpop.f32.mrf.mxu0
    %v1217 = vadd.f32 0.0, %v1216
    %1218 = vdwg.mxu0
    %1219 = vmatpush.msra.mxu0 0.0
    %1220 = vmatpush.msra.mxu0 0.0
    %1221 = vmatpush.msra.mxu0 0.0
    %1222 = vmatpush.msra.mxu0 0.0
    %1223 = vmatpush.msra.mxu0 0.0
    %1224 = vmatpush.msra.mxu0 0.0
    %1225 = vmatpush.msra.mxu0 0.0
    %1226 = vmatpush.msra.mxu0 0.0
    %1227 = vmatpush.msra.mxu0 %v1198
    %1228 = vmatpush.msra.mxu0 %v1196
    %1229 = vmatpush.msra.mxu0 %v1194
    %1230 = vmatpush.msra.mxu0 %v1192
    %1231 = vmatpush.msra.mxu0 %v1190
    %1232 = vmatpush.msra.mxu0 %v1188
    %1233 = vmatpush.msra.mxu0 %v1186
    %1234 = vmatpush.msra.mxu0 %v1184
    %1235 = vmatmul.f32.gmra.mxu0 %v255
    %v1236 = vpop.f32.mrf.mxu0
    %v1237 = vadd.f32 0.0, %v1236
    %1238 = vdwg.mxu0
    %v1239 = vadd.f32 %v1155, %v1217
    %v1240 = vadd.f32 %v1178, %v1237
    %v1241 = vxor.u32 %v1239, 2147483648
    %v1242 = vmul.f32 %v1241, 1.442695
    %v1243 = vpow.pop %v1242
    %v1244 = vadd.f32 %v1243, 1.0
    %v1245 = vrcp.pop %v1244
    %v1246 = vmul.f32 %v1244, %v1245
    %v1247 = vsub.f32 1.0, %v1246
    %v1248 = vmul.f32 %v1245, %v1247
    %v1249 = vadd.f32 %v1245, %v1248
    %vm1250 = vweird.f32 %v1244
    %vm1251 = vweird.f32 %v1245
    %vm1252 = vmor %vm1250, %vm1251
    %v1253 = vsel %vm1252, %v1245, %v1249
    %v1254 = vand.u32 2147483647, %v1244
    %vm1255 = vcmp.eq.f32.partialorder %v1254, 8.507059e+37
    %v1256 = vand.u32 %v1244, 2147483648
    %v1257 = vor.u32 1.1754944e-38, %v1256
    %v1258 = vsel %vm1255, %v1257, %v1253
    %v1259 = vmul.f32 1.0, %v1258
    %v1260 = vtanh.pop %v1240
    %v1261 = vxor.u32 %v1240, 2147483648
    %v1262 = vmul.f32 %v1261, 1.442695
    %v1263 = vpow.pop %v1262
    %v1264 = vadd.f32 %v1263, 1.0
    %v1265 = vrcp.pop %v1264
    %v1266 = vmul.f32 %v1264, %v1265
    %v1267 = vsub.f32 1.0, %v1266
    %v1268 = vmul.f32 %v1265, %v1267
    %v1269 = vadd.f32 %v1265, %v1268
    %vm1270 = vweird.f32 %v1264
    %vm1271 = vweird.f32 %v1265
    %vm1272 = vmor %vm1270, %vm1271
    %v1273 = vsel %vm1272, %v1265, %v1269
    %v1274 = vand.u32 2147483647, %v1264
    %vm1275 = vcmp.eq.f32.partialorder %v1274, 8.507059e+37
    %v1276 = vand.u32 %v1264, 2147483648
    %v1277 = vor.u32 1.1754944e-38, %v1276
    %v1278 = vsel %vm1275, %v1277, %v1273
    %v1279 = vmul.f32 1.0, %v1278
    %v1280 = vmul.f32 %v1259, 0.0
    %v1281 = vmul.f32 %v1259, %v1260
    %1283 = vrot.lane.b32.xlu0 %v1281, 64
    %v1284 = vpop.permute.xlu0 %1283
    %v1286 = vadd.f32 %v1280, %v1284
    %v1287 = vtanh.pop %v1286
    %v1288 = vmul.f32 %v1279, %v1287
    %1290 = vrot.lane.b32.xlu0 %v1288, 64
    %v1291 = vpop.permute.xlu0 %1290
    %1293 = vst.msk [vmem:[#allocation2] sm:$0x3] %vm351, %v1291
    %v1294 = vsel %vm253, %v1291, 0
    %1296 = vmatpush.msra.mxu0 0.0
    %1297 = vmatpush.msra.mxu0 0.0
    %1298 = vmatpush.msra.mxu0 0.0
    %1299 = vmatpush.msra.mxu0 0.0
    %1300 = vmatpush.msra.mxu0 0.0
    %1301 = vmatpush.msra.mxu0 0.0
    %1302 = vmatpush.msra.mxu0 0.0
    %1303 = vmatpush.msra.mxu0 0.0
    %1304 = vmatpush.msra.mxu0 %v1197
    %1305 = vmatpush.msra.mxu0 %v1195
    %1306 = vmatpush.msra.mxu0 %v1193
    %1307 = vmatpush.msra.mxu0 %v1191
    %1308 = vmatpush.msra.mxu0 %v1189
    %1309 = vmatpush.msra.mxu0 %v1187
    %1310 = vmatpush.msra.mxu0 %v1185
    %1311 = vmatpush.msra.mxu0 %v1183
    %1312 = vmatmul.f32.gmra.mxu0 %v1294
    %v1313 = vpop.f32.mrf.mxu0
    %v1314 = vadd.f32 0.0, %v1313
    %1315 = vdwg.mxu0
    %1316 = vmatpush.msra.mxu0 0.0
    %1317 = vmatpush.msra.mxu0 0.0
    %1318 = vmatpush.msra.mxu0 0.0
    %1319 = vmatpush.msra.mxu0 0.0
    %1320 = vmatpush.msra.mxu0 0.0
    %1321 = vmatpush.msra.mxu0 0.0
    %1322 = vmatpush.msra.mxu0 0.0
    %1323 = vmatpush.msra.mxu0 0.0
    %1324 = vmatpush.msra.mxu0 %v1198
    %1325 = vmatpush.msra.mxu0 %v1196
    %1326 = vmatpush.msra.mxu0 %v1194
    %1327 = vmatpush.msra.mxu0 %v1192
    %1328 = vmatpush.msra.mxu0 %v1190
    %1329 = vmatpush.msra.mxu0 %v1188
    %1330 = vmatpush.msra.mxu0 %v1186
    %1331 = vmatpush.msra.mxu0 %v1184
    %1332 = vmatmul.f32.gmra.mxu0 %v1294
    %v1333 = vpop.f32.mrf.mxu0
    %v1334 = vadd.f32 0.0, %v1333
    %1335 = vdwg.mxu0
    %v1338 = vrot.slane %v1314, 6
    %v1339 = vrot.slane %v1334, 6
    %v1342 = vadd.f32 %v1155, %v1338
    %v1343 = vadd.f32 %v1178, %v1339
    %v1344 = vxor.u32 %v1342, 2147483648
    %v1345 = vmul.f32 %v1344, 1.442695
    %v1346 = vpow.pop %v1345
    %v1347 = vadd.f32 %v1346, 1.0
    %v1348 = vrcp.pop %v1347
    %v1349 = vmul.f32 %v1347, %v1348
    %v1350 = vsub.f32 1.0, %v1349
    %v1351 = vmul.f32 %v1348, %v1350
    %v1352 = vadd.f32 %v1348, %v1351
    %vm1353 = vweird.f32 %v1347
    %vm1354 = vweird.f32 %v1348
    %vm1355 = vmor %vm1353, %vm1354
    %v1356 = vsel %vm1355, %v1348, %v1352
    %v1357 = vand.u32 2147483647, %v1347
    %vm1358 = vcmp.eq.f32.partialorder %v1357, 8.507059e+37
    %v1359 = vand.u32 %v1347, 2147483648
    %v1360 = vor.u32 1.1754944e-38, %v1359
    %v1361 = vsel %vm1358, %v1360, %v1356
    %v1362 = vmul.f32 1.0, %v1361
    %v1363 = vtanh.pop %v1343
    %v1364 = vxor.u32 %v1343, 2147483648
    %v1365 = vmul.f32 %v1364, 1.442695
    %v1366 = vpow.pop %v1365
    %v1367 = vadd.f32 %v1366, 1.0
    %v1368 = vrcp.pop %v1367
    %v1369 = vmul.f32 %v1367, %v1368
    %v1370 = vsub.f32 1.0, %v1369
    %v1371 = vmul.f32 %v1368, %v1370
    %v1372 = vadd.f32 %v1368, %v1371
    %vm1373 = vweird.f32 %v1367
    %vm1374 = vweird.f32 %v1368
    %vm1375 = vmor %vm1373, %vm1374
    %v1376 = vsel %vm1375, %v1368, %v1372
    %v1377 = vand.u32 2147483647, %v1367
    %vm1378 = vcmp.eq.f32.partialorder %v1377, 8.507059e+37
    %v1379 = vand.u32 %v1367, 2147483648
    %v1380 = vor.u32 1.1754944e-38, %v1379
    %v1381 = vsel %vm1378, %v1380, %v1376
    %v1382 = vmul.f32 1.0, %v1381
    %v1384 = vrot.slane %v1286, 6
    %v1386 = vmul.f32 %v1362, %v1384
    %v1387 = vmul.f32 %v1362, %v1363
    %1389 = vrot.lane.b32.xlu0 %v1387, 64
    %v1390 = vpop.permute.xlu0 %1389
    %v1392 = vadd.f32 %v1386, %v1390
    %v1393 = vtanh.pop %v1392
    %v1394 = vmul.f32 %v1382, %v1393
    %1396 = vrot.lane.b32.xlu0 %v1394, 64
    %v1397 = vpop.permute.xlu0 %1396
    %1399 = vst.msk [vmem:[#allocation2] sm:$0xc] %vm458, %v1397
    %v1400 = vrot.slane %v1394, 2
    %1401 = vrot.lane.b32.xlu0 %v1400, 64
    %v1402 = vpop.permute.xlu0 %1401
    %v1403 = vsel %vm253, %v1402, 0
    %1405 = vmatpush.msra.mxu0 0.0
    %1406 = vmatpush.msra.mxu0 0.0
    %1407 = vmatpush.msra.mxu0 0.0
    %1408 = vmatpush.msra.mxu0 0.0
    %1409 = vmatpush.msra.mxu0 0.0
    %1410 = vmatpush.msra.mxu0 0.0
    %1411 = vmatpush.msra.mxu0 0.0
    %1412 = vmatpush.msra.mxu0 0.0
    %1413 = vmatpush.msra.mxu0 %v1197
    %1414 = vmatpush.msra.mxu0 %v1195
    %1415 = vmatpush.msra.mxu0 %v1193
    %1416 = vmatpush.msra.mxu0 %v1191
    %1417 = vmatpush.msra.mxu0 %v1189
    %1418 = vmatpush.msra.mxu0 %v1187
    %1419 = vmatpush.msra.mxu0 %v1185
    %1420 = vmatpush.msra.mxu0 %v1183
    %1421 = vmatmul.f32.gmra.mxu0 %v1403
    %v1422 = vpop.f32.mrf.mxu0
    %v1423 = vadd.f32 0.0, %v1422
    %1424 = vdwg.mxu0
    %1425 = vmatpush.msra.mxu0 0.0
    %1426 = vmatpush.msra.mxu0 0.0
    %1427 = vmatpush.msra.mxu0 0.0
    %1428 = vmatpush.msra.mxu0 0.0
    %1429 = vmatpush.msra.mxu0 0.0
    %1430 = vmatpush.msra.mxu0 0.0
    %1431 = vmatpush.msra.mxu0 0.0
    %1432 = vmatpush.msra.mxu0 0.0
    %1433 = vmatpush.msra.mxu0 %v1198
    %1434 = vmatpush.msra.mxu0 %v1196
    %1435 = vmatpush.msra.mxu0 %v1194
    %1436 = vmatpush.msra.mxu0 %v1192
    %1437 = vmatpush.msra.mxu0 %v1190
    %1438 = vmatpush.msra.mxu0 %v1188
    %1439 = vmatpush.msra.mxu0 %v1186
    %1440 = vmatpush.msra.mxu0 %v1184
    %1441 = vmatmul.f32.gmra.mxu0 %v1403
    %v1442 = vpop.f32.mrf.mxu0
    %v1443 = vadd.f32 0.0, %v1442
    %1444 = vdwg.mxu0
    %v1447 = vrot.slane %v1423, 4
    %v1448 = vrot.slane %v1443, 4
    %v1451 = vadd.f32 %v1155, %v1447
    %v1452 = vadd.f32 %v1178, %v1448
    %v1453 = vxor.u32 %v1451, 2147483648
    %v1454 = vmul.f32 %v1453, 1.442695
    %v1455 = vpow.pop %v1454
    %v1456 = vadd.f32 %v1455, 1.0
    %v1457 = vrcp.pop %v1456
    %v1458 = vmul.f32 %v1456, %v1457
    %v1459 = vsub.f32 1.0, %v1458
    %v1460 = vmul.f32 %v1457, %v1459
    %v1461 = vadd.f32 %v1457, %v1460
    %vm1462 = vweird.f32 %v1456
    %vm1463 = vweird.f32 %v1457
    %vm1464 = vmor %vm1462, %vm1463
    %v1465 = vsel %vm1464, %v1457, %v1461
    %v1466 = vand.u32 2147483647, %v1456
    %vm1467 = vcmp.eq.f32.partialorder %v1466, 8.507059e+37
    %v1468 = vand.u32 %v1456, 2147483648
    %v1469 = vor.u32 1.1754944e-38, %v1468
    %v1470 = vsel %vm1467, %v1469, %v1465
    %v1471 = vmul.f32 1.0, %v1470
    %v1472 = vtanh.pop %v1452
    %v1473 = vxor.u32 %v1452, 2147483648
    %v1474 = vmul.f32 %v1473, 1.442695
    %v1475 = vpow.pop %v1474
    %v1476 = vadd.f32 %v1475, 1.0
    %v1477 = vrcp.pop %v1476
    %v1478 = vmul.f32 %v1476, %v1477
    %v1479 = vsub.f32 1.0, %v1478
    %v1480 = vmul.f32 %v1477, %v1479
    %v1481 = vadd.f32 %v1477, %v1480
    %vm1482 = vweird.f32 %v1476
    %vm1483 = vweird.f32 %v1477
    %vm1484 = vmor %vm1482, %vm1483
    %v1485 = vsel %vm1484, %v1477, %v1481
    %v1486 = vand.u32 2147483647, %v1476
    %vm1487 = vcmp.eq.f32.partialorder %v1486, 8.507059e+37
    %v1488 = vand.u32 %v1476, 2147483648
    %v1489 = vor.u32 1.1754944e-38, %v1488
    %v1490 = vsel %vm1487, %v1489, %v1485
    %v1491 = vmul.f32 1.0, %v1490
    %v1493 = vrot.slane %v1392, 6
    %v1495 = vmul.f32 %v1471, %v1493
    %v1496 = vmul.f32 %v1471, %v1472
    %1498 = vrot.lane.b32.xlu0 %v1496, 64
    %v1499 = vpop.permute.xlu0 %1498
    %v1501 = vadd.f32 %v1495, %v1499
    %v1502 = vtanh.pop %v1501
    %v1503 = vmul.f32 %v1491, %v1502
    %1505 = vrot.lane.b32.xlu0 %v1503, 64
    %v1506 = vpop.permute.xlu0 %1505
    %1508 = vst.msk [vmem:[#allocation2] sm:$0x30] %vm568, %v1506
    %v1509 = vrot.slane %v1503, 4
    %1510 = vrot.lane.b32.xlu0 %v1509, 64
    %v1511 = vpop.permute.xlu0 %1510
    %v1512 = vsel %vm253, %v1511, 0
    %1514 = vmatpush.msra.mxu0 0.0
    %1515 = vmatpush.msra.mxu0 0.0
    %1516 = vmatpush.msra.mxu0 0.0
    %1517 = vmatpush.msra.mxu0 0.0
    %1518 = vmatpush.msra.mxu0 0.0
    %1519 = vmatpush.msra.mxu0 0.0
    %1520 = vmatpush.msra.mxu0 0.0
    %1521 = vmatpush.msra.mxu0 0.0
    %1522 = vmatpush.msra.mxu0 %v1197
    %1523 = vmatpush.msra.mxu0 %v1195
    %1524 = vmatpush.msra.mxu0 %v1193
    %1525 = vmatpush.msra.mxu0 %v1191
    %1526 = vmatpush.msra.mxu0 %v1189
    %1527 = vmatpush.msra.mxu0 %v1187
    %1528 = vmatpush.msra.mxu0 %v1185
    %1529 = vmatpush.msra.mxu0 %v1183
    %1530 = vmatmul.f32.gmra.mxu0 %v1512
    %v1531 = vpop.f32.mrf.mxu0
    %v1532 = vadd.f32 0.0, %v1531
    %1533 = vdwg.mxu0
    %1534 = vmatpush.msra.mxu0 0.0
    %1535 = vmatpush.msra.mxu0 0.0
    %1536 = vmatpush.msra.mxu0 0.0
    %1537 = vmatpush.msra.mxu0 0.0
    %1538 = vmatpush.msra.mxu0 0.0
    %1539 = vmatpush.msra.mxu0 0.0
    %1540 = vmatpush.msra.mxu0 0.0
    %1541 = vmatpush.msra.mxu0 0.0
    %1542 = vmatpush.msra.mxu0 %v1198
    %1543 = vmatpush.msra.mxu0 %v1196
    %1544 = vmatpush.msra.mxu0 %v1194
    %1545 = vmatpush.msra.mxu0 %v1192
    %1546 = vmatpush.msra.mxu0 %v1190
    %1547 = vmatpush.msra.mxu0 %v1188
    %1548 = vmatpush.msra.mxu0 %v1186
    %1549 = vmatpush.msra.mxu0 %v1184
    %1550 = vmatmul.f32.gmra.mxu0 %v1512
    %v1551 = vpop.f32.mrf.mxu0
    %v1552 = vadd.f32 0.0, %v1551
    %1553 = vdwg.mxu0
    %v1556 = vrot.slane %v1532, 2
    %v1557 = vrot.slane %v1552, 2
    %v1560 = vadd.f32 %v1155, %v1556
    %v1561 = vadd.f32 %v1178, %v1557
    %v1562 = vxor.u32 %v1560, 2147483648
    %v1563 = vmul.f32 %v1562, 1.442695
    %v1564 = vpow.pop %v1563
    %v1565 = vadd.f32 %v1564, 1.0
    %v1566 = vrcp.pop %v1565
    %v1567 = vmul.f32 %v1565, %v1566
    %v1568 = vsub.f32 1.0, %v1567
    %v1569 = vmul.f32 %v1566, %v1568
    %v1570 = vadd.f32 %v1566, %v1569
    %vm1571 = vweird.f32 %v1565
    %vm1572 = vweird.f32 %v1566
    %vm1573 = vmor %vm1571, %vm1572
    %v1574 = vsel %vm1573, %v1566, %v1570
    %v1575 = vand.u32 2147483647, %v1565
    %vm1576 = vcmp.eq.f32.partialorder %v1575, 8.507059e+37
    %v1577 = vand.u32 %v1565, 2147483648
    %v1578 = vor.u32 1.1754944e-38, %v1577
    %v1579 = vsel %vm1576, %v1578, %v1574
    %v1580 = vmul.f32 1.0, %v1579
    %v1581 = vtanh.pop %v1561
    %v1582 = vxor.u32 %v1561, 2147483648
    %v1583 = vmul.f32 %v1582, 1.442695
    %v1584 = vpow.pop %v1583
    %v1585 = vadd.f32 %v1584, 1.0
    %v1586 = vrcp.pop %v1585
    %v1587 = vmul.f32 %v1585, %v1586
    %v1588 = vsub.f32 1.0, %v1587
    %v1589 = vmul.f32 %v1586, %v1588
    %v1590 = vadd.f32 %v1586, %v1589
    %vm1591 = vweird.f32 %v1585
    %vm1592 = vweird.f32 %v1586
    %vm1593 = vmor %vm1591, %vm1592
    %v1594 = vsel %vm1593, %v1586, %v1590
    %v1595 = vand.u32 2147483647, %v1585
    %vm1596 = vcmp.eq.f32.partialorder %v1595, 8.507059e+37
    %v1597 = vand.u32 %v1585, 2147483648
    %v1598 = vor.u32 1.1754944e-38, %v1597
    %v1599 = vsel %vm1596, %v1598, %v1594
    %v1600 = vmul.f32 1.0, %v1599
    %v1602 = vrot.slane %v1501, 6
    %v1604 = vmul.f32 %v1580, %v1602
    %v1605 = vmul.f32 %v1580, %v1581
    %1607 = vrot.lane.b32.xlu0 %v1605, 64
    %v1608 = vpop.permute.xlu0 %1607
    %v1610 = vadd.f32 %v1604, %v1608
    %v1611 = vtanh.pop %v1610
    %v1612 = vmul.f32 %v1600, %v1611
    %1614 = vrot.lane.b32.xlu0 %v1612, 64
    %v1615 = vpop.permute.xlu0 %1614
    %1617 = vst.msk [vmem:[#allocation2] sm:$0xc0] %vm678, %v1615
    %v1618 = vrot.slane %v1612, 6
    %1619 = vrot.lane.b32.xlu0 %v1618, 64
    %v1620 = vpop.permute.xlu0 %1619
    %v1621 = vsel %vm253, %v1620, 0
    %1623 = vmatpush.msra.mxu0 0.0
    %1624 = vmatpush.msra.mxu0 0.0
    %1625 = vmatpush.msra.mxu0 0.0
    %1626 = vmatpush.msra.mxu0 0.0
    %1627 = vmatpush.msra.mxu0 0.0
    %1628 = vmatpush.msra.mxu0 0.0
    %1629 = vmatpush.msra.mxu0 0.0
    %1630 = vmatpush.msra.mxu0 0.0
    %1631 = vmatpush.msra.mxu0 %v1197
    %1632 = vmatpush.msra.mxu0 %v1195
    %1633 = vmatpush.msra.mxu0 %v1193
    %1634 = vmatpush.msra.mxu0 %v1191
    %1635 = vmatpush.msra.mxu0 %v1189
    %1636 = vmatpush.msra.mxu0 %v1187
    %1637 = vmatpush.msra.mxu0 %v1185
    %1638 = vmatpush.msra.mxu0 %v1183
    %1639 = vmatmul.f32.gmra.mxu0 %v1621
    %v1640 = vpop.f32.mrf.mxu0
    %v1641 = vadd.f32 0.0, %v1640
    %1642 = vdwg.mxu0
    %1643 = vmatpush.msra.mxu0 0.0
    %1644 = vmatpush.msra.mxu0 0.0
    %1645 = vmatpush.msra.mxu0 0.0
    %1646 = vmatpush.msra.mxu0 0.0
    %1647 = vmatpush.msra.mxu0 0.0
    %1648 = vmatpush.msra.mxu0 0.0
    %1649 = vmatpush.msra.mxu0 0.0
    %1650 = vmatpush.msra.mxu0 0.0
    %1651 = vmatpush.msra.mxu0 %v1198
    %1652 = vmatpush.msra.mxu0 %v1196
    %1653 = vmatpush.msra.mxu0 %v1194
    %1654 = vmatpush.msra.mxu0 %v1192
    %1655 = vmatpush.msra.mxu0 %v1190
    %1656 = vmatpush.msra.mxu0 %v1188
    %1657 = vmatpush.msra.mxu0 %v1186
    %1658 = vmatpush.msra.mxu0 %v1184
    %1659 = vmatmul.f32.gmra.mxu0 %v1621
    %v1660 = vpop.f32.mrf.mxu0
    %v1661 = vadd.f32 0.0, %v1660
    %1662 = vdwg.mxu0
    %v1663 = vadd.f32 %v1158, %v1641
    %v1664 = vadd.f32 %v1181, %v1661
    %v1665 = vxor.u32 %v1663, 2147483648
    %v1666 = vmul.f32 %v1665, 1.442695
    %v1667 = vpow.pop %v1666
    %v1668 = vadd.f32 %v1667, 1.0
    %v1669 = vrcp.pop %v1668
    %v1670 = vmul.f32 %v1668, %v1669
    %v1671 = vsub.f32 1.0, %v1670
    %v1672 = vmul.f32 %v1669, %v1671
    %v1673 = vadd.f32 %v1669, %v1672
    %vm1674 = vweird.f32 %v1668
    %vm1675 = vweird.f32 %v1669
    %vm1676 = vmor %vm1674, %vm1675
    %v1677 = vsel %vm1676, %v1669, %v1673
    %v1678 = vand.u32 2147483647, %v1668
    %vm1679 = vcmp.eq.f32.partialorder %v1678, 8.507059e+37
    %v1680 = vand.u32 %v1668, 2147483648
    %v1681 = vor.u32 1.1754944e-38, %v1680
    %v1682 = vsel %vm1679, %v1681, %v1677
    %v1683 = vmul.f32 1.0, %v1682
    %v1684 = vtanh.pop %v1664
    %v1685 = vxor.u32 %v1664, 2147483648
    %v1686 = vmul.f32 %v1685, 1.442695
    %v1687 = vpow.pop %v1686
    %v1688 = vadd.f32 %v1687, 1.0
    %v1689 = vrcp.pop %v1688
    %v1690 = vmul.f32 %v1688, %v1689
    %v1691 = vsub.f32 1.0, %v1690
    %v1692 = vmul.f32 %v1689, %v1691
    %v1693 = vadd.f32 %v1689, %v1692
    %vm1694 = vweird.f32 %v1688
    %vm1695 = vweird.f32 %v1689
    %vm1696 = vmor %vm1694, %vm1695
    %v1697 = vsel %vm1696, %v1689, %v1693
    %v1698 = vand.u32 2147483647, %v1688
    %vm1699 = vcmp.eq.f32.partialorder %v1698, 8.507059e+37
    %v1700 = vand.u32 %v1688, 2147483648
    %v1701 = vor.u32 1.1754944e-38, %v1700
    %v1702 = vsel %vm1699, %v1701, %v1697
    %v1703 = vmul.f32 1.0, %v1702
    %v1705 = vrot.slane %v1610, 6
    %v1707 = vmul.f32 %v1683, %v1705
    %v1708 = vmul.f32 %v1683, %v1684
    %1710 = vrot.lane.b32.xlu0 %v1708, 64
    %v1711 = vpop.permute.xlu0 %1710
    %v1713 = vadd.f32 %v1707, %v1711
    %v1714 = vtanh.pop %v1713
    %v1715 = vmul.f32 %v1703, %v1714
    %1717 = vrot.lane.b32.xlu0 %v1715, 64
    %v1718 = vpop.permute.xlu0 %1717
    %1720 = vst.msk [vmem:[#allocation2 + $0x8] sm:$0x3] %vm351, %v1718
    %v1721 = vsel %vm253, %v1718, 0
    %1723 = vmatpush.msra.mxu0 0.0
    %1724 = vmatpush.msra.mxu0 0.0
    %1725 = vmatpush.msra.mxu0 0.0
    %1726 = vmatpush.msra.mxu0 0.0
    %1727 = vmatpush.msra.mxu0 0.0
    %1728 = vmatpush.msra.mxu0 0.0
    %1729 = vmatpush.msra.mxu0 0.0
    %1730 = vmatpush.msra.mxu0 0.0
    %1731 = vmatpush.msra.mxu0 %v1197
    %1732 = vmatpush.msra.mxu0 %v1195
    %1733 = vmatpush.msra.mxu0 %v1193
    %1734 = vmatpush.msra.mxu0 %v1191
    %1735 = vmatpush.msra.mxu0 %v1189
    %1736 = vmatpush.msra.mxu0 %v1187
    %1737 = vmatpush.msra.mxu0 %v1185
    %1738 = vmatpush.msra.mxu0 %v1183
    %1739 = vmatmul.f32.gmra.mxu0 %v1721
    %v1740 = vpop.f32.mrf.mxu0
    %v1741 = vadd.f32 0.0, %v1740
    %1742 = vdwg.mxu0
    %1743 = vmatpush.msra.mxu0 0.0
    %1744 = vmatpush.msra.mxu0 0.0
    %1745 = vmatpush.msra.mxu0 0.0
    %1746 = vmatpush.msra.mxu0 0.0
    %1747 = vmatpush.msra.mxu0 0.0
    %1748 = vmatpush.msra.mxu0 0.0
    %1749 = vmatpush.msra.mxu0 0.0
    %1750 = vmatpush.msra.mxu0 0.0
    %1751 = vmatpush.msra.mxu0 %v1198
    %1752 = vmatpush.msra.mxu0 %v1196
    %1753 = vmatpush.msra.mxu0 %v1194
    %1754 = vmatpush.msra.mxu0 %v1192
    %1755 = vmatpush.msra.mxu0 %v1190
    %1756 = vmatpush.msra.mxu0 %v1188
    %1757 = vmatpush.msra.mxu0 %v1186
    %1758 = vmatpush.msra.mxu0 %v1184
    %1759 = vmatmul.f32.gmra.mxu0 %v1721
    %v1760 = vpop.f32.mrf.mxu0
    %v1761 = vadd.f32 0.0, %v1760
    %1762 = vdwg.mxu0
    %v1765 = vrot.slane %v1741, 6
    %v1766 = vrot.slane %v1761, 6
    %v1769 = vadd.f32 %v1158, %v1765
    %v1770 = vadd.f32 %v1181, %v1766
    %v1771 = vxor.u32 %v1769, 2147483648
    %v1772 = vmul.f32 %v1771, 1.442695
    %v1773 = vpow.pop %v1772
    %v1774 = vadd.f32 %v1773, 1.0
    %v1775 = vrcp.pop %v1774
    %v1776 = vmul.f32 %v1774, %v1775
    %v1777 = vsub.f32 1.0, %v1776
    %v1778 = vmul.f32 %v1775, %v1777
    %v1779 = vadd.f32 %v1775, %v1778
    %vm1780 = vweird.f32 %v1774
    %vm1781 = vweird.f32 %v1775
    %vm1782 = vmor %vm1780, %vm1781
    %v1783 = vsel %vm1782, %v1775, %v1779
    %v1784 = vand.u32 2147483647, %v1774
    %vm1785 = vcmp.eq.f32.partialorder %v1784, 8.507059e+37
    %v1786 = vand.u32 %v1774, 2147483648
    %v1787 = vor.u32 1.1754944e-38, %v1786
    %v1788 = vsel %vm1785, %v1787, %v1783
    %v1789 = vmul.f32 1.0, %v1788
    %v1790 = vtanh.pop %v1770
    %v1791 = vxor.u32 %v1770, 2147483648
    %v1792 = vmul.f32 %v1791, 1.442695
    %v1793 = vpow.pop %v1792
    %v1794 = vadd.f32 %v1793, 1.0
    %v1795 = vrcp.pop %v1794
    %v1796 = vmul.f32 %v1794, %v1795
    %v1797 = vsub.f32 1.0, %v1796
    %v1798 = vmul.f32 %v1795, %v1797
    %v1799 = vadd.f32 %v1795, %v1798
    %vm1800 = vweird.f32 %v1794
    %vm1801 = vweird.f32 %v1795
    %vm1802 = vmor %vm1800, %vm1801
    %v1803 = vsel %vm1802, %v1795, %v1799
    %v1804 = vand.u32 2147483647, %v1794
    %vm1805 = vcmp.eq.f32.partialorder %v1804, 8.507059e+37
    %v1806 = vand.u32 %v1794, 2147483648
    %v1807 = vor.u32 1.1754944e-38, %v1806
    %v1808 = vsel %vm1805, %v1807, %v1803
    %v1809 = vmul.f32 1.0, %v1808
    %v1811 = vrot.slane %v1713, 6
    %v1813 = vmul.f32 %v1789, %v1811
    %v1814 = vmul.f32 %v1789, %v1790
    %1816 = vrot.lane.b32.xlu0 %v1814, 64
    %v1817 = vpop.permute.xlu0 %1816
    %v1819 = vadd.f32 %v1813, %v1817
    %v1820 = vtanh.pop %v1819
    %v1821 = vmul.f32 %v1809, %v1820
    %1823 = vrot.lane.b32.xlu0 %v1821, 64
    %v1824 = vpop.permute.xlu0 %1823
    %1826 = vst.msk [vmem:[#allocation2 + $0x8] sm:$0xc] %vm458, %v1824
    %v1827 = vrot.slane %v1821, 2
    %1828 = vrot.lane.b32.xlu0 %v1827, 64
    %v1829 = vpop.permute.xlu0 %1828
    %v1830 = vsel %vm253, %v1829, 0
    %1832 = vmatpush.msra.mxu0 0.0
    %1833 = vmatpush.msra.mxu0 0.0
    %1834 = vmatpush.msra.mxu0 0.0
    %1835 = vmatpush.msra.mxu0 0.0
    %1836 = vmatpush.msra.mxu0 0.0
    %1837 = vmatpush.msra.mxu0 0.0
    %1838 = vmatpush.msra.mxu0 0.0
    %1839 = vmatpush.msra.mxu0 0.0
    %1840 = vmatpush.msra.mxu0 %v1197
    %1841 = vmatpush.msra.mxu0 %v1195
    %1842 = vmatpush.msra.mxu0 %v1193
    %1843 = vmatpush.msra.mxu0 %v1191
    %1844 = vmatpush.msra.mxu0 %v1189
    %1845 = vmatpush.msra.mxu0 %v1187
    %1846 = vmatpush.msra.mxu0 %v1185
    %1847 = vmatpush.msra.mxu0 %v1183
    %1848 = vmatmul.f32.gmra.mxu0 %v1830
    %v1849 = vpop.f32.mrf.mxu0
    %v1850 = vadd.f32 0.0, %v1849
    %1851 = vdwg.mxu0
    %1852 = vmatpush.msra.mxu0 0.0
    %1853 = vmatpush.msra.mxu0 0.0
    %1854 = vmatpush.msra.mxu0 0.0
    %1855 = vmatpush.msra.mxu0 0.0
    %1856 = vmatpush.msra.mxu0 0.0
    %1857 = vmatpush.msra.mxu0 0.0
    %1858 = vmatpush.msra.mxu0 0.0
    %1859 = vmatpush.msra.mxu0 0.0
    %1860 = vmatpush.msra.mxu0 %v1198
    %1861 = vmatpush.msra.mxu0 %v1196
    %1862 = vmatpush.msra.mxu0 %v1194
    %1863 = vmatpush.msra.mxu0 %v1192
    %1864 = vmatpush.msra.mxu0 %v1190
    %1865 = vmatpush.msra.mxu0 %v1188
    %1866 = vmatpush.msra.mxu0 %v1186
    %1867 = vmatpush.msra.mxu0 %v1184
    %1868 = vmatmul.f32.gmra.mxu0 %v1830
    %v1869 = vpop.f32.mrf.mxu0
    %v1870 = vadd.f32 0.0, %v1869
    %1871 = vdwg.mxu0
    %v1874 = vrot.slane %v1850, 4
    %v1875 = vrot.slane %v1870, 4
    %v1878 = vadd.f32 %v1158, %v1874
    %v1879 = vadd.f32 %v1181, %v1875
    %v1880 = vxor.u32 %v1878, 2147483648
    %v1881 = vmul.f32 %v1880, 1.442695
    %v1882 = vpow.pop %v1881
    %v1883 = vadd.f32 %v1882, 1.0
    %v1884 = vrcp.pop %v1883
    %v1885 = vmul.f32 %v1883, %v1884
    %v1886 = vsub.f32 1.0, %v1885
    %v1887 = vmul.f32 %v1884, %v1886
    %v1888 = vadd.f32 %v1884, %v1887
    %vm1889 = vweird.f32 %v1883
    %vm1890 = vweird.f32 %v1884
    %vm1891 = vmor %vm1889, %vm1890
    %v1892 = vsel %vm1891, %v1884, %v1888
    %v1893 = vand.u32 2147483647, %v1883
    %vm1894 = vcmp.eq.f32.partialorder %v1893, 8.507059e+37
    %v1895 = vand.u32 %v1883, 2147483648
    %v1896 = vor.u32 1.1754944e-38, %v1895
    %v1897 = vsel %vm1894, %v1896, %v1892
    %v1898 = vmul.f32 1.0, %v1897
    %v1899 = vtanh.pop %v1879
    %v1900 = vxor.u32 %v1879, 2147483648
    %v1901 = vmul.f32 %v1900, 1.442695
    %v1902 = vpow.pop %v1901
    %v1903 = vadd.f32 %v1902, 1.0
    %v1904 = vrcp.pop %v1903
    %v1905 = vmul.f32 %v1903, %v1904
    %v1906 = vsub.f32 1.0, %v1905
    %v1907 = vmul.f32 %v1904, %v1906
    %v1908 = vadd.f32 %v1904, %v1907
    %vm1909 = vweird.f32 %v1903
    %vm1910 = vweird.f32 %v1904
    %vm1911 = vmor %vm1909, %vm1910
    %v1912 = vsel %vm1911, %v1904, %v1908
    %v1913 = vand.u32 2147483647, %v1903
    %vm1914 = vcmp.eq.f32.partialorder %v1913, 8.507059e+37
    %v1915 = vand.u32 %v1903, 2147483648
    %v1916 = vor.u32 1.1754944e-38, %v1915
    %v1917 = vsel %vm1914, %v1916, %v1912
    %v1918 = vmul.f32 1.0, %v1917
    %v1920 = vrot.slane %v1819, 6
    %v1922 = vmul.f32 %v1898, %v1920
    %v1923 = vmul.f32 %v1898, %v1899
    %1925 = vrot.lane.b32.xlu0 %v1923, 64
    %v1926 = vpop.permute.xlu0 %1925
    %v1928 = vadd.f32 %v1922, %v1926
    %v1929 = vtanh.pop %v1928
    %v1930 = vmul.f32 %v1918, %v1929
    %1932 = vrot.lane.b32.xlu0 %v1930, 64
    %v1933 = vpop.permute.xlu0 %1932
    %1935 = vst.msk [vmem:[#allocation2 + $0x8] sm:$0x30] %vm568, %v1933
    %v1936 = vrot.slane %v1930, 4
    %1937 = vrot.lane.b32.xlu0 %v1936, 64
    %v1938 = vpop.permute.xlu0 %1937
    %v1939 = vsel %vm253, %v1938, 0
    %1941 = vmatpush.msra.mxu0 0.0
    %1942 = vmatpush.msra.mxu0 0.0
    %1943 = vmatpush.msra.mxu0 0.0
    %1944 = vmatpush.msra.mxu0 0.0
    %1945 = vmatpush.msra.mxu0 0.0
    %1946 = vmatpush.msra.mxu0 0.0
    %1947 = vmatpush.msra.mxu0 0.0
    %1948 = vmatpush.msra.mxu0 0.0
    %1949 = vmatpush.msra.mxu0 %v1197
    %1950 = vmatpush.msra.mxu0 %v1195
    %1951 = vmatpush.msra.mxu0 %v1193
    %1952 = vmatpush.msra.mxu0 %v1191
    %1953 = vmatpush.msra.mxu0 %v1189
    %1954 = vmatpush.msra.mxu0 %v1187
    %1955 = vmatpush.msra.mxu0 %v1185
    %1956 = vmatpush.msra.mxu0 %v1183
    %1957 = vmatmul.f32.gmra.mxu0 %v1939
    %v1958 = vpop.f32.mrf.mxu0
    %v1959 = vadd.f32 0.0, %v1958
    %1960 = vdwg.mxu0
    %1961 = vmatpush.msra.mxu0 0.0
    %1962 = vmatpush.msra.mxu0 0.0
    %1963 = vmatpush.msra.mxu0 0.0
    %1964 = vmatpush.msra.mxu0 0.0
    %1965 = vmatpush.msra.mxu0 0.0
    %1966 = vmatpush.msra.mxu0 0.0
    %1967 = vmatpush.msra.mxu0 0.0
    %1968 = vmatpush.msra.mxu0 0.0
    %1969 = vmatpush.msra.mxu0 %v1198
    %1970 = vmatpush.msra.mxu0 %v1196
    %1971 = vmatpush.msra.mxu0 %v1194
    %1972 = vmatpush.msra.mxu0 %v1192
    %1973 = vmatpush.msra.mxu0 %v1190
    %1974 = vmatpush.msra.mxu0 %v1188
    %1975 = vmatpush.msra.mxu0 %v1186
    %1976 = vmatpush.msra.mxu0 %v1184
    %1977 = vmatmul.f32.gmra.mxu0 %v1939
    %v1978 = vpop.f32.mrf.mxu0
    %v1979 = vadd.f32 0.0, %v1978
    %1980 = vdwg.mxu0
    %v1983 = vrot.slane %v1959, 2
    %v1984 = vrot.slane %v1979, 2
    %v1987 = vadd.f32 %v1158, %v1983
    %v1988 = vadd.f32 %v1181, %v1984
    %v1989 = vxor.u32 %v1987, 2147483648
    %v1990 = vmul.f32 %v1989, 1.442695
    %v1991 = vpow.pop %v1990
    %v1992 = vadd.f32 %v1991, 1.0
    %v1993 = vrcp.pop %v1992
    %v1994 = vmul.f32 %v1992, %v1993
    %v1995 = vsub.f32 1.0, %v1994
    %v1996 = vmul.f32 %v1993, %v1995
    %v1997 = vadd.f32 %v1993, %v1996
    %vm1998 = vweird.f32 %v1992
    %vm1999 = vweird.f32 %v1993
    %vm2000 = vmor %vm1998, %vm1999
    %v2001 = vsel %vm2000, %v1993, %v1997
    %v2002 = vand.u32 2147483647, %v1992
    %vm2003 = vcmp.eq.f32.partialorder %v2002, 8.507059e+37
    %v2004 = vand.u32 %v1992, 2147483648
    %v2005 = vor.u32 1.1754944e-38, %v2004
    %v2006 = vsel %vm2003, %v2005, %v2001
    %v2007 = vmul.f32 1.0, %v2006
    %v2008 = vtanh.pop %v1988
    %v2009 = vxor.u32 %v1988, 2147483648
    %v2010 = vmul.f32 %v2009, 1.442695
    %v2011 = vpow.pop %v2010
    %v2012 = vadd.f32 %v2011, 1.0
    %v2013 = vrcp.pop %v2012
    %v2014 = vmul.f32 %v2012, %v2013
    %v2015 = vsub.f32 1.0, %v2014
    %v2016 = vmul.f32 %v2013, %v2015
    %v2017 = vadd.f32 %v2013, %v2016
    %vm2018 = vweird.f32 %v2012
    %vm2019 = vweird.f32 %v2013
    %vm2020 = vmor %vm2018, %vm2019
    %v2021 = vsel %vm2020, %v2013, %v2017
    %v2022 = vand.u32 2147483647, %v2012
    %vm2023 = vcmp.eq.f32.partialorder %v2022, 8.507059e+37
    %v2024 = vand.u32 %v2012, 2147483648
    %v2025 = vor.u32 1.1754944e-38, %v2024
    %v2026 = vsel %vm2023, %v2025, %v2021
    %v2027 = vmul.f32 1.0, %v2026
    %v2029 = vrot.slane %v1928, 6
    %v2031 = vmul.f32 %v2007, %v2029
    %v2032 = vmul.f32 %v2007, %v2008
    %2034 = vrot.lane.b32.xlu0 %v2032, 64
    %v2035 = vpop.permute.xlu0 %2034
    %v2037 = vadd.f32 %v2031, %v2035
    %v2038 = vtanh.pop %v2037
    %v2039 = vmul.f32 %v2027, %v2038
    %2041 = vrot.lane.b32.xlu0 %v2039, 64
    %v2042 = vpop.permute.xlu0 %2041
    %2044 = vst.msk [vmem:[#allocation2 + $0x8] sm:$0xc0] %vm678, %v2042
    %v2045 = vld [vmem:[#allocation2] sm:$0xff]
    %v2046 = vld [vmem:[#allocation2 + $0x8] sm:$0xff]
    %v2047 = vld [vmem:[#allocation11] sm:$0xff]
    %v2048 = vld [vmem:[#allocation11 + $0x8] sm:$0xff]
    %v2049 = vld [vmem:[#allocation11 + $0x10] sm:$0xff]
    %v2050 = vld [vmem:[#allocation11 + $0x18] sm:$0xff]
    %v2051 = vld [vmem:[#allocation11 + $0x20] sm:$0xff]
    %v2052 = vld [vmem:[#allocation11 + $0x28] sm:$0xff]
    %v2053 = vld [vmem:[#allocation11 + $0x30] sm:$0xff]
    %v2054 = vld [vmem:[#allocation11 + $0x38] sm:$0xff]
    %v2055 = vld [vmem:[#allocation11 + $0x40] sm:$0xff]
    %v2056 = vld [vmem:[#allocation11 + $0x48] sm:$0xff]
    %v2057 = vld [vmem:[#allocation11 + $0x50] sm:$0xff]
    %v2058 = vld [vmem:[#allocation11 + $0x58] sm:$0xff]
    %v2059 = vld [vmem:[#allocation11 + $0x60] sm:$0xff]
    %v2060 = vld [vmem:[#allocation11 + $0x68] sm:$0xff]
    %v2061 = vld [vmem:[#allocation11 + $0x70] sm:$0xff]
    %v2062 = vld [vmem:[#allocation11 + $0x78] sm:$0xff]
    %v2063 = vld [vmem:[#allocation14] sm:$0x3]
    %v2065 = vperm.slane %v2063, 0
    %v2066 = vperm.slane %v2063, 1
    %v2070 = vsel %vm253, %v2045, 0
    %v2073 = vsel %vm253, %v2046, 0
    %2075 = vmatpush.msra.mxu0 0.0
    %2076 = vmatpush.msra.mxu0 0.0
    %2077 = vmatpush.msra.mxu0 0.0
    %2078 = vmatpush.msra.mxu0 0.0
    %2079 = vmatpush.msra.mxu0 0.0
    %2080 = vmatpush.msra.mxu0 0.0
    %2081 = vmatpush.msra.mxu0 0.0
    %2082 = vmatpush.msra.mxu0 0.0
    %2083 = vmatpush.msra.mxu0 %v2061
    %2084 = vmatpush.msra.mxu0 %v2059
    %2085 = vmatpush.msra.mxu0 %v2057
    %2086 = vmatpush.msra.mxu0 %v2055
    %2087 = vmatpush.msra.mxu0 %v2053
    %2088 = vmatpush.msra.mxu0 %v2051
    %2089 = vmatpush.msra.mxu0 %v2049
    %2090 = vmatpush.msra.mxu0 %v2047
    %2091 = vmatmul.f32.gmra.mxu0 %v2070
    %v2092 = vpop.f32.mrf.mxu0
    %v2093 = vadd.f32 %v2065, %v2092
    %2094 = vmatmul.f32.gmra.mxu0 %v2073
    %v2095 = vpop.f32.mrf.mxu0
    %v2096 = vadd.f32 %v2065, %v2095
    %2097 = vdwg.mxu0
    %2098 = vmatpush.msra.mxu0 0.0
    %2099 = vmatpush.msra.mxu0 0.0
    %2100 = vmatpush.msra.mxu0 0.0
    %2101 = vmatpush.msra.mxu0 0.0
    %2102 = vmatpush.msra.mxu0 0.0
    %2103 = vmatpush.msra.mxu0 0.0
    %2104 = vmatpush.msra.mxu0 0.0
    %2105 = vmatpush.msra.mxu0 0.0
    %2106 = vmatpush.msra.mxu0 %v2062
    %2107 = vmatpush.msra.mxu0 %v2060
    %2108 = vmatpush.msra.mxu0 %v2058
    %2109 = vmatpush.msra.mxu0 %v2056
    %2110 = vmatpush.msra.mxu0 %v2054
    %2111 = vmatpush.msra.mxu0 %v2052
    %2112 = vmatpush.msra.mxu0 %v2050
    %2113 = vmatpush.msra.mxu0 %v2048
    %2114 = vmatmul.f32.gmra.mxu0 %v2070
    %v2115 = vpop.f32.mrf.mxu0
    %v2116 = vadd.f32 %v2066, %v2115
    %2117 = vmatmul.f32.gmra.mxu0 %v2073
    %v2118 = vpop.f32.mrf.mxu0
    %v2119 = vadd.f32 %v2066, %v2118
    %2120 = vdwg.mxu0
    %v2121 = vld [vmem:[#allocation12] sm:$0xff]
    %v2122 = vld [vmem:[#allocation12 + $0x8] sm:$0xff]
    %v2123 = vld [vmem:[#allocation12 + $0x10] sm:$0xff]
    %v2124 = vld [vmem:[#allocation12 + $0x18] sm:$0xff]
    %v2125 = vld [vmem:[#allocation12 + $0x20] sm:$0xff]
    %v2126 = vld [vmem:[#allocation12 + $0x28] sm:$0xff]
    %v2127 = vld [vmem:[#allocation12 + $0x30] sm:$0xff]
    %v2128 = vld [vmem:[#allocation12 + $0x38] sm:$0xff]
    %v2129 = vld [vmem:[#allocation12 + $0x40] sm:$0xff]
    %v2130 = vld [vmem:[#allocation12 + $0x48] sm:$0xff]
    %v2131 = vld [vmem:[#allocation12 + $0x50] sm:$0xff]
    %v2132 = vld [vmem:[#allocation12 + $0x58] sm:$0xff]
    %v2133 = vld [vmem:[#allocation12 + $0x60] sm:$0xff]
    %v2134 = vld [vmem:[#allocation12 + $0x68] sm:$0xff]
    %v2135 = vld [vmem:[#allocation12 + $0x70] sm:$0xff]
    %v2136 = vld [vmem:[#allocation12 + $0x78] sm:$0xff]
    %2137 = vmatpush.msra.mxu0 0.0
    %2138 = vmatpush.msra.mxu0 0.0
    %2139 = vmatpush.msra.mxu0 0.0
    %2140 = vmatpush.msra.mxu0 0.0
    %2141 = vmatpush.msra.mxu0 0.0
    %2142 = vmatpush.msra.mxu0 0.0
    %2143 = vmatpush.msra.mxu0 0.0
    %2144 = vmatpush.msra.mxu0 0.0
    %2145 = vmatpush.msra.mxu0 %v2135
    %2146 = vmatpush.msra.mxu0 %v2133
    %2147 = vmatpush.msra.mxu0 %v2131
    %2148 = vmatpush.msra.mxu0 %v2129
    %2149 = vmatpush.msra.mxu0 %v2127
    %2150 = vmatpush.msra.mxu0 %v2125
    %2151 = vmatpush.msra.mxu0 %v2123
    %2152 = vmatpush.msra.mxu0 %v2121
    %2153 = vmatmul.f32.gmra.mxu0 %v255
    %v2154 = vpop.f32.mrf.mxu0
    %v2155 = vadd.f32 0.0, %v2154
    %2156 = vdwg.mxu0
    %2157 = vmatpush.msra.mxu0 0.0
    %2158 = vmatpush.msra.mxu0 0.0
    %2159 = vmatpush.msra.mxu0 0.0
    %2160 = vmatpush.msra.mxu0 0.0
    %2161 = vmatpush.msra.mxu0 0.0
    %2162 = vmatpush.msra.mxu0 0.0
    %2163 = vmatpush.msra.mxu0 0.0
    %2164 = vmatpush.msra.mxu0 0.0
    %2165 = vmatpush.msra.mxu0 %v2136
    %2166 = vmatpush.msra.mxu0 %v2134
    %2167 = vmatpush.msra.mxu0 %v2132
    %2168 = vmatpush.msra.mxu0 %v2130
    %2169 = vmatpush.msra.mxu0 %v2128
    %2170 = vmatpush.msra.mxu0 %v2126
    %2171 = vmatpush.msra.mxu0 %v2124
    %2172 = vmatpush.msra.mxu0 %v2122
    %2173 = vmatmul.f32.gmra.mxu0 %v255
    %v2174 = vpop.f32.mrf.mxu0
    %v2175 = vadd.f32 0.0, %v2174
    %2176 = vdwg.mxu0
    %v2177 = vadd.f32 %v2093, %v2155
    %v2178 = vadd.f32 %v2116, %v2175
    %v2179 = vxor.u32 %v2177, 2147483648
    %v2180 = vmul.f32 %v2179, 1.442695
    %v2181 = vpow.pop %v2180
    %v2182 = vadd.f32 %v2181, 1.0
    %v2183 = vrcp.pop %v2182
    %v2184 = vmul.f32 %v2182, %v2183
    %v2185 = vsub.f32 1.0, %v2184
    %v2186 = vmul.f32 %v2183, %v2185
    %v2187 = vadd.f32 %v2183, %v2186
    %vm2188 = vweird.f32 %v2182
    %vm2189 = vweird.f32 %v2183
    %vm2190 = vmor %vm2188, %vm2189
    %v2191 = vsel %vm2190, %v2183, %v2187
    %v2192 = vand.u32 2147483647, %v2182
    %vm2193 = vcmp.eq.f32.partialorder %v2192, 8.507059e+37
    %v2194 = vand.u32 %v2182, 2147483648
    %v2195 = vor.u32 1.1754944e-38, %v2194
    %v2196 = vsel %vm2193, %v2195, %v2191
    %v2197 = vmul.f32 1.0, %v2196
    %v2198 = vtanh.pop %v2178
    %v2199 = vxor.u32 %v2178, 2147483648
    %v2200 = vmul.f32 %v2199, 1.442695
    %v2201 = vpow.pop %v2200
    %v2202 = vadd.f32 %v2201, 1.0
    %v2203 = vrcp.pop %v2202
    %v2204 = vmul.f32 %v2202, %v2203
    %v2205 = vsub.f32 1.0, %v2204
    %v2206 = vmul.f32 %v2203, %v2205
    %v2207 = vadd.f32 %v2203, %v2206
    %vm2208 = vweird.f32 %v2202
    %vm2209 = vweird.f32 %v2203
    %vm2210 = vmor %vm2208, %vm2209
    %v2211 = vsel %vm2210, %v2203, %v2207
    %v2212 = vand.u32 2147483647, %v2202
    %vm2213 = vcmp.eq.f32.partialorder %v2212, 8.507059e+37
    %v2214 = vand.u32 %v2202, 2147483648
    %v2215 = vor.u32 1.1754944e-38, %v2214
    %v2216 = vsel %vm2213, %v2215, %v2211
    %v2217 = vmul.f32 1.0, %v2216
    %v2218 = vmul.f32 %v2197, 0.0
    %v2219 = vmul.f32 %v2197, %v2198
    %2221 = vrot.lane.b32.xlu0 %v2219, 64
    %v2222 = vpop.permute.xlu0 %2221
    %v2224 = vadd.f32 %v2218, %v2222
    %v2225 = vtanh.pop %v2224
    %v2226 = vmul.f32 %v2217, %v2225
    %2228 = vrot.lane.b32.xlu0 %v2226, 64
    %v2229 = vpop.permute.xlu0 %2228
    %2231 = vst.msk [vmem:[#allocation2] sm:$0x3] %vm351, %v2229
    %v2232 = vsel %vm253, %v2229, 0
    %2234 = vmatpush.msra.mxu0 0.0
    %2235 = vmatpush.msra.mxu0 0.0
    %2236 = vmatpush.msra.mxu0 0.0
    %2237 = vmatpush.msra.mxu0 0.0
    %2238 = vmatpush.msra.mxu0 0.0
    %2239 = vmatpush.msra.mxu0 0.0
    %2240 = vmatpush.msra.mxu0 0.0
    %2241 = vmatpush.msra.mxu0 0.0
    %2242 = vmatpush.msra.mxu0 %v2135
    %2243 = vmatpush.msra.mxu0 %v2133
    %2244 = vmatpush.msra.mxu0 %v2131
    %2245 = vmatpush.msra.mxu0 %v2129
    %2246 = vmatpush.msra.mxu0 %v2127
    %2247 = vmatpush.msra.mxu0 %v2125
    %2248 = vmatpush.msra.mxu0 %v2123
    %2249 = vmatpush.msra.mxu0 %v2121
    %2250 = vmatmul.f32.gmra.mxu0 %v2232
    %v2251 = vpop.f32.mrf.mxu0
    %v2252 = vadd.f32 0.0, %v2251
    %2253 = vdwg.mxu0
    %2254 = vmatpush.msra.mxu0 0.0
    %2255 = vmatpush.msra.mxu0 0.0
    %2256 = vmatpush.msra.mxu0 0.0
    %2257 = vmatpush.msra.mxu0 0.0
    %2258 = vmatpush.msra.mxu0 0.0
    %2259 = vmatpush.msra.mxu0 0.0
    %2260 = vmatpush.msra.mxu0 0.0
    %2261 = vmatpush.msra.mxu0 0.0
    %2262 = vmatpush.msra.mxu0 %v2136
    %2263 = vmatpush.msra.mxu0 %v2134
    %2264 = vmatpush.msra.mxu0 %v2132
    %2265 = vmatpush.msra.mxu0 %v2130
    %2266 = vmatpush.msra.mxu0 %v2128
    %2267 = vmatpush.msra.mxu0 %v2126
    %2268 = vmatpush.msra.mxu0 %v2124
    %2269 = vmatpush.msra.mxu0 %v2122
    %2270 = vmatmul.f32.gmra.mxu0 %v2232
    %v2271 = vpop.f32.mrf.mxu0
    %v2272 = vadd.f32 0.0, %v2271
    %2273 = vdwg.mxu0
    %v2276 = vrot.slane %v2252, 6
    %v2277 = vrot.slane %v2272, 6
    %v2280 = vadd.f32 %v2093, %v2276
    %v2281 = vadd.f32 %v2116, %v2277
    %v2282 = vxor.u32 %v2280, 2147483648
    %v2283 = vmul.f32 %v2282, 1.442695
    %v2284 = vpow.pop %v2283
    %v2285 = vadd.f32 %v2284, 1.0
    %v2286 = vrcp.pop %v2285
    %v2287 = vmul.f32 %v2285, %v2286
    %v2288 = vsub.f32 1.0, %v2287
    %v2289 = vmul.f32 %v2286, %v2288
    %v2290 = vadd.f32 %v2286, %v2289
    %vm2291 = vweird.f32 %v2285
    %vm2292 = vweird.f32 %v2286
    %vm2293 = vmor %vm2291, %vm2292
    %v2294 = vsel %vm2293, %v2286, %v2290
    %v2295 = vand.u32 2147483647, %v2285
    %vm2296 = vcmp.eq.f32.partialorder %v2295, 8.507059e+37
    %v2297 = vand.u32 %v2285, 2147483648
    %v2298 = vor.u32 1.1754944e-38, %v2297
    %v2299 = vsel %vm2296, %v2298, %v2294
    %v2300 = vmul.f32 1.0, %v2299
    %v2301 = vtanh.pop %v2281
    %v2302 = vxor.u32 %v2281, 2147483648
    %v2303 = vmul.f32 %v2302, 1.442695
    %v2304 = vpow.pop %v2303
    %v2305 = vadd.f32 %v2304, 1.0
    %v2306 = vrcp.pop %v2305
    %v2307 = vmul.f32 %v2305, %v2306
    %v2308 = vsub.f32 1.0, %v2307
    %v2309 = vmul.f32 %v2306, %v2308
    %v2310 = vadd.f32 %v2306, %v2309
    %vm2311 = vweird.f32 %v2305
    %vm2312 = vweird.f32 %v2306
    %vm2313 = vmor %vm2311, %vm2312
    %v2314 = vsel %vm2313, %v2306, %v2310
    %v2315 = vand.u32 2147483647, %v2305
    %vm2316 = vcmp.eq.f32.partialorder %v2315, 8.507059e+37
    %v2317 = vand.u32 %v2305, 2147483648
    %v2318 = vor.u32 1.1754944e-38, %v2317
    %v2319 = vsel %vm2316, %v2318, %v2314
    %v2320 = vmul.f32 1.0, %v2319
    %v2322 = vrot.slane %v2224, 6
    %v2324 = vmul.f32 %v2300, %v2322
    %v2325 = vmul.f32 %v2300, %v2301
    %2327 = vrot.lane.b32.xlu0 %v2325, 64
    %v2328 = vpop.permute.xlu0 %2327
    %v2330 = vadd.f32 %v2324, %v2328
    %v2331 = vtanh.pop %v2330
    %v2332 = vmul.f32 %v2320, %v2331
    %2334 = vrot.lane.b32.xlu0 %v2332, 64
    %v2335 = vpop.permute.xlu0 %2334
    %2337 = vst.msk [vmem:[#allocation2] sm:$0xc] %vm458, %v2335
    %v2338 = vrot.slane %v2332, 2
    %2339 = vrot.lane.b32.xlu0 %v2338, 64
    %v2340 = vpop.permute.xlu0 %2339
    %v2341 = vsel %vm253, %v2340, 0
    %2343 = vmatpush.msra.mxu0 0.0
    %2344 = vmatpush.msra.mxu0 0.0
    %2345 = vmatpush.msra.mxu0 0.0
    %2346 = vmatpush.msra.mxu0 0.0
    %2347 = vmatpush.msra.mxu0 0.0
    %2348 = vmatpush.msra.mxu0 0.0
    %2349 = vmatpush.msra.mxu0 0.0
    %2350 = vmatpush.msra.mxu0 0.0
    %2351 = vmatpush.msra.mxu0 %v2135
    %2352 = vmatpush.msra.mxu0 %v2133
    %2353 = vmatpush.msra.mxu0 %v2131
    %2354 = vmatpush.msra.mxu0 %v2129
    %2355 = vmatpush.msra.mxu0 %v2127
    %2356 = vmatpush.msra.mxu0 %v2125
    %2357 = vmatpush.msra.mxu0 %v2123
    %2358 = vmatpush.msra.mxu0 %v2121
    %2359 = vmatmul.f32.gmra.mxu0 %v2341
    %v2360 = vpop.f32.mrf.mxu0
    %v2361 = vadd.f32 0.0, %v2360
    %2362 = vdwg.mxu0
    %2363 = vmatpush.msra.mxu0 0.0
    %2364 = vmatpush.msra.mxu0 0.0
    %2365 = vmatpush.msra.mxu0 0.0
    %2366 = vmatpush.msra.mxu0 0.0
    %2367 = vmatpush.msra.mxu0 0.0
    %2368 = vmatpush.msra.mxu0 0.0
    %2369 = vmatpush.msra.mxu0 0.0
    %2370 = vmatpush.msra.mxu0 0.0
    %2371 = vmatpush.msra.mxu0 %v2136
    %2372 = vmatpush.msra.mxu0 %v2134
    %2373 = vmatpush.msra.mxu0 %v2132
    %2374 = vmatpush.msra.mxu0 %v2130
    %2375 = vmatpush.msra.mxu0 %v2128
    %2376 = vmatpush.msra.mxu0 %v2126
    %2377 = vmatpush.msra.mxu0 %v2124
    %2378 = vmatpush.msra.mxu0 %v2122
    %2379 = vmatmul.f32.gmra.mxu0 %v2341
    %v2380 = vpop.f32.mrf.mxu0
    %v2381 = vadd.f32 0.0, %v2380
    %2382 = vdwg.mxu0
    %v2385 = vrot.slane %v2361, 4
    %v2386 = vrot.slane %v2381, 4
    %v2389 = vadd.f32 %v2093, %v2385
    %v2390 = vadd.f32 %v2116, %v2386
    %v2391 = vxor.u32 %v2389, 2147483648
    %v2392 = vmul.f32 %v2391, 1.442695
    %v2393 = vpow.pop %v2392
    %v2394 = vadd.f32 %v2393, 1.0
    %v2395 = vrcp.pop %v2394
    %v2396 = vmul.f32 %v2394, %v2395
    %v2397 = vsub.f32 1.0, %v2396
    %v2398 = vmul.f32 %v2395, %v2397
    %v2399 = vadd.f32 %v2395, %v2398
    %vm2400 = vweird.f32 %v2394
    %vm2401 = vweird.f32 %v2395
    %vm2402 = vmor %vm2400, %vm2401
    %v2403 = vsel %vm2402, %v2395, %v2399
    %v2404 = vand.u32 2147483647, %v2394
    %vm2405 = vcmp.eq.f32.partialorder %v2404, 8.507059e+37
    %v2406 = vand.u32 %v2394, 2147483648
    %v2407 = vor.u32 1.1754944e-38, %v2406
    %v2408 = vsel %vm2405, %v2407, %v2403
    %v2409 = vmul.f32 1.0, %v2408
    %v2410 = vtanh.pop %v2390
    %v2411 = vxor.u32 %v2390, 2147483648
    %v2412 = vmul.f32 %v2411, 1.442695
    %v2413 = vpow.pop %v2412
    %v2414 = vadd.f32 %v2413, 1.0
    %v2415 = vrcp.pop %v2414
    %v2416 = vmul.f32 %v2414, %v2415
    %v2417 = vsub.f32 1.0, %v2416
    %v2418 = vmul.f32 %v2415, %v2417
    %v2419 = vadd.f32 %v2415, %v2418
    %vm2420 = vweird.f32 %v2414
    %vm2421 = vweird.f32 %v2415
    %vm2422 = vmor %vm2420, %vm2421
    %v2423 = vsel %vm2422, %v2415, %v2419
    %v2424 = vand.u32 2147483647, %v2414
    %vm2425 = vcmp.eq.f32.partialorder %v2424, 8.507059e+37
    %v2426 = vand.u32 %v2414, 2147483648
    %v2427 = vor.u32 1.1754944e-38, %v2426
    %v2428 = vsel %vm2425, %v2427, %v2423
    %v2429 = vmul.f32 1.0, %v2428
    %v2431 = vrot.slane %v2330, 6
    %v2433 = vmul.f32 %v2409, %v2431
    %v2434 = vmul.f32 %v2409, %v2410
    %2436 = vrot.lane.b32.xlu0 %v2434, 64
    %v2437 = vpop.permute.xlu0 %2436
    %v2439 = vadd.f32 %v2433, %v2437
    %v2440 = vtanh.pop %v2439
    %v2441 = vmul.f32 %v2429, %v2440
    %2443 = vrot.lane.b32.xlu0 %v2441, 64
    %v2444 = vpop.permute.xlu0 %2443
    %2446 = vst.msk [vmem:[#allocation2] sm:$0x30] %vm568, %v2444
    %v2447 = vrot.slane %v2441, 4
    %2448 = vrot.lane.b32.xlu0 %v2447, 64
    %v2449 = vpop.permute.xlu0 %2448
    %v2450 = vsel %vm253, %v2449, 0
    %2452 = vmatpush.msra.mxu0 0.0
    %2453 = vmatpush.msra.mxu0 0.0
    %2454 = vmatpush.msra.mxu0 0.0
    %2455 = vmatpush.msra.mxu0 0.0
    %2456 = vmatpush.msra.mxu0 0.0
    %2457 = vmatpush.msra.mxu0 0.0
    %2458 = vmatpush.msra.mxu0 0.0
    %2459 = vmatpush.msra.mxu0 0.0
    %2460 = vmatpush.msra.mxu0 %v2135
    %2461 = vmatpush.msra.mxu0 %v2133
    %2462 = vmatpush.msra.mxu0 %v2131
    %2463 = vmatpush.msra.mxu0 %v2129
    %2464 = vmatpush.msra.mxu0 %v2127
    %2465 = vmatpush.msra.mxu0 %v2125
    %2466 = vmatpush.msra.mxu0 %v2123
    %2467 = vmatpush.msra.mxu0 %v2121
    %2468 = vmatmul.f32.gmra.mxu0 %v2450
    %v2469 = vpop.f32.mrf.mxu0
    %v2470 = vadd.f32 0.0, %v2469
    %2471 = vdwg.mxu0
    %2472 = vmatpush.msra.mxu0 0.0
    %2473 = vmatpush.msra.mxu0 0.0
    %2474 = vmatpush.msra.mxu0 0.0
    %2475 = vmatpush.msra.mxu0 0.0
    %2476 = vmatpush.msra.mxu0 0.0
    %2477 = vmatpush.msra.mxu0 0.0
    %2478 = vmatpush.msra.mxu0 0.0
    %2479 = vmatpush.msra.mxu0 0.0
    %2480 = vmatpush.msra.mxu0 %v2136
    %2481 = vmatpush.msra.mxu0 %v2134
    %2482 = vmatpush.msra.mxu0 %v2132
    %2483 = vmatpush.msra.mxu0 %v2130
    %2484 = vmatpush.msra.mxu0 %v2128
    %2485 = vmatpush.msra.mxu0 %v2126
    %2486 = vmatpush.msra.mxu0 %v2124
    %2487 = vmatpush.msra.mxu0 %v2122
    %2488 = vmatmul.f32.gmra.mxu0 %v2450
    %v2489 = vpop.f32.mrf.mxu0
    %v2490 = vadd.f32 0.0, %v2489
    %2491 = vdwg.mxu0
    %v2494 = vrot.slane %v2470, 2
    %v2495 = vrot.slane %v2490, 2
    %v2498 = vadd.f32 %v2093, %v2494
    %v2499 = vadd.f32 %v2116, %v2495
    %v2500 = vxor.u32 %v2498, 2147483648
    %v2501 = vmul.f32 %v2500, 1.442695
    %v2502 = vpow.pop %v2501
    %v2503 = vadd.f32 %v2502, 1.0
    %v2504 = vrcp.pop %v2503
    %v2505 = vmul.f32 %v2503, %v2504
    %v2506 = vsub.f32 1.0, %v2505
    %v2507 = vmul.f32 %v2504, %v2506
    %v2508 = vadd.f32 %v2504, %v2507
    %vm2509 = vweird.f32 %v2503
    %vm2510 = vweird.f32 %v2504
    %vm2511 = vmor %vm2509, %vm2510
    %v2512 = vsel %vm2511, %v2504, %v2508
    %v2513 = vand.u32 2147483647, %v2503
    %vm2514 = vcmp.eq.f32.partialorder %v2513, 8.507059e+37
    %v2515 = vand.u32 %v2503, 2147483648
    %v2516 = vor.u32 1.1754944e-38, %v2515
    %v2517 = vsel %vm2514, %v2516, %v2512
    %v2518 = vmul.f32 1.0, %v2517
    %v2519 = vtanh.pop %v2499
    %v2520 = vxor.u32 %v2499, 2147483648
    %v2521 = vmul.f32 %v2520, 1.442695
    %v2522 = vpow.pop %v2521
    %v2523 = vadd.f32 %v2522, 1.0
    %v2524 = vrcp.pop %v2523
    %v2525 = vmul.f32 %v2523, %v2524
    %v2526 = vsub.f32 1.0, %v2525
    %v2527 = vmul.f32 %v2524, %v2526
    %v2528 = vadd.f32 %v2524, %v2527
    %vm2529 = vweird.f32 %v2523
    %vm2530 = vweird.f32 %v2524
    %vm2531 = vmor %vm2529, %vm2530
    %v2532 = vsel %vm2531, %v2524, %v2528
    %v2533 = vand.u32 2147483647, %v2523
    %vm2534 = vcmp.eq.f32.partialorder %v2533, 8.507059e+37
    %v2535 = vand.u32 %v2523, 2147483648
    %v2536 = vor.u32 1.1754944e-38, %v2535
    %v2537 = vsel %vm2534, %v2536, %v2532
    %v2538 = vmul.f32 1.0, %v2537
    %v2540 = vrot.slane %v2439, 6
    %v2542 = vmul.f32 %v2518, %v2540
    %v2543 = vmul.f32 %v2518, %v2519
    %2545 = vrot.lane.b32.xlu0 %v2543, 64
    %v2546 = vpop.permute.xlu0 %2545
    %v2548 = vadd.f32 %v2542, %v2546
    %v2549 = vtanh.pop %v2548
    %v2550 = vmul.f32 %v2538, %v2549
    %2552 = vrot.lane.b32.xlu0 %v2550, 64
    %v2553 = vpop.permute.xlu0 %2552
    %2555 = vst.msk [vmem:[#allocation2] sm:$0xc0] %vm678, %v2553
    %v2556 = vrot.slane %v2550, 6
    %2557 = vrot.lane.b32.xlu0 %v2556, 64
    %v2558 = vpop.permute.xlu0 %2557
    %v2559 = vsel %vm253, %v2558, 0
    %2561 = vmatpush.msra.mxu0 0.0
    %2562 = vmatpush.msra.mxu0 0.0
    %2563 = vmatpush.msra.mxu0 0.0
    %2564 = vmatpush.msra.mxu0 0.0
    %2565 = vmatpush.msra.mxu0 0.0
    %2566 = vmatpush.msra.mxu0 0.0
    %2567 = vmatpush.msra.mxu0 0.0
    %2568 = vmatpush.msra.mxu0 0.0
    %2569 = vmatpush.msra.mxu0 %v2135
    %2570 = vmatpush.msra.mxu0 %v2133
    %2571 = vmatpush.msra.mxu0 %v2131
    %2572 = vmatpush.msra.mxu0 %v2129
    %2573 = vmatpush.msra.mxu0 %v2127
    %2574 = vmatpush.msra.mxu0 %v2125
    %2575 = vmatpush.msra.mxu0 %v2123
    %2576 = vmatpush.msra.mxu0 %v2121
    %2577 = vmatmul.f32.gmra.mxu0 %v2559
    %v2578 = vpop.f32.mrf.mxu0
    %v2579 = vadd.f32 0.0, %v2578
    %2580 = vdwg.mxu0
    %2581 = vmatpush.msra.mxu0 0.0
    %2582 = vmatpush.msra.mxu0 0.0
    %2583 = vmatpush.msra.mxu0 0.0
    %2584 = vmatpush.msra.mxu0 0.0
    %2585 = vmatpush.msra.mxu0 0.0
    %2586 = vmatpush.msra.mxu0 0.0
    %2587 = vmatpush.msra.mxu0 0.0
    %2588 = vmatpush.msra.mxu0 0.0
    %2589 = vmatpush.msra.mxu0 %v2136
    %2590 = vmatpush.msra.mxu0 %v2134
    %2591 = vmatpush.msra.mxu0 %v2132
    %2592 = vmatpush.msra.mxu0 %v2130
    %2593 = vmatpush.msra.mxu0 %v2128
    %2594 = vmatpush.msra.mxu0 %v2126
    %2595 = vmatpush.msra.mxu0 %v2124
    %2596 = vmatpush.msra.mxu0 %v2122
    %2597 = vmatmul.f32.gmra.mxu0 %v2559
    %v2598 = vpop.f32.mrf.mxu0
    %v2599 = vadd.f32 0.0, %v2598
    %2600 = vdwg.mxu0
    %v2601 = vadd.f32 %v2096, %v2579
    %v2602 = vadd.f32 %v2119, %v2599
    %v2603 = vxor.u32 %v2601, 2147483648
    %v2604 = vmul.f32 %v2603, 1.442695
    %v2605 = vpow.pop %v2604
    %v2606 = vadd.f32 %v2605, 1.0
    %v2607 = vrcp.pop %v2606
    %v2608 = vmul.f32 %v2606, %v2607
    %v2609 = vsub.f32 1.0, %v2608
    %v2610 = vmul.f32 %v2607, %v2609
    %v2611 = vadd.f32 %v2607, %v2610
    %vm2612 = vweird.f32 %v2606
    %vm2613 = vweird.f32 %v2607
    %vm2614 = vmor %vm2612, %vm2613
    %v2615 = vsel %vm2614, %v2607, %v2611
    %v2616 = vand.u32 2147483647, %v2606
    %vm2617 = vcmp.eq.f32.partialorder %v2616, 8.507059e+37
    %v2618 = vand.u32 %v2606, 2147483648
    %v2619 = vor.u32 1.1754944e-38, %v2618
    %v2620 = vsel %vm2617, %v2619, %v2615
    %v2621 = vmul.f32 1.0, %v2620
    %v2622 = vtanh.pop %v2602
    %v2623 = vxor.u32 %v2602, 2147483648
    %v2624 = vmul.f32 %v2623, 1.442695
    %v2625 = vpow.pop %v2624
    %v2626 = vadd.f32 %v2625, 1.0
    %v2627 = vrcp.pop %v2626
    %v2628 = vmul.f32 %v2626, %v2627
    %v2629 = vsub.f32 1.0, %v2628
    %v2630 = vmul.f32 %v2627, %v2629
    %v2631 = vadd.f32 %v2627, %v2630
    %vm2632 = vweird.f32 %v2626
    %vm2633 = vweird.f32 %v2627
    %vm2634 = vmor %vm2632, %vm2633
    %v2635 = vsel %vm2634, %v2627, %v2631
    %v2636 = vand.u32 2147483647, %v2626
    %vm2637 = vcmp.eq.f32.partialorder %v2636, 8.507059e+37
    %v2638 = vand.u32 %v2626, 2147483648
    %v2639 = vor.u32 1.1754944e-38, %v2638
    %v2640 = vsel %vm2637, %v2639, %v2635
    %v2641 = vmul.f32 1.0, %v2640
    %v2643 = vrot.slane %v2548, 6
    %v2645 = vmul.f32 %v2621, %v2643
    %v2646 = vmul.f32 %v2621, %v2622
    %2648 = vrot.lane.b32.xlu0 %v2646, 64
    %v2649 = vpop.permute.xlu0 %2648
    %v2651 = vadd.f32 %v2645, %v2649
    %v2652 = vtanh.pop %v2651
    %v2653 = vmul.f32 %v2641, %v2652
    %2655 = vrot.lane.b32.xlu0 %v2653, 64
    %v2656 = vpop.permute.xlu0 %2655
    %2658 = vst.msk [vmem:[#allocation2 + $0x8] sm:$0x3] %vm351, %v2656
    %v2659 = vsel %vm253, %v2656, 0
    %2661 = vmatpush.msra.mxu0 0.0
    %2662 = vmatpush.msra.mxu0 0.0
    %2663 = vmatpush.msra.mxu0 0.0
    %2664 = vmatpush.msra.mxu0 0.0
    %2665 = vmatpush.msra.mxu0 0.0
    %2666 = vmatpush.msra.mxu0 0.0
    %2667 = vmatpush.msra.mxu0 0.0
    %2668 = vmatpush.msra.mxu0 0.0
    %2669 = vmatpush.msra.mxu0 %v2135
    %2670 = vmatpush.msra.mxu0 %v2133
    %2671 = vmatpush.msra.mxu0 %v2131
    %2672 = vmatpush.msra.mxu0 %v2129
    %2673 = vmatpush.msra.mxu0 %v2127
    %2674 = vmatpush.msra.mxu0 %v2125
    %2675 = vmatpush.msra.mxu0 %v2123
    %2676 = vmatpush.msra.mxu0 %v2121
    %2677 = vmatmul.f32.gmra.mxu0 %v2659
    %v2678 = vpop.f32.mrf.mxu0
    %v2679 = vadd.f32 0.0, %v2678
    %2680 = vdwg.mxu0
    %2681 = vmatpush.msra.mxu0 0.0
    %2682 = vmatpush.msra.mxu0 0.0
    %2683 = vmatpush.msra.mxu0 0.0
    %2684 = vmatpush.msra.mxu0 0.0
    %2685 = vmatpush.msra.mxu0 0.0
    %2686 = vmatpush.msra.mxu0 0.0
    %2687 = vmatpush.msra.mxu0 0.0
    %2688 = vmatpush.msra.mxu0 0.0
    %2689 = vmatpush.msra.mxu0 %v2136
    %2690 = vmatpush.msra.mxu0 %v2134
    %2691 = vmatpush.msra.mxu0 %v2132
    %2692 = vmatpush.msra.mxu0 %v2130
    %2693 = vmatpush.msra.mxu0 %v2128
    %2694 = vmatpush.msra.mxu0 %v2126
    %2695 = vmatpush.msra.mxu0 %v2124
    %2696 = vmatpush.msra.mxu0 %v2122
    %2697 = vmatmul.f32.gmra.mxu0 %v2659
    %v2698 = vpop.f32.mrf.mxu0
    %v2699 = vadd.f32 0.0, %v2698
    %2700 = vdwg.mxu0
    %v2703 = vrot.slane %v2679, 6
    %v2704 = vrot.slane %v2699, 6
    %v2707 = vadd.f32 %v2096, %v2703
    %v2708 = vadd.f32 %v2119, %v2704
    %v2709 = vxor.u32 %v2707, 2147483648
    %v2710 = vmul.f32 %v2709, 1.442695
    %v2711 = vpow.pop %v2710
    %v2712 = vadd.f32 %v2711, 1.0
    %v2713 = vrcp.pop %v2712
    %v2714 = vmul.f32 %v2712, %v2713
    %v2715 = vsub.f32 1.0, %v2714
    %v2716 = vmul.f32 %v2713, %v2715
    %v2717 = vadd.f32 %v2713, %v2716
    %vm2718 = vweird.f32 %v2712
    %vm2719 = vweird.f32 %v2713
    %vm2720 = vmor %vm2718, %vm2719
    %v2721 = vsel %vm2720, %v2713, %v2717
    %v2722 = vand.u32 2147483647, %v2712
    %vm2723 = vcmp.eq.f32.partialorder %v2722, 8.507059e+37
    %v2724 = vand.u32 %v2712, 2147483648
    %v2725 = vor.u32 1.1754944e-38, %v2724
    %v2726 = vsel %vm2723, %v2725, %v2721
    %v2727 = vmul.f32 1.0, %v2726
    %v2728 = vtanh.pop %v2708
    %v2729 = vxor.u32 %v2708, 2147483648
    %v2730 = vmul.f32 %v2729, 1.442695
    %v2731 = vpow.pop %v2730
    %v2732 = vadd.f32 %v2731, 1.0
    %v2733 = vrcp.pop %v2732
    %v2734 = vmul.f32 %v2732, %v2733
    %v2735 = vsub.f32 1.0, %v2734
    %v2736 = vmul.f32 %v2733, %v2735
    %v2737 = vadd.f32 %v2733, %v2736
    %vm2738 = vweird.f32 %v2732
    %vm2739 = vweird.f32 %v2733
    %vm2740 = vmor %vm2738, %vm2739
    %v2741 = vsel %vm2740, %v2733, %v2737
    %v2742 = vand.u32 2147483647, %v2732
    %vm2743 = vcmp.eq.f32.partialorder %v2742, 8.507059e+37
    %v2744 = vand.u32 %v2732, 2147483648
    %v2745 = vor.u32 1.1754944e-38, %v2744
    %v2746 = vsel %vm2743, %v2745, %v2741
    %v2747 = vmul.f32 1.0, %v2746
    %v2749 = vrot.slane %v2651, 6
    %v2751 = vmul.f32 %v2727, %v2749
    %v2752 = vmul.f32 %v2727, %v2728
    %2754 = vrot.lane.b32.xlu0 %v2752, 64
    %v2755 = vpop.permute.xlu0 %2754
    %v2757 = vadd.f32 %v2751, %v2755
    %v2758 = vtanh.pop %v2757
    %v2759 = vmul.f32 %v2747, %v2758
    %2761 = vrot.lane.b32.xlu0 %v2759, 64
    %v2762 = vpop.permute.xlu0 %2761
    %2764 = vst.msk [vmem:[#allocation2 + $0x8] sm:$0xc] %vm458, %v2762
    %v2765 = vrot.slane %v2759, 2
    %2766 = vrot.lane.b32.xlu0 %v2765, 64
    %v2767 = vpop.permute.xlu0 %2766
    %v2768 = vsel %vm253, %v2767, 0
    %2770 = vmatpush.msra.mxu0 0.0
    %2771 = vmatpush.msra.mxu0 0.0
    %2772 = vmatpush.msra.mxu0 0.0
    %2773 = vmatpush.msra.mxu0 0.0
    %2774 = vmatpush.msra.mxu0 0.0
    %2775 = vmatpush.msra.mxu0 0.0
    %2776 = vmatpush.msra.mxu0 0.0
    %2777 = vmatpush.msra.mxu0 0.0
    %2778 = vmatpush.msra.mxu0 %v2135
    %2779 = vmatpush.msra.mxu0 %v2133
    %2780 = vmatpush.msra.mxu0 %v2131
    %2781 = vmatpush.msra.mxu0 %v2129
    %2782 = vmatpush.msra.mxu0 %v2127
    %2783 = vmatpush.msra.mxu0 %v2125
    %2784 = vmatpush.msra.mxu0 %v2123
    %2785 = vmatpush.msra.mxu0 %v2121
    %2786 = vmatmul.f32.gmra.mxu0 %v2768
    %v2787 = vpop.f32.mrf.mxu0
    %v2788 = vadd.f32 0.0, %v2787
    %2789 = vdwg.mxu0
    %2790 = vmatpush.msra.mxu0 0.0
    %2791 = vmatpush.msra.mxu0 0.0
    %2792 = vmatpush.msra.mxu0 0.0
    %2793 = vmatpush.msra.mxu0 0.0
    %2794 = vmatpush.msra.mxu0 0.0
    %2795 = vmatpush.msra.mxu0 0.0
    %2796 = vmatpush.msra.mxu0 0.0
    %2797 = vmatpush.msra.mxu0 0.0
    %2798 = vmatpush.msra.mxu0 %v2136
    %2799 = vmatpush.msra.mxu0 %v2134
    %2800 = vmatpush.msra.mxu0 %v2132
    %2801 = vmatpush.msra.mxu0 %v2130
    %2802 = vmatpush.msra.mxu0 %v2128
    %2803 = vmatpush.msra.mxu0 %v2126
    %2804 = vmatpush.msra.mxu0 %v2124
    %2805 = vmatpush.msra.mxu0 %v2122
    %2806 = vmatmul.f32.gmra.mxu0 %v2768
    %v2807 = vpop.f32.mrf.mxu0
    %v2808 = vadd.f32 0.0, %v2807
    %2809 = vdwg.mxu0
    %v2812 = vrot.slane %v2788, 4
    %v2813 = vrot.slane %v2808, 4
    %v2816 = vadd.f32 %v2096, %v2812
    %v2817 = vadd.f32 %v2119, %v2813
    %v2818 = vxor.u32 %v2816, 2147483648
    %v2819 = vmul.f32 %v2818, 1.442695
    %v2820 = vpow.pop %v2819
    %v2821 = vadd.f32 %v2820, 1.0
    %v2822 = vrcp.pop %v2821
    %v2823 = vmul.f32 %v2821, %v2822
    %v2824 = vsub.f32 1.0, %v2823
    %v2825 = vmul.f32 %v2822, %v2824
    %v2826 = vadd.f32 %v2822, %v2825
    %vm2827 = vweird.f32 %v2821
    %vm2828 = vweird.f32 %v2822
    %vm2829 = vmor %vm2827, %vm2828
    %v2830 = vsel %vm2829, %v2822, %v2826
    %v2831 = vand.u32 2147483647, %v2821
    %vm2832 = vcmp.eq.f32.partialorder %v2831, 8.507059e+37
    %v2833 = vand.u32 %v2821, 2147483648
    %v2834 = vor.u32 1.1754944e-38, %v2833
    %v2835 = vsel %vm2832, %v2834, %v2830
    %v2836 = vmul.f32 1.0, %v2835
    %v2837 = vtanh.pop %v2817
    %v2838 = vxor.u32 %v2817, 2147483648
    %v2839 = vmul.f32 %v2838, 1.442695
    %v2840 = vpow.pop %v2839
    %v2841 = vadd.f32 %v2840, 1.0
    %v2842 = vrcp.pop %v2841
    %v2843 = vmul.f32 %v2841, %v2842
    %v2844 = vsub.f32 1.0, %v2843
    %v2845 = vmul.f32 %v2842, %v2844
    %v2846 = vadd.f32 %v2842, %v2845
    %vm2847 = vweird.f32 %v2841
    %vm2848 = vweird.f32 %v2842
    %vm2849 = vmor %vm2847, %vm2848
    %v2850 = vsel %vm2849, %v2842, %v2846
    %v2851 = vand.u32 2147483647, %v2841
    %vm2852 = vcmp.eq.f32.partialorder %v2851, 8.507059e+37
    %v2853 = vand.u32 %v2841, 2147483648
    %v2854 = vor.u32 1.1754944e-38, %v2853
    %v2855 = vsel %vm2852, %v2854, %v2850
    %v2856 = vmul.f32 1.0, %v2855
    %v2858 = vrot.slane %v2757, 6
    %v2860 = vmul.f32 %v2836, %v2858
    %v2861 = vmul.f32 %v2836, %v2837
    %2863 = vrot.lane.b32.xlu0 %v2861, 64
    %v2864 = vpop.permute.xlu0 %2863
    %v2866 = vadd.f32 %v2860, %v2864
    %v2867 = vtanh.pop %v2866
    %v2868 = vmul.f32 %v2856, %v2867
    %2870 = vrot.lane.b32.xlu0 %v2868, 64
    %v2871 = vpop.permute.xlu0 %2870
    %2873 = vst.msk [vmem:[#allocation2 + $0x8] sm:$0x30] %vm568, %v2871
    %v2874 = vrot.slane %v2868, 4
    %2875 = vrot.lane.b32.xlu0 %v2874, 64
    %v2876 = vpop.permute.xlu0 %2875
    %v2877 = vsel %vm253, %v2876, 0
    %2879 = vmatpush.msra.mxu0 0.0
    %2880 = vmatpush.msra.mxu0 0.0
    %2881 = vmatpush.msra.mxu0 0.0
    %2882 = vmatpush.msra.mxu0 0.0
    %2883 = vmatpush.msra.mxu0 0.0
    %2884 = vmatpush.msra.mxu0 0.0
    %2885 = vmatpush.msra.mxu0 0.0
    %2886 = vmatpush.msra.mxu0 0.0
    %2887 = vmatpush.msra.mxu0 %v2135
    %2888 = vmatpush.msra.mxu0 %v2133
    %2889 = vmatpush.msra.mxu0 %v2131
    %2890 = vmatpush.msra.mxu0 %v2129
    %2891 = vmatpush.msra.mxu0 %v2127
    %2892 = vmatpush.msra.mxu0 %v2125
    %2893 = vmatpush.msra.mxu0 %v2123
    %2894 = vmatpush.msra.mxu0 %v2121
    %2895 = vmatmul.f32.gmra.mxu0 %v2877
    %v2896 = vpop.f32.mrf.mxu0
    %v2897 = vadd.f32 0.0, %v2896
    %2898 = vdwg.mxu0
    %2899 = vmatpush.msra.mxu0 0.0
    %2900 = vmatpush.msra.mxu0 0.0
    %2901 = vmatpush.msra.mxu0 0.0
    %2902 = vmatpush.msra.mxu0 0.0
    %2903 = vmatpush.msra.mxu0 0.0
    %2904 = vmatpush.msra.mxu0 0.0
    %2905 = vmatpush.msra.mxu0 0.0
    %2906 = vmatpush.msra.mxu0 0.0
    %2907 = vmatpush.msra.mxu0 %v2136
    %2908 = vmatpush.msra.mxu0 %v2134
    %2909 = vmatpush.msra.mxu0 %v2132
    %2910 = vmatpush.msra.mxu0 %v2130
    %2911 = vmatpush.msra.mxu0 %v2128
    %2912 = vmatpush.msra.mxu0 %v2126
    %2913 = vmatpush.msra.mxu0 %v2124
    %2914 = vmatpush.msra.mxu0 %v2122
    %2915 = vmatmul.f32.gmra.mxu0 %v2877
    %v2916 = vpop.f32.mrf.mxu0
    %v2917 = vadd.f32 0.0, %v2916
    %2918 = vdwg.mxu0
    %v2921 = vrot.slane %v2897, 2
    %v2922 = vrot.slane %v2917, 2
    %v2925 = vadd.f32 %v2096, %v2921
    %v2926 = vadd.f32 %v2119, %v2922
    %v2927 = vxor.u32 %v2925, 2147483648
    %v2928 = vmul.f32 %v2927, 1.442695
    %v2929 = vpow.pop %v2928
    %v2930 = vadd.f32 %v2929, 1.0
    %v2931 = vrcp.pop %v2930
    %v2932 = vmul.f32 %v2930, %v2931
    %v2933 = vsub.f32 1.0, %v2932
    %v2934 = vmul.f32 %v2931, %v2933
    %v2935 = vadd.f32 %v2931, %v2934
    %vm2936 = vweird.f32 %v2930
    %vm2937 = vweird.f32 %v2931
    %vm2938 = vmor %vm2936, %vm2937
    %v2939 = vsel %vm2938, %v2931, %v2935
    %v2940 = vand.u32 2147483647, %v2930
    %vm2941 = vcmp.eq.f32.partialorder %v2940, 8.507059e+37
    %v2942 = vand.u32 %v2930, 2147483648
    %v2943 = vor.u32 1.1754944e-38, %v2942
    %v2944 = vsel %vm2941, %v2943, %v2939
    %v2945 = vmul.f32 1.0, %v2944
    %v2946 = vtanh.pop %v2926
    %v2947 = vxor.u32 %v2926, 2147483648
    %v2948 = vmul.f32 %v2947, 1.442695
    %v2949 = vpow.pop %v2948
    %v2950 = vadd.f32 %v2949, 1.0
    %v2951 = vrcp.pop %v2950
    %v2952 = vmul.f32 %v2950, %v2951
    %v2953 = vsub.f32 1.0, %v2952
    %v2954 = vmul.f32 %v2951, %v2953
    %v2955 = vadd.f32 %v2951, %v2954
    %vm2956 = vweird.f32 %v2950
    %vm2957 = vweird.f32 %v2951
    %vm2958 = vmor %vm2956, %vm2957
    %v2959 = vsel %vm2958, %v2951, %v2955
    %v2960 = vand.u32 2147483647, %v2950
    %vm2961 = vcmp.eq.f32.partialorder %v2960, 8.507059e+37
    %v2962 = vand.u32 %v2950, 2147483648
    %v2963 = vor.u32 1.1754944e-38, %v2962
    %v2964 = vsel %vm2961, %v2963, %v2959
    %v2965 = vmul.f32 1.0, %v2964
    %v2967 = vrot.slane %v2866, 6
    %v2969 = vmul.f32 %v2945, %v2967
    %v2970 = vmul.f32 %v2945, %v2946
    %2972 = vrot.lane.b32.xlu0 %v2970, 64
    %v2973 = vpop.permute.xlu0 %2972
    %v2975 = vadd.f32 %v2969, %v2973
    %v2976 = vtanh.pop %v2975
    %v2977 = vmul.f32 %v2965, %v2976
    %2979 = vrot.lane.b32.xlu0 %v2977, 64
    %v2980 = vpop.permute.xlu0 %2979
    %2982 = vst.msk [vmem:[#allocation2 + $0x8] sm:$0xc0] %vm678, %v2980
    %v2983 = vld [vmem:[#allocation2] sm:$0xff]
    %v2984 = vld [vmem:[#allocation2 + $0x8] sm:$0xff]
    %v2985 = vld [vmem:[#allocation15] sm:$0xff]
    %v2986 = vld [vmem:[#allocation15 + $0x8] sm:$0xff]
    %v2987 = vld [vmem:[#allocation15 + $0x10] sm:$0xff]
    %v2988 = vld [vmem:[#allocation15 + $0x18] sm:$0xff]
    %v2989 = vld [vmem:[#allocation15 + $0x20] sm:$0xff]
    %v2990 = vld [vmem:[#allocation15 + $0x28] sm:$0xff]
    %v2991 = vld [vmem:[#allocation15 + $0x30] sm:$0xff]
    %v2992 = vld [vmem:[#allocation15 + $0x38] sm:$0xff]
    %v2993 = vld [vmem:[%s12] sm:$0x1]
    %v2995 = vperm.slane %v2993, 0
    %v2998 = vsel %vm253, %v2983, 0
    %v3001 = vsel %vm253, %v2984, 0
    %3003 = vmatpush.msra.mxu0 0.0
    %3004 = vmatpush.msra.mxu0 0.0
    %3005 = vmatpush.msra.mxu0 0.0
    %3006 = vmatpush.msra.mxu0 0.0
    %3007 = vmatpush.msra.mxu0 0.0
    %3008 = vmatpush.msra.mxu0 0.0
    %3009 = vmatpush.msra.mxu0 0.0
    %3010 = vmatpush.msra.mxu0 0.0
    %3011 = vmatpush.msra.mxu0 %v2992
    %3012 = vmatpush.msra.mxu0 %v2991
    %3013 = vmatpush.msra.mxu0 %v2990
    %3014 = vmatpush.msra.mxu0 %v2989
    %3015 = vmatpush.msra.mxu0 %v2988
    %3016 = vmatpush.msra.mxu0 %v2987
    %3017 = vmatpush.msra.mxu0 %v2986
    %3018 = vmatpush.msra.mxu0 %v2985
    %3019 = vmatmul.f32.gmra.mxu0 %v2998
    %v3020 = vpop.f32.mrf.mxu0
    %v3021 = vadd.f32 %v2995, %v3020
    %3022 = vmatmul.f32.gmra.mxu0 %v3001
    %v3023 = vpop.f32.mrf.mxu0
    %v3024 = vadd.f32 %v2995, %v3023
    %3025 = vdwg.mxu0
    %v3026 = vld [vmem:[%s11] sm:$0xff]
    %v3027 = vld [vmem:[%s11 + $0x8] sm:$0xff]
    %v3028 = vld [vmem:[%s11 + $0x10] sm:$0xff]
    %v3029 = vld [vmem:[%s11 + $0x18] sm:$0xff]
    %vm3030 = vcmask 261120
    %v3031 = vsel %vm3030, 0.0, 0
    %3033 = vmatpush.msra.mxu0 0.0
    %3034 = vmatpush.msra.mxu0 0.0
    %3035 = vmatpush.msra.mxu0 0.0
    %3036 = vmatpush.msra.mxu0 0.0
    %3037 = vmatpush.msra.mxu0 0.0
    %3038 = vmatpush.msra.mxu0 0.0
    %3039 = vmatpush.msra.mxu0 0.0
    %3040 = vmatpush.msra.mxu0 0.0
    %3041 = vmatpush.msra.mxu0 0.0
    %3042 = vmatpush.msra.mxu0 0.0
    %3043 = vmatpush.msra.mxu0 0.0
    %3044 = vmatpush.msra.mxu0 0.0
    %3045 = vmatpush.msra.mxu0 %v3029
    %3046 = vmatpush.msra.mxu0 %v3028
    %3047 = vmatpush.msra.mxu0 %v3027
    %3048 = vmatpush.msra.mxu0 %v3026
    %3049 = vmatmul.f32.gmra.mxu0 %v3031
    %v3050 = vpop.f32.mrf.mxu0
    %v3051 = vadd.f32 0.0, %v3050
    %3052 = vdwg.mxu0
    %v3053 = vadd.f32 %v3021, %v3051
    %v3054 = vxor.u32 %v3053, 2147483648
    %v3055 = vmul.f32 %v3054, 1.442695
    %v3056 = vpow.pop %v3055
    %v3057 = vadd.f32 %v3056, 1.0
    %v3058 = vrcp.pop %v3057
    %v3059 = vmul.f32 %v3057, %v3058
    %v3060 = vsub.f32 1.0, %v3059
    %v3061 = vmul.f32 %v3058, %v3060
    %v3062 = vadd.f32 %v3058, %v3061
    %vm3063 = vweird.f32 %v3057
    %vm3064 = vweird.f32 %v3058
    %vm3065 = vmor %vm3063, %vm3064
    %v3066 = vsel %vm3065, %v3058, %v3062
    %v3067 = vand.u32 2147483647, %v3057
    %vm3068 = vcmp.eq.f32.partialorder %v3067, 8.507059e+37
    %v3069 = vand.u32 %v3057, 2147483648
    %v3070 = vor.u32 1.1754944e-38, %v3069
    %v3071 = vsel %vm3068, %v3070, %v3066
    %v3072 = vmul.f32 1.0, %v3071
    %v3073 = vtanh.pop %v3053
    %v3074 = vmul.f32 %v3072, 0.0
    %3076 = vrot.lane.b32.xlu0 %v3073, 64
    %v3077 = vpop.permute.xlu0 %3076
    %v3079 = vmul.f32 %v3072, %v3077
    %3081 = vrot.lane.b32.xlu0 %v3079, 32
    %v3082 = vpop.permute.xlu0 %3081
    %v3084 = vadd.f32 %v3074, %v3082
    %v3085 = vtanh.pop %v3084
    %3087 = vrot.lane.b32.xlu0 %v3085, 64
    %v3088 = vpop.permute.xlu0 %3087
    %v3090 = vmul.f32 %v3072, %v3088
    %3092 = vrot.lane.b32.xlu0 %v3090, 32
    %v3093 = vpop.permute.xlu0 %3092
    %v3094 = vsel %vm3030, %v3093, 0
    %3096 = vmatpush.msra.mxu0 0.0
    %3097 = vmatpush.msra.mxu0 0.0
    %3098 = vmatpush.msra.mxu0 0.0
    %3099 = vmatpush.msra.mxu0 0.0
    %3100 = vmatpush.msra.mxu0 0.0
    %3101 = vmatpush.msra.mxu0 0.0
    %3102 = vmatpush.msra.mxu0 0.0
    %3103 = vmatpush.msra.mxu0 0.0
    %3104 = vmatpush.msra.mxu0 0.0
    %3105 = vmatpush.msra.mxu0 0.0
    %3106 = vmatpush.msra.mxu0 0.0
    %3107 = vmatpush.msra.mxu0 0.0
    %3108 = vmatpush.msra.mxu0 %v3029
    %3109 = vmatpush.msra.mxu0 %v3028
    %3110 = vmatpush.msra.mxu0 %v3027
    %3111 = vmatpush.msra.mxu0 %v3026
    %3112 = vmatmul.f32.gmra.mxu0 %v3094
    %v3113 = vpop.f32.mrf.mxu0
    %v3114 = vadd.f32 0.0, %v3113
    %3115 = vdwg.mxu0
    %v3117 = vrot.slane %v3114, 6
    %v3119 = vadd.f32 %v3021, %v3117
    %v3120 = vxor.u32 %v3119, 2147483648
    %v3121 = vmul.f32 %v3120, 1.442695
    %v3122 = vpow.pop %v3121
    %v3123 = vadd.f32 %v3122, 1.0
    %v3124 = vrcp.pop %v3123
    %v3125 = vmul.f32 %v3123, %v3124
    %v3126 = vsub.f32 1.0, %v3125
    %v3127 = vmul.f32 %v3124, %v3126
    %v3128 = vadd.f32 %v3124, %v3127
    %vm3129 = vweird.f32 %v3123
    %vm3130 = vweird.f32 %v3124
    %vm3131 = vmor %vm3129, %vm3130
    %v3132 = vsel %vm3131, %v3124, %v3128
    %v3133 = vand.u32 2147483647, %v3123
    %vm3134 = vcmp.eq.f32.partialorder %v3133, 8.507059e+37
    %v3135 = vand.u32 %v3123, 2147483648
    %v3136 = vor.u32 1.1754944e-38, %v3135
    %v3137 = vsel %vm3134, %v3136, %v3132
    %v3138 = vmul.f32 1.0, %v3137
    %v3139 = vtanh.pop %v3119
    %v3141 = vrot.slane %v3084, 6
    %v3143 = vmul.f32 %v3138, %v3141
    %3145 = vrot.lane.b32.xlu0 %v3139, 64
    %v3146 = vpop.permute.xlu0 %3145
    %v3148 = vmul.f32 %v3138, %v3146
    %3150 = vrot.lane.b32.xlu0 %v3148, 32
    %v3151 = vpop.permute.xlu0 %3150
    %v3153 = vadd.f32 %v3143, %v3151
    %v3154 = vtanh.pop %v3153
    %3156 = vrot.lane.b32.xlu0 %v3154, 64
    %v3157 = vpop.permute.xlu0 %3156
    %v3159 = vmul.f32 %v3138, %v3157
    %v3161 = vrot.slane %v3159, 2
    %3162 = vrot.lane.b32.xlu0 %v3161, 32
    %v3163 = vpop.permute.xlu0 %3162
    %v3164 = vsel %vm3030, %v3163, 0
    %3166 = vmatpush.msra.mxu0 0.0
    %3167 = vmatpush.msra.mxu0 0.0
    %3168 = vmatpush.msra.mxu0 0.0
    %3169 = vmatpush.msra.mxu0 0.0
    %3170 = vmatpush.msra.mxu0 0.0
    %3171 = vmatpush.msra.mxu0 0.0
    %3172 = vmatpush.msra.mxu0 0.0
    %3173 = vmatpush.msra.mxu0 0.0
    %3174 = vmatpush.msra.mxu0 0.0
    %3175 = vmatpush.msra.mxu0 0.0
    %3176 = vmatpush.msra.mxu0 0.0
    %3177 = vmatpush.msra.mxu0 0.0
    %3178 = vmatpush.msra.mxu0 %v3029
    %3179 = vmatpush.msra.mxu0 %v3028
    %3180 = vmatpush.msra.mxu0 %v3027
    %3181 = vmatpush.msra.mxu0 %v3026
    %3182 = vmatmul.f32.gmra.mxu0 %v3164
    %v3183 = vpop.f32.mrf.mxu0
    %v3184 = vadd.f32 0.0, %v3183
    %3185 = vdwg.mxu0
    %v3187 = vrot.slane %v3184, 4
    %v3189 = vadd.f32 %v3021, %v3187
    %v3190 = vxor.u32 %v3189, 2147483648
    %v3191 = vmul.f32 %v3190, 1.442695
    %v3192 = vpow.pop %v3191
    %v3193 = vadd.f32 %v3192, 1.0
    %v3194 = vrcp.pop %v3193
    %v3195 = vmul.f32 %v3193, %v3194
    %v3196 = vsub.f32 1.0, %v3195
    %v3197 = vmul.f32 %v3194, %v3196
    %v3198 = vadd.f32 %v3194, %v3197
    %vm3199 = vweird.f32 %v3193
    %vm3200 = vweird.f32 %v3194
    %vm3201 = vmor %vm3199, %vm3200
    %v3202 = vsel %vm3201, %v3194, %v3198
    %v3203 = vand.u32 2147483647, %v3193
    %vm3204 = vcmp.eq.f32.partialorder %v3203, 8.507059e+37
    %v3205 = vand.u32 %v3193, 2147483648
    %v3206 = vor.u32 1.1754944e-38, %v3205
    %v3207 = vsel %vm3204, %v3206, %v3202
    %v3208 = vmul.f32 1.0, %v3207
    %v3209 = vtanh.pop %v3189
    %v3211 = vrot.slane %v3153, 6
    %v3213 = vmul.f32 %v3208, %v3211
    %3215 = vrot.lane.b32.xlu0 %v3209, 64
    %v3216 = vpop.permute.xlu0 %3215
    %v3218 = vmul.f32 %v3208, %v3216
    %3220 = vrot.lane.b32.xlu0 %v3218, 32
    %v3221 = vpop.permute.xlu0 %3220
    %v3223 = vadd.f32 %v3213, %v3221
    %v3224 = vtanh.pop %v3223
    %3226 = vrot.lane.b32.xlu0 %v3224, 64
    %v3227 = vpop.permute.xlu0 %3226
    %v3229 = vmul.f32 %v3208, %v3227
    %v3231 = vrot.slane %v3229, 4
    %3232 = vrot.lane.b32.xlu0 %v3231, 32
    %v3233 = vpop.permute.xlu0 %3232
    %v3234 = vsel %vm3030, %v3233, 0
    %3236 = vmatpush.msra.mxu0 0.0
    %3237 = vmatpush.msra.mxu0 0.0
    %3238 = vmatpush.msra.mxu0 0.0
    %3239 = vmatpush.msra.mxu0 0.0
    %3240 = vmatpush.msra.mxu0 0.0
    %3241 = vmatpush.msra.mxu0 0.0
    %3242 = vmatpush.msra.mxu0 0.0
    %3243 = vmatpush.msra.mxu0 0.0
    %3244 = vmatpush.msra.mxu0 0.0
    %3245 = vmatpush.msra.mxu0 0.0
    %3246 = vmatpush.msra.mxu0 0.0
    %3247 = vmatpush.msra.mxu0 0.0
    %3248 = vmatpush.msra.mxu0 %v3029
    %3249 = vmatpush.msra.mxu0 %v3028
    %3250 = vmatpush.msra.mxu0 %v3027
    %3251 = vmatpush.msra.mxu0 %v3026
    %3252 = vmatmul.f32.gmra.mxu0 %v3234
    %v3253 = vpop.f32.mrf.mxu0
    %v3254 = vadd.f32 0.0, %v3253
    %3255 = vdwg.mxu0
    %v3257 = vrot.slane %v3254, 2
    %v3259 = vadd.f32 %v3021, %v3257
    %v3260 = vxor.u32 %v3259, 2147483648
    %v3261 = vmul.f32 %v3260, 1.442695
    %v3262 = vpow.pop %v3261
    %v3263 = vadd.f32 %v3262, 1.0
    %v3264 = vrcp.pop %v3263
    %v3265 = vmul.f32 %v3263, %v3264
    %v3266 = vsub.f32 1.0, %v3265
    %v3267 = vmul.f32 %v3264, %v3266
    %v3268 = vadd.f32 %v3264, %v3267
    %vm3269 = vweird.f32 %v3263
    %vm3270 = vweird.f32 %v3264
    %vm3271 = vmor %vm3269, %vm3270
    %v3272 = vsel %vm3271, %v3264, %v3268
    %v3273 = vand.u32 2147483647, %v3263
    %vm3274 = vcmp.eq.f32.partialorder %v3273, 8.507059e+37
    %v3275 = vand.u32 %v3263, 2147483648
    %v3276 = vor.u32 1.1754944e-38, %v3275
    %v3277 = vsel %vm3274, %v3276, %v3272
    %v3278 = vmul.f32 1.0, %v3277
    %v3279 = vtanh.pop %v3259
    %v3281 = vrot.slane %v3223, 6
    %v3283 = vmul.f32 %v3278, %v3281
    %3285 = vrot.lane.b32.xlu0 %v3279, 64
    %v3286 = vpop.permute.xlu0 %3285
    %v3288 = vmul.f32 %v3278, %v3286
    %3290 = vrot.lane.b32.xlu0 %v3288, 32
    %v3291 = vpop.permute.xlu0 %3290
    %v3293 = vadd.f32 %v3283, %v3291
    %v3294 = vtanh.pop %v3293
    %3296 = vrot.lane.b32.xlu0 %v3294, 64
    %v3297 = vpop.permute.xlu0 %3296
    %v3299 = vmul.f32 %v3278, %v3297
    %v3301 = vrot.slane %v3299, 6
    %3302 = vrot.lane.b32.xlu0 %v3301, 32
    %v3303 = vpop.permute.xlu0 %3302
    %v3304 = vsel %vm3030, %v3303, 0
    %3306 = vmatpush.msra.mxu0 0.0
    %3307 = vmatpush.msra.mxu0 0.0
    %3308 = vmatpush.msra.mxu0 0.0
    %3309 = vmatpush.msra.mxu0 0.0
    %3310 = vmatpush.msra.mxu0 0.0
    %3311 = vmatpush.msra.mxu0 0.0
    %3312 = vmatpush.msra.mxu0 0.0
    %3313 = vmatpush.msra.mxu0 0.0
    %3314 = vmatpush.msra.mxu0 0.0
    %3315 = vmatpush.msra.mxu0 0.0
    %3316 = vmatpush.msra.mxu0 0.0
    %3317 = vmatpush.msra.mxu0 0.0
    %3318 = vmatpush.msra.mxu0 %v3029
    %3319 = vmatpush.msra.mxu0 %v3028
    %3320 = vmatpush.msra.mxu0 %v3027
    %3321 = vmatpush.msra.mxu0 %v3026
    %3322 = vmatmul.f32.gmra.mxu0 %v3304
    %v3323 = vpop.f32.mrf.mxu0
    %v3324 = vadd.f32 0.0, %v3323
    %3325 = vdwg.mxu0
    %v3326 = vadd.f32 %v3024, %v3324
    %v3327 = vxor.u32 %v3326, 2147483648
    %v3328 = vmul.f32 %v3327, 1.442695
    %v3329 = vpow.pop %v3328
    %v3330 = vadd.f32 %v3329, 1.0
    %v3331 = vrcp.pop %v3330
    %v3332 = vmul.f32 %v3330, %v3331
    %v3333 = vsub.f32 1.0, %v3332
    %v3334 = vmul.f32 %v3331, %v3333
    %v3335 = vadd.f32 %v3331, %v3334
    %vm3336 = vweird.f32 %v3330
    %vm3337 = vweird.f32 %v3331
    %vm3338 = vmor %vm3336, %vm3337
    %v3339 = vsel %vm3338, %v3331, %v3335
    %v3340 = vand.u32 2147483647, %v3330
    %vm3341 = vcmp.eq.f32.partialorder %v3340, 8.507059e+37
    %v3342 = vand.u32 %v3330, 2147483648
    %v3343 = vor.u32 1.1754944e-38, %v3342
    %v3344 = vsel %vm3341, %v3343, %v3339
    %v3345 = vmul.f32 1.0, %v3344
    %v3346 = vtanh.pop %v3326
    %v3348 = vrot.slane %v3293, 6
    %v3350 = vmul.f32 %v3345, %v3348
    %3352 = vrot.lane.b32.xlu0 %v3346, 64
    %v3353 = vpop.permute.xlu0 %3352
    %v3355 = vmul.f32 %v3345, %v3353
    %3357 = vrot.lane.b32.xlu0 %v3355, 32
    %v3358 = vpop.permute.xlu0 %3357
    %v3360 = vadd.f32 %v3350, %v3358
    %v3361 = vtanh.pop %v3360
    %3363 = vrot.lane.b32.xlu0 %v3361, 64
    %v3364 = vpop.permute.xlu0 %3363
    %v3366 = vmul.f32 %v3345, %v3364
    %3368 = vrot.lane.b32.xlu0 %v3366, 32
    %v3369 = vpop.permute.xlu0 %3368
    %v3370 = vsel %vm3030, %v3369, 0
    %3372 = vmatpush.msra.mxu0 0.0
    %3373 = vmatpush.msra.mxu0 0.0
    %3374 = vmatpush.msra.mxu0 0.0
    %3375 = vmatpush.msra.mxu0 0.0
    %3376 = vmatpush.msra.mxu0 0.0
    %3377 = vmatpush.msra.mxu0 0.0
    %3378 = vmatpush.msra.mxu0 0.0
    %3379 = vmatpush.msra.mxu0 0.0
    %3380 = vmatpush.msra.mxu0 0.0
    %3381 = vmatpush.msra.mxu0 0.0
    %3382 = vmatpush.msra.mxu0 0.0
    %3383 = vmatpush.msra.mxu0 0.0
    %3384 = vmatpush.msra.mxu0 %v3029
    %3385 = vmatpush.msra.mxu0 %v3028
    %3386 = vmatpush.msra.mxu0 %v3027
    %3387 = vmatpush.msra.mxu0 %v3026
    %3388 = vmatmul.f32.gmra.mxu0 %v3370
    %v3389 = vpop.f32.mrf.mxu0
    %v3390 = vadd.f32 0.0, %v3389
    %3391 = vdwg.mxu0
    %v3393 = vrot.slane %v3390, 6
    %v3395 = vadd.f32 %v3024, %v3393
    %v3396 = vxor.u32 %v3395, 2147483648
    %v3397 = vmul.f32 %v3396, 1.442695
    %v3398 = vpow.pop %v3397
    %v3399 = vadd.f32 %v3398, 1.0
    %v3400 = vrcp.pop %v3399
    %v3401 = vmul.f32 %v3399, %v3400
    %v3402 = vsub.f32 1.0, %v3401
    %v3403 = vmul.f32 %v3400, %v3402
    %v3404 = vadd.f32 %v3400, %v3403
    %vm3405 = vweird.f32 %v3399
    %vm3406 = vweird.f32 %v3400
    %vm3407 = vmor %vm3405, %vm3406
    %v3408 = vsel %vm3407, %v3400, %v3404
    %v3409 = vand.u32 2147483647, %v3399
    %vm3410 = vcmp.eq.f32.partialorder %v3409, 8.507059e+37
    %v3411 = vand.u32 %v3399, 2147483648
    %v3412 = vor.u32 1.1754944e-38, %v3411
    %v3413 = vsel %vm3410, %v3412, %v3408
    %v3414 = vmul.f32 1.0, %v3413
    %v3415 = vtanh.pop %v3395
    %v3417 = vrot.slane %v3360, 6
    %v3419 = vmul.f32 %v3414, %v3417
    %3421 = vrot.lane.b32.xlu0 %v3415, 64
    %v3422 = vpop.permute.xlu0 %3421
    %v3424 = vmul.f32 %v3414, %v3422
    %3426 = vrot.lane.b32.xlu0 %v3424, 32
    %v3427 = vpop.permute.xlu0 %3426
    %v3429 = vadd.f32 %v3419, %v3427
    %v3430 = vtanh.pop %v3429
    %3432 = vrot.lane.b32.xlu0 %v3430, 64
    %v3433 = vpop.permute.xlu0 %3432
    %v3435 = vmul.f32 %v3414, %v3433
    %v3437 = vrot.slane %v3435, 2
    %3438 = vrot.lane.b32.xlu0 %v3437, 32
    %v3439 = vpop.permute.xlu0 %3438
    %v3440 = vsel %vm3030, %v3439, 0
    %3442 = vmatpush.msra.mxu0 0.0
    %3443 = vmatpush.msra.mxu0 0.0
    %3444 = vmatpush.msra.mxu0 0.0
    %3445 = vmatpush.msra.mxu0 0.0
    %3446 = vmatpush.msra.mxu0 0.0
    %3447 = vmatpush.msra.mxu0 0.0
    %3448 = vmatpush.msra.mxu0 0.0
    %3449 = vmatpush.msra.mxu0 0.0
    %3450 = vmatpush.msra.mxu0 0.0
    %3451 = vmatpush.msra.mxu0 0.0
    %3452 = vmatpush.msra.mxu0 0.0
    %3453 = vmatpush.msra.mxu0 0.0
    %3454 = vmatpush.msra.mxu0 %v3029
    %3455 = vmatpush.msra.mxu0 %v3028
    %3456 = vmatpush.msra.mxu0 %v3027
    %3457 = vmatpush.msra.mxu0 %v3026
    %3458 = vmatmul.f32.gmra.mxu0 %v3440
    %v3459 = vpop.f32.mrf.mxu0
    %v3460 = vadd.f32 0.0, %v3459
    %3461 = vdwg.mxu0
    %v3463 = vrot.slane %v3460, 4
    %v3465 = vadd.f32 %v3024, %v3463
    %v3466 = vxor.u32 %v3465, 2147483648
    %v3467 = vmul.f32 %v3466, 1.442695
    %v3468 = vpow.pop %v3467
    %v3469 = vadd.f32 %v3468, 1.0
    %v3470 = vrcp.pop %v3469
    %v3471 = vmul.f32 %v3469, %v3470
    %v3472 = vsub.f32 1.0, %v3471
    %v3473 = vmul.f32 %v3470, %v3472
    %v3474 = vadd.f32 %v3470, %v3473
    %vm3475 = vweird.f32 %v3469
    %vm3476 = vweird.f32 %v3470
    %vm3477 = vmor %vm3475, %vm3476
    %v3478 = vsel %vm3477, %v3470, %v3474
    %v3479 = vand.u32 2147483647, %v3469
    %vm3480 = vcmp.eq.f32.partialorder %v3479, 8.507059e+37
    %v3481 = vand.u32 %v3469, 2147483648
    %v3482 = vor.u32 1.1754944e-38, %v3481
    %v3483 = vsel %vm3480, %v3482, %v3478
    %v3484 = vmul.f32 1.0, %v3483
    %v3485 = vtanh.pop %v3465
    %v3487 = vrot.slane %v3429, 6
    %v3489 = vmul.f32 %v3484, %v3487
    %3491 = vrot.lane.b32.xlu0 %v3485, 64
    %v3492 = vpop.permute.xlu0 %3491
    %v3494 = vmul.f32 %v3484, %v3492
    %3496 = vrot.lane.b32.xlu0 %v3494, 32
    %v3497 = vpop.permute.xlu0 %3496
    %v3499 = vadd.f32 %v3489, %v3497
    %v3500 = vtanh.pop %v3499
    %3502 = vrot.lane.b32.xlu0 %v3500, 64
    %v3503 = vpop.permute.xlu0 %3502
    %v3505 = vmul.f32 %v3484, %v3503
    %v3507 = vrot.slane %v3505, 4
    %3508 = vrot.lane.b32.xlu0 %v3507, 32
    %v3509 = vpop.permute.xlu0 %3508
    %v3510 = vsel %vm3030, %v3509, 0
    %3512 = vmatpush.msra.mxu0 0.0
    %3513 = vmatpush.msra.mxu0 0.0
    %3514 = vmatpush.msra.mxu0 0.0
    %3515 = vmatpush.msra.mxu0 0.0
    %3516 = vmatpush.msra.mxu0 0.0
    %3517 = vmatpush.msra.mxu0 0.0
    %3518 = vmatpush.msra.mxu0 0.0
    %3519 = vmatpush.msra.mxu0 0.0
    %3520 = vmatpush.msra.mxu0 0.0
    %3521 = vmatpush.msra.mxu0 0.0
    %3522 = vmatpush.msra.mxu0 0.0
    %3523 = vmatpush.msra.mxu0 0.0
    %3524 = vmatpush.msra.mxu0 %v3029
    %3525 = vmatpush.msra.mxu0 %v3028
    %3526 = vmatpush.msra.mxu0 %v3027
    %3527 = vmatpush.msra.mxu0 %v3026
    %3528 = vmatmul.f32.gmra.mxu0 %v3510
    %v3529 = vpop.f32.mrf.mxu0
    %v3530 = vadd.f32 0.0, %v3529
    %3531 = vdwg.mxu0
    %v3533 = vrot.slane %v3530, 2
    %v3535 = vadd.f32 %v3024, %v3533
    %v3536 = vxor.u32 %v3535, 2147483648
    %v3537 = vmul.f32 %v3536, 1.442695
    %v3538 = vpow.pop %v3537
    %v3539 = vadd.f32 %v3538, 1.0
    %v3540 = vrcp.pop %v3539
    %v3541 = vmul.f32 %v3539, %v3540
    %v3542 = vsub.f32 1.0, %v3541
    %v3543 = vmul.f32 %v3540, %v3542
    %v3544 = vadd.f32 %v3540, %v3543
    %vm3545 = vweird.f32 %v3539
    %vm3546 = vweird.f32 %v3540
    %vm3547 = vmor %vm3545, %vm3546
    %v3548 = vsel %vm3547, %v3540, %v3544
    %v3549 = vand.u32 2147483647, %v3539
    %vm3550 = vcmp.eq.f32.partialorder %v3549, 8.507059e+37
    %v3551 = vand.u32 %v3539, 2147483648
    %v3552 = vor.u32 1.1754944e-38, %v3551
    %v3553 = vsel %vm3550, %v3552, %v3548
    %v3554 = vmul.f32 1.0, %v3553
    %v3555 = vtanh.pop %v3535
    %v3557 = vrot.slane %v3499, 6
    %v3559 = vmul.f32 %v3554, %v3557
    %3561 = vrot.lane.b32.xlu0 %v3555, 64
    %v3562 = vpop.permute.xlu0 %3561
    %v3564 = vmul.f32 %v3554, %v3562
    %3566 = vrot.lane.b32.xlu0 %v3564, 32
    %v3567 = vpop.permute.xlu0 %3566
    %v3569 = vadd.f32 %v3559, %v3567
    %v3570 = vtanh.pop %v3569
    %3572 = vrot.lane.b32.xlu0 %v3570, 64
    %v3573 = vpop.permute.xlu0 %3572
    %v3575 = vmul.f32 %v3554, %v3573
    %3577 = vrot.lane.b32.xlu0 %v3575, 32
    %v3578 = vpop.permute.xlu0 %3577
    %vm3580 = vcmask 261126
    %3581 = vst.msk [vmem:[#allocation17 - $0x6] sm:$0xc0] %vm3580, %v3578
    // Predicated region
    $region86: #{encoder_forward.1} parent=1 // pred_check
      _
    $region87: #{encoder_forward.1} parent=1 // pred_check_branch
      %3583 = sbr.rel (0) target = $region89
    $region88: #{encoder_forward.1} parent=1 // pred_region
      %3585 = vsyncadd [#allocation5], 0
      %s3587 = sshll.u32 [#allocation17], 4
      %s3588 = int_to_ptr.vmem [resolvable:$true] %s3587
      %s3589 = sshll.u32 %s13, 4
      %s3590 = int_to_ptr.hbm [resolvable:$true] %s3589
      %3592 = dma.vmem_to_hbm [thread:$0]  %s3588, 32, %s3590, [#allocation5]
    $region89: #{encoder_forward.1} parent=1 // pred_fallthru
      _
    // Predicated region
    $region90: #{encoder_forward.1} parent=1 // pred_check
      _
    $region91: #{encoder_forward.1} parent=1 // pred_check_branch
      %3594 = sbr.rel (0) target = $region93
    $region92: #{encoder_forward.1} parent=1 // pred_region
      %3596 = dma.done [#allocation5], 32
    $region93: #{encoder_forward.1} parent=1 // pred_fallthru
      _
    %3597 = vsyncpa [#allocation4], 1
    %3598 = vsyncpa [#allocation7], 1
    %3599 = vsyncpa [#allocation10], 1
    %3600 = vsyncpa [#allocation13], 1
    %3601 = vsyncpa [#allocation16], 1
    %3602 = vsyncpa [#allocation5], 1

</llo_original>
